<compile_context>
chip_gen: v7x
topology: tpu7x:2x2x1
jax: 0.10.0
libtpu: 0.0.40
codegen_flags: <defaults>
</compile_context>

<pallas_src>
import functools

import jax
import jax.numpy as jnp
from jax.experimental import pallas as pl
from jax.experimental.pallas import tpu as pltpu

BN_EPS = 1e-5
LANES = 128
STAT_ROWS = 8          # per-core stat accumulators padded to a full (8, 128) tile


def _conv3x3_taps(x_ref, w_ref, *, M, Wp):
    """3x3 conv of one image as 9 shifted-row-window matmuls with f32 accumulation."""
    acc = None
    for kh in range(3):
        for kw in range(3):
            off = kh * Wp + kw
            xt = x_ref[0, off:off + M, :]                        # (M, Cin) bf16, no cast
            part = jnp.dot(xt, w_ref[kh * 3 + kw],
                           preferred_element_type=jnp.float32)   # (M, Cp) f32
            acc = part if acc is None else acc + part
    return acc


def conv_stats_kernel(x_ref, w_ref, sum_ref, sumsq_ref, *, H, W):
    """Pass 1: per-core per-channel sum / sum-of-squares of the conv output (stats only)."""
    Wp = W + 2
    M = H * Wp

    @pl.when(pl.program_id(1) == 0)
    def _init():
        sum_ref[...] = jnp.zeros_like(sum_ref)
        sumsq_ref[...] = jnp.zeros_like(sumsq_ref)

    acc = _conv3x3_taps(x_ref, w_ref, M=M, Wp=Wp)                # (M, Cp) f32

    # In-kernel width-padding mask: row r is valid iff (r % Wp) < W.
    col = jax.lax.broadcasted_iota(jnp.int32, (M, 1), 0) % Wp
    mask = (col < W).astype(jnp.float32)                         # (M, 1)
    accm = acc * mask
    sum_ref[0:1, :] += jnp.sum(accm, axis=0, keepdims=True)
    sumsq_ref[0:1, :] += jnp.sum(accm * accm, axis=0, keepdims=True)


def conv_bn_relu_kernel(sum_ref, sumsq_ref, g_ref, b_ref, x_ref, w_ref, o_ref,
                        *, H, W, inv_count):
    """Pass 2: recompute conv, fold batch stats + affine into scale/shift, apply + ReLU."""
    Wp = W + 2
    M = H * Wp
    mean = jnp.sum(sum_ref[...], axis=0, keepdims=True) * inv_count    # (1, Cp)
    ex2 = jnp.sum(sumsq_ref[...], axis=0, keepdims=True) * inv_count
    var = ex2 - mean * mean
    scale = g_ref[...] * jax.lax.rsqrt(var + BN_EPS)                   # per-channel only
    shift = b_ref[...] - mean * scale

    acc = _conv3x3_taps(x_ref, w_ref, M=M, Wp=Wp)                      # (M, Cp) f32
    y = acc * scale + shift                                            # one mul + one add
    o_ref[0] = jnp.maximum(y, 0.0).astype(o_ref.dtype)


def layer_block_forward(x_nchw, w_oihw, gamma, beta):
    """Forward of LayerBlock. x_nchw: (N, C_in, H, W); w_oihw: (C_out, C_in, 3, 3)."""
    N, Cin, H, W = x_nchw.shape
    Cout = w_oihw.shape[0]
    Cp = ((Cout + LANES - 1) // LANES) * LANES
    Wp = W + 2
    M = H * Wp                          # per-image conv rows (padded-width layout kept)
    Mflat = (H + 2) * Wp + 2            # flattened padded plane + 2 rows slack for last tap

    n_cores = 2 if N % 2 == 0 else 1    # v7x megacore split for pass 1 (no-op on v5e/v6e)
    n_per_core = N // n_cores

    # ---- glue: NCHW -> padded, flattened NHWC, stored in bf16 (no im2col, 0.5x bytes) ----
    x_nhwc = jnp.transpose(x_nchw, (0, 2, 3, 1)).astype(jnp.bfloat16)
    x_pad = jnp.pad(x_nhwc, ((0, 0), (1, 1), (1, 1), (0, 0)))
    x_flat = jnp.pad(x_pad.reshape(N, (H + 2) * Wp, Cin), ((0, 0), (0, 2), (0, 0)))

    # conv weights as 9 stacked (Cin, Cp) slabs (tap order kh, kw), bf16 for the MXU
    w9 = jnp.transpose(w_oihw, (2, 3, 1, 0)).reshape(9, Cin, Cout).astype(jnp.bfloat16)
    w9 = jnp.pad(w9, ((0, 0), (0, 0), (0, Cp - Cout)))

    g2 = jnp.pad(gamma.astype(jnp.float32).reshape(1, Cout), ((0, 0), (0, Cp - Cout)))
    b2 = jnp.pad(beta.astype(jnp.float32).reshape(1, Cout), ((0, 0), (0, Cp - Cout)))

    # ---- pass 1: conv + per-core batch statistics (tiny outputs, no conv HBM write) ----
    stat_shape = jax.ShapeDtypeStruct((n_cores * STAT_ROWS, Cp), jnp.float32)
    csum, csumsq = pl.pallas_call(
        functools.partial(conv_stats_kernel, H=H, W=W),
        grid=(n_cores, n_per_core),
        in_specs=[
            pl.BlockSpec((1, Mflat, Cin), lambda c, n: (c * n_per_core + n, 0, 0)),
            pl.BlockSpec((9, Cin, Cp), lambda c, n: (0, 0, 0)),
        ],
        out_specs=(
            pl.BlockSpec((STAT_ROWS, Cp), lambda c, n: (c, 0)),   # per-core VMEM-resident acc
            pl.BlockSpec((STAT_ROWS, Cp), lambda c, n: (c, 0)),
        ),
        out_shape=(stat_shape, stat_shape),
        compiler_params=pltpu.CompilerParams(
            dimension_semantics=("parallel", "arbitrary"),
        ),
    )(x_flat, w9)

    # ---- pass 2: recompute conv + normalize + affine + ReLU (megacore-parallel) ----
    out_p = pl.pallas_call(
        functools.partial(conv_bn_relu_kernel, H=H, W=W,
                          inv_count=1.0 / float(N * H * W)),
        grid=(N,),
        in_specs=[
            pl.BlockSpec((n_cores * STAT_ROWS, Cp), lambda n: (0, 0)),
            pl.BlockSpec((n_cores * STAT_ROWS, Cp), lambda n: (0, 0)),
            pl.BlockSpec((1, Cp), lambda n: (0, 0)),
            pl.BlockSpec((1, Cp), lambda n: (0, 0)),
            pl.BlockSpec((1, Mflat, Cin), lambda n: (n, 0, 0)),
            pl.BlockSpec((9, Cin, Cp), lambda n: (0, 0, 0)),
        ],
        out_specs=pl.BlockSpec((1, M, Cp), lambda n: (n, 0, 0)),
        out_shape=jax.ShapeDtypeStruct((N, M, Cp), jnp.float32),
        compiler_params=pltpu.CompilerParams(
            dimension_semantics=("parallel",),
        ),
    )(csum, csumsq, g2, b2, x_flat, w9)

    # ---- glue: drop width/channel padding, back to NCHW ----
    out = out_p.reshape(N, H, Wp, Cp)[:, :, :W, :Cout]
    return jnp.transpose(out, (0, 3, 1, 2))


def reference_forward(x_nchw, w_oihw, gamma, beta):
    """Pure-JAX reference (bf16-operand conv + train-mode BN + ReLU) for validation."""
    conv = jax.lax.conv_general_dilated(
        x_nchw.astype(jnp.bfloat16), w_oihw.astype(jnp.bfloat16),
        window_strides=(1, 1), padding=((1, 1), (1, 1)),
        dimension_numbers=("NCHW", "OIHW", "NCHW"),
        preferred_element_type=jnp.float32,
    )
    mean = jnp.mean(conv, axis=(0, 2, 3), keepdims=True)
    var = jnp.mean(jnp.square(conv - mean), axis=(0, 2, 3), keepdims=True)
    y = (conv - mean) * jax.lax.rsqrt(var + BN_EPS)
    y = y * gamma.reshape(1, -1, 1, 1) + beta.reshape(1, -1, 1, 1)
    return jnp.maximum(y, 0.0)


if __name__ == "__main__":
    key = jax.random.PRNGKey(0)
    k_x, k_w, k_g, k_b = jax.random.split(key, 4)

    N, Cin, Cout, H, W = 2, 4, 8, 16, 16
    x = jax.random.normal(k_x, (N, Cin, H, W), dtype=jnp.float32)
    w = jax.random.normal(k_w, (Cout, Cin, 3, 3), dtype=jnp.float32) * 0.1
    gamma = 1.0 + 0.1 * jax.random.normal(k_g, (Cout,), dtype=jnp.float32)
    beta = 0.1 * jax.random.normal(k_b, (Cout,), dtype=jnp.float32)

    out = jax.block_until_ready(layer_block_forward(x, w, gamma, beta))
    ref = jax.block_until_ready(reference_forward(x, w, gamma, beta))

    assert out.shape == (N, Cout, H, W), out.shape
    max_err = float(jnp.max(jnp.abs(out - ref)))
    assert jnp.allclose(out, ref, atol=1e-3, rtol=1e-3), max_err
    print("KERNEL_OK")
</pallas_src>

<mosaic_0001>
module attributes {stable_mosaic.version = 11 : i64} {
  func.func @conv_stats_kernel(%arg0: i32, %arg1: i32, %arg2: memref<1x326x4xbf16, #tpu.memory_space<vmem>>, %arg3: memref<9x4x128xbf16, #tpu.memory_space<vmem>>, %arg4: memref<8x128xf32, #tpu.memory_space<vmem>>, %arg5: memref<8x128xf32, #tpu.memory_space<vmem>>) attributes {dimension_semantics = [#tpu.dimension_semantics<parallel>, #tpu.dimension_semantics<arbitrary>], iteration_bounds = array<i64: 2, 1>, scalar_prefetch = 0 : i64, scratch_operands = 0 : i64, tpu.core_type = #tpu.core_type<tc>, window_params = [{transform_indices = @transform_0, window_bounds = array<i64: 1, 326, 4>}, {pipeline_mode = #tpu.pipeline_mode<synchronous>, transform_indices = @transform_1, window_bounds = array<i64: 9, 4, 128>}, {transform_indices = @transform_2, window_bounds = array<i64: 8, 128>}, {transform_indices = @transform_3, window_bounds = array<i64: 8, 128>}]} {
    %c0_i32 = arith.constant 0 : i32
    %0 = arith.cmpi eq, %arg1, %c0_i32 : i32
    %1 = arith.extui %0 : i1 to i32
    %c0_i32_0 = arith.constant 0 : i32
    %2 = arith.cmpi ne, %1, %c0_i32_0 : i32
    scf.if %2 {
      %cst_62 = arith.constant 0.000000e+00 : f32
      %90 = vector.broadcast %cst_62 : f32 to vector<8x128xf32>
      %c0_63 = arith.constant 0 : index
      %c0_64 = arith.constant 0 : index
      %91 = vector.load %arg4[%c0_63, %c0_64] : memref<8x128xf32, #tpu.memory_space<vmem>>, vector<8x128xf32>
      tpu.vector_store %arg4[%c0_63, %c0_64], %90 {strides = array<i32>} : memref<8x128xf32, #tpu.memory_space<vmem>>, vector<8x128xf32>,
      %cst_65 = arith.constant 0.000000e+00 : f32
      %92 = vector.broadcast %cst_65 : f32 to vector<8x128xf32>
      %c0_66 = arith.constant 0 : index
      %c0_67 = arith.constant 0 : index
      %93 = vector.load %arg5[%c0_66, %c0_67] : memref<8x128xf32, #tpu.memory_space<vmem>>, vector<8x128xf32>
      tpu.vector_store %arg5[%c0_66, %c0_67], %92 {strides = array<i32>} : memref<8x128xf32, #tpu.memory_space<vmem>>, vector<8x128xf32>,
    } else {
    }
    %c0 = arith.constant 0 : index
    %c0_1 = arith.constant 0 : index
    %c0_2 = arith.constant 0 : index
    %3 = vector.load %arg2[%c0, %c0_1, %c0_2] : memref<1x326x4xbf16, #tpu.memory_space<vmem>>, vector<1x288x4xbf16>
    %4 = vector.shape_cast %3 : vector<1x288x4xbf16> to vector<288x4xbf16>
    %c0_3 = arith.constant 0 : index
    %c0_4 = arith.constant 0 : index
    %c0_5 = arith.constant 0 : index
    %5 = vector.load %arg3[%c0_3, %c0_4, %c0_5] : memref<9x4x128xbf16, #tpu.memory_space<vmem>>, vector<1x4x128xbf16>
    %6 = vector.shape_cast %5 : vector<1x4x128xbf16> to vector<4x128xbf16>
    %cst = arith.constant dense<0.000000e+00> : vector<288x128xf32>
    %7 = tpu.matmul %4, %6, %cst {dimension_numbers = #tpu.dot_dimension_numbers<[1], [0], [0], [1], [0, 0, 1, 1], [], []>} : vector<288x4xbf16>, vector<4x128xbf16>, vector<288x128xf32> -> vector<288x128xf32>
    %c0_6 = arith.constant 0 : index
    %c1 = arith.constant 1 : index
    %c0_7 = arith.constant 0 : index
    %8 = vector.load %arg2[%c0_6, %c1, %c0_7] : memref<1x326x4xbf16, #tpu.memory_space<vmem>>, vector<1x288x4xbf16>
    %9 = vector.shape_cast %8 : vector<1x288x4xbf16> to vector<288x4xbf16>
    %c1_8 = arith.constant 1 : index
    %c0_9 = arith.constant 0 : index
    %c0_10 = arith.constant 0 : index
    %10 = vector.load %arg3[%c1_8, %c0_9, %c0_10] : memref<9x4x128xbf16, #tpu.memory_space<vmem>>, vector<1x4x128xbf16>
    %11 = vector.shape_cast %10 : vector<1x4x128xbf16> to vector<4x128xbf16>
    %cst_11 = arith.constant dense<0.000000e+00> : vector<288x128xf32>
    %12 = tpu.matmul %9, %11, %cst_11 {dimension_numbers = #tpu.dot_dimension_numbers<[1], [0], [0], [1], [0, 0, 1, 1], [], []>} : vector<288x4xbf16>, vector<4x128xbf16>, vector<288x128xf32> -> vector<288x128xf32>
    %13 = arith.addf %7, %12 : vector<288x128xf32>
    %c0_12 = arith.constant 0 : index
    %c2 = arith.constant 2 : index
    %c0_13 = arith.constant 0 : index
    %14 = vector.load %arg2[%c0_12, %c2, %c0_13] : memref<1x326x4xbf16, #tpu.memory_space<vmem>>, vector<1x288x4xbf16>
    %15 = vector.shape_cast %14 : vector<1x288x4xbf16> to vector<288x4xbf16>
    %c2_14 = arith.constant 2 : index
    %c0_15 = arith.constant 0 : index
    %c0_16 = arith.constant 0 : index
    %16 = vector.load %arg3[%c2_14, %c0_15, %c0_16] : memref<9x4x128xbf16, #tpu.memory_space<vmem>>, vector<1x4x128xbf16>
    %17 = vector.shape_cast %16 : vector<1x4x128xbf16> to vector<4x128xbf16>
    %cst_17 = arith.constant dense<0.000000e+00> : vector<288x128xf32>
    %18 = tpu.matmul %15, %17, %cst_17 {dimension_numbers = #tpu.dot_dimension_numbers<[1], [0], [0], [1], [0, 0, 1, 1], [], []>} : vector<288x4xbf16>, vector<4x128xbf16>, vector<288x128xf32> -> vector<288x128xf32>
    %19 = arith.addf %13, %18 : vector<288x128xf32>
    %c0_18 = arith.constant 0 : index
    %c18 = arith.constant 18 : index
    %c0_19 = arith.constant 0 : index
    %20 = vector.load %arg2[%c0_18, %c18, %c0_19] : memref<1x326x4xbf16, #tpu.memory_space<vmem>>, vector<1x288x4xbf16>
    %21 = vector.shape_cast %20 : vector<1x288x4xbf16> to vector<288x4xbf16>
    %c3 = arith.constant 3 : index
    %c0_20 = arith.constant 0 : index
    %c0_21 = arith.constant 0 : index
    %22 = vector.load %arg3[%c3, %c0_20, %c0_21] : memref<9x4x128xbf16, #tpu.memory_space<vmem>>, vector<1x4x128xbf16>
    %23 = vector.shape_cast %22 : vector<1x4x128xbf16> to vector<4x128xbf16>
    %cst_22 = arith.constant dense<0.000000e+00> : vector<288x128xf32>
    %24 = tpu.matmul %21, %23, %cst_22 {dimension_numbers = #tpu.dot_dimension_numbers<[1], [0], [0], [1], [0, 0, 1, 1], [], []>} : vector<288x4xbf16>, vector<4x128xbf16>, vector<288x128xf32> -> vector<288x128xf32>
    %25 = arith.addf %19, %24 : vector<288x128xf32>
    %c0_23 = arith.constant 0 : index
    %c19 = arith.constant 19 : index
    %c0_24 = arith.constant 0 : index
    %26 = vector.load %arg2[%c0_23, %c19, %c0_24] : memref<1x326x4xbf16, #tpu.memory_space<vmem>>, vector<1x288x4xbf16>
    %27 = vector.shape_cast %26 : vector<1x288x4xbf16> to vector<288x4xbf16>
    %c4 = arith.constant 4 : index
    %c0_25 = arith.constant 0 : index
    %c0_26 = arith.constant 0 : index
    %28 = vector.load %arg3[%c4, %c0_25, %c0_26] : memref<9x4x128xbf16, #tpu.memory_space<vmem>>, vector<1x4x128xbf16>
    %29 = vector.shape_cast %28 : vector<1x4x128xbf16> to vector<4x128xbf16>
    %cst_27 = arith.constant dense<0.000000e+00> : vector<288x128xf32>
    %30 = tpu.matmul %27, %29, %cst_27 {dimension_numbers = #tpu.dot_dimension_numbers<[1], [0], [0], [1], [0, 0, 1, 1], [], []>} : vector<288x4xbf16>, vector<4x128xbf16>, vector<288x128xf32> -> vector<288x128xf32>
    %31 = arith.addf %25, %30 : vector<288x128xf32>
    %c0_28 = arith.constant 0 : index
    %c20 = arith.constant 20 : index
    %c0_29 = arith.constant 0 : index
    %32 = vector.load %arg2[%c0_28, %c20, %c0_29] : memref<1x326x4xbf16, #tpu.memory_space<vmem>>, vector<1x288x4xbf16>
    %33 = vector.shape_cast %32 : vector<1x288x4xbf16> to vector<288x4xbf16>
    %c5 = arith.constant 5 : index
    %c0_30 = arith.constant 0 : index
    %c0_31 = arith.constant 0 : index
    %34 = vector.load %arg3[%c5, %c0_30, %c0_31] : memref<9x4x128xbf16, #tpu.memory_space<vmem>>, vector<1x4x128xbf16>
    %35 = vector.shape_cast %34 : vector<1x4x128xbf16> to vector<4x128xbf16>
    %cst_32 = arith.constant dense<0.000000e+00> : vector<288x128xf32>
    %36 = tpu.matmul %33, %35, %cst_32 {dimension_numbers = #tpu.dot_dimension_numbers<[1], [0], [0], [1], [0, 0, 1, 1], [], []>} : vector<288x4xbf16>, vector<4x128xbf16>, vector<288x128xf32> -> vector<288x128xf32>
    %37 = arith.addf %31, %36 : vector<288x128xf32>
    %c0_33 = arith.constant 0 : index
    %c36 = arith.constant 36 : index
    %c0_34 = arith.constant 0 : index
    %38 = vector.load %arg2[%c0_33, %c36, %c0_34] : memref<1x326x4xbf16, #tpu.memory_space<vmem>>, vector<1x288x4xbf16>
    %39 = vector.shape_cast %38 : vector<1x288x4xbf16> to vector<288x4xbf16>
    %c6 = arith.constant 6 : index
    %c0_35 = arith.constant 0 : index
    %c0_36 = arith.constant 0 : index
    %40 = vector.load %arg3[%c6, %c0_35, %c0_36] : memref<9x4x128xbf16, #tpu.memory_space<vmem>>, vector<1x4x128xbf16>
    %41 = vector.shape_cast %40 : vector<1x4x128xbf16> to vector<4x128xbf16>
    %cst_37 = arith.constant dense<0.000000e+00> : vector<288x128xf32>
    %42 = tpu.matmul %39, %41, %cst_37 {dimension_numbers = #tpu.dot_dimension_numbers<[1], [0], [0], [1], [0, 0, 1, 1], [], []>} : vector<288x4xbf16>, vector<4x128xbf16>, vector<288x128xf32> -> vector<288x128xf32>
    %43 = arith.addf %37, %42 : vector<288x128xf32>
    %c0_38 = arith.constant 0 : index
    %c37 = arith.constant 37 : index
    %c0_39 = arith.constant 0 : index
    %44 = vector.load %arg2[%c0_38, %c37, %c0_39] : memref<1x326x4xbf16, #tpu.memory_space<vmem>>, vector<1x288x4xbf16>
    %45 = vector.shape_cast %44 : vector<1x288x4xbf16> to vector<288x4xbf16>
    %c7 = arith.constant 7 : index
    %c0_40 = arith.constant 0 : index
    %c0_41 = arith.constant 0 : index
    %46 = vector.load %arg3[%c7, %c0_40, %c0_41] : memref<9x4x128xbf16, #tpu.memory_space<vmem>>, vector<1x4x128xbf16>
    %47 = vector.shape_cast %46 : vector<1x4x128xbf16> to vector<4x128xbf16>
    %cst_42 = arith.constant dense<0.000000e+00> : vector<288x128xf32>
    %48 = tpu.matmul %45, %47, %cst_42 {dimension_numbers = #tpu.dot_dimension_numbers<[1], [0], [0], [1], [0, 0, 1, 1], [], []>} : vector<288x4xbf16>, vector<4x128xbf16>, vector<288x128xf32> -> vector<288x128xf32>
    %49 = arith.addf %43, %48 : vector<288x128xf32>
    %c0_43 = arith.constant 0 : index
    %c38 = arith.constant 38 : index
    %c0_44 = arith.constant 0 : index
    %50 = vector.load %arg2[%c0_43, %c38, %c0_44] : memref<1x326x4xbf16, #tpu.memory_space<vmem>>, vector<1x288x4xbf16>
    %51 = vector.shape_cast %50 : vector<1x288x4xbf16> to vector<288x4xbf16>
    %c8 = arith.constant 8 : index
    %c0_45 = arith.constant 0 : index
    %c0_46 = arith.constant 0 : index
    %52 = vector.load %arg3[%c8, %c0_45, %c0_46] : memref<9x4x128xbf16, #tpu.memory_space<vmem>>, vector<1x4x128xbf16>
    %53 = vector.shape_cast %52 : vector<1x4x128xbf16> to vector<4x128xbf16>
    %cst_47 = arith.constant dense<0.000000e+00> : vector<288x128xf32>
    %54 = tpu.matmul %51, %53, %cst_47 {dimension_numbers = #tpu.dot_dimension_numbers<[1], [0], [0], [1], [0, 0, 1, 1], [], []>} : vector<288x4xbf16>, vector<4x128xbf16>, vector<288x128xf32> -> vector<288x128xf32>
    %55 = arith.addf %49, %54 : vector<288x128xf32>
    %56 = tpu.iota {dimensions = array<i32: 0>} : vector<288x1xi32>
    %c18_i32 = arith.constant 18 : i32
    %c0_i32_48 = arith.constant 0 : i32
    %57 = arith.cmpi eq, %c18_i32, %c0_i32_48 : i32
    %c1_i32 = arith.constant 1 : i32
    %58 = arith.select %57, %c1_i32, %c18_i32 : i32
    %59 = vector.broadcast %58 : i32 to vector<288x1xi32>
    %60 = arith.remsi %56, %59 : vector<288x1xi32>
    %c0_i32_49 = arith.constant 0 : i32
    %61 = vector.broadcast %c0_i32_49 : i32 to vector<288x1xi32>
    %62 = arith.cmpi ne, %60, %61 : vector<288x1xi32>
    %c0_i32_50 = arith.constant 0 : i32
    %63 = vector.broadcast %c0_i32_50 : i32 to vector<288x1xi32>
    %64 = arith.cmpi slt, %60, %63 : vector<288x1xi32>
    %c0_i32_51 = arith.constant 0 : i32
    %65 = arith.cmpi slt, %58, %c0_i32_51 : i32
    %66 = vector.broadcast %65 : i1 to vector<288x1xi1>
    %67 = vector.broadcast %66 : vector<288x1xi1> to vector<288x1xi1>
    %68 = arith.xori %64, %67 : vector<288x1xi1>
    %69 = arith.andi %68, %62 : vector<288x1xi1>
    %70 = vector.broadcast %58 : i32 to vector<288x1xi32>
    %71 = arith.addi %60, %70 : vector<288x1xi32>
    %72 = arith.select %69, %71, %60 : vector<288x1xi1>, vector<288x1xi32>
    %c16_i32 = arith.constant 16 : i32
    %73 = vector.broadcast %c16_i32 : i32 to vector<288x1xi32>
    %74 = arith.cmpi slt, %72, %73 : vector<288x1xi32>
    %75 = arith.extui %74 : vector<288x1xi1> to vector<288x1xi32>
    %76 = arith.sitofp %75 : vector<288x1xi32> to vector<288x1xf32>
    %77 = vector.broadcast %76 : vector<288x1xf32> to vector<288x128xf32>
    %78 = arith.mulf %55, %77 : vector<288x128xf32>
    %c0_52 = arith.constant 0 : index
    %c0_53 = arith.constant 0 : index
    %79 = vector.load %arg4[%c0_52, %c0_53] : memref<8x128xf32, #tpu.memory_space<vmem>>, vector<1x128xf32>
    %cst_54 = arith.constant dense<0.000000e+00> : vector<128xf32>
    %80 = vector.multi_reduction <add>, %78, %cst_54 [0] : vector<288x128xf32> to vector<128xf32>
    %81 = vector.shape_cast %80 : vector<128xf32> to vector<1x128xf32>
    %82 = arith.addf %79, %81 : vector<1x128xf32>
    %c0_55 = arith.constant 0 : index
    %c0_56 = arith.constant 0 : index
    %83 = vector.load %arg4[%c0_55, %c0_56] : memref<8x128xf32, #tpu.memory_space<vmem>>, vector<1x128xf32>
    tpu.vector_store %arg4[%c0_55, %c0_56], %82 {strides = array<i32>} : memref<8x128xf32, #tpu.memory_space<vmem>>, vector<1x128xf32>,
    %c0_57 = arith.constant 0 : index
    %c0_58 = arith.constant 0 : index
    %84 = vector.load %arg5[%c0_57, %c0_58] : memref<8x128xf32, #tpu.memory_space<vmem>>, vector<1x128xf32>
    %85 = arith.mulf %78, %78 : vector<288x128xf32>
    %cst_59 = arith.constant dense<0.000000e+00> : vector<128xf32>
    %86 = vector.multi_reduction <add>, %85, %cst_59 [0] : vector<288x128xf32> to vector<128xf32>
    %87 = vector.shape_cast %86 : vector<128xf32> to vector<1x128xf32>
    %88 = arith.addf %84, %87 : vector<1x128xf32>
    %c0_60 = arith.constant 0 : index
    %c0_61 = arith.constant 0 : index
    %89 = vector.load %arg5[%c0_60, %c0_61] : memref<8x128xf32, #tpu.memory_space<vmem>>, vector<1x128xf32>
    tpu.vector_store %arg5[%c0_60, %c0_61], %88 {strides = array<i32>} : memref<8x128xf32, #tpu.memory_space<vmem>>, vector<1x128xf32>,
    return
  }
  func.func @transform_0(%arg0: i32, %arg1: i32) -> (i32, i32, i32) {
    %c1_i32 = arith.constant 1 : i32
    %0 = arith.muli %arg0, %c1_i32 : i32
    %1 = arith.addi %0, %arg1 : i32
    %c0_i32 = arith.constant 0 : i32
    %c0_i32_0 = arith.constant 0 : i32
    %c0_i32_1 = arith.constant 0 : i32
    return %1, %c0_i32, %c0_i32_0 : i32, i32, i32
  }
  func.func @transform_1(%arg0: i32, %arg1: i32) -> (i32, i32, i32) {
    %c0_i32 = arith.constant 0 : i32
    %c0_i32_0 = arith.constant 0 : i32
    %c0_i32_1 = arith.constant 0 : i32
    %c0_i32_2 = arith.constant 0 : i32
    return %c0_i32, %c0_i32_0, %c0_i32_1 : i32, i32, i32
  }
  func.func @transform_2(%arg0: i32, %arg1: i32) -> (i32, i32) {
    %c0_i32 = arith.constant 0 : i32
    %c0_i32_0 = arith.constant 0 : i32
    return %arg0, %c0_i32 : i32, i32
  }
  func.func @transform_3(%arg0: i32, %arg1: i32) -> (i32, i32) {
    %c0_i32 = arith.constant 0 : i32
    %c0_i32_0 = arith.constant 0 : i32
    return %arg0, %c0_i32 : i32, i32
  }
}

</mosaic_0001>

<llo_original>
// kernel: tpu_custom_call.1
$region0: #{tpu_custom_call.1}
  #allocation0 [shape = 'u32[]', space=smem, size = 0x4, offset = 0x4, fixed_abs, tag = 'smem constant byte address 0x4 - core index']
  #allocation1 [shape = 'u32[144,128]{1,0:T(1,128)}', space=vmem, size = 0x12000, scoped, tag = 'internal scratch']
  %s0 = inlined_call_operand.vmem [shape: bf16[2,326,4], index: 0, kind: input, shape index: {}]
  %s1 = inlined_call_operand.vmem [shape: bf16[9,4,128], index: 1, kind: input, shape index: {}]
  %s2 = inlined_call_operand.hbm [shape: f32[16,128], index: 2, kind: output, shape index: {0}]
  %s3 = inlined_call_operand.hbm [shape: f32[16,128], index: 3, kind: output, shape index: {1}]
  %4 = xla_tuple %s2, %s3
  %s5 = sld [smem:[#allocation0]]
  $region53: #{tpu_custom_call.1} parent=0
    _
  %s7 = ssub.s32 1, %s5
  %s8 = scalar_select 0, %s7, %s5
  $region1: #{tpu_custom_call.1} parent=0
    #allocation2 [shape = 'u8[8192]{0}', space=vmem, size = 0x2000, scoped, tag = 'output window, operand 0']
    #allocation3 [shape = 's32[2]{0}', space=sflag, size = 0x8, scoped, tag = 'scoped memory for tpu_custom_call.1']
    #allocation4 [shape = 'u8[8192]{0}', space=vmem, size = 0x2000, scoped, tag = 'output window, operand 1']
    #allocation5 [shape = 's32[2]{0}', space=sflag, size = 0x8, scoped, tag = 'scoped memory for tpu_custom_call.1']
    %9 = vsyncpa [#allocation3], 0
    %s10 = scalar_lea.sflag [#allocation3], 1
    %11 = vsyncpa %s10, 0
    %12 = vsyncpa [#allocation5], 0
    %s13 = scalar_lea.sflag [#allocation5], 1
    %14 = vsyncpa %s13, 0
    loop: start=0, step=1, limit=4
    $region2: #{tpu_custom_call.1} parent=1 // loop_pre_header
      _
    $region3: #{tpu_custom_call.1} parent=1 // loop_header
      %s16 = sphi 0, %s20
      %p17 = scmp.ge.s32.totalorder %s16, 4
      %s23 = sphi 0, %s35
      %s24 = sphi 0, %s31
      %s25 = sphi 0, %s23
      %s26 = sphi 0, %s24
      %s27 = sphi 0, %s25
      %s28 = sphi 0, %s26
      %s40 = sphi 0, %s42
      %s43 = sphi 0, %s40
      %s44 = sphi 0, %s43
      %s60 = sphi 0, %s44
      %s64 = sphi 0, %s64
      %s66 = sphi 0, %s64
      %s67 = sphi 0, %s66
      %s81 = sphi 0, %s67
      %s87 = sphi 0, %s89
      %s90 = sphi 0, %s87
      %s91 = sphi 0, %s90
      %s107 = sphi 0, %s91
      %s113 = sphi 0, %s115
      %s116 = sphi 0, %s113
      %s117 = sphi 0, %s116
      %s133 = sphi 0, %s117
    $region4: #{tpu_custom_call.1} parent=1 // loop_header_branch
      %19 = sbr.rel (%p17) target = $region8
    $region5: #{tpu_custom_call.1} parent=1 // loop_body
      %s21 = ssub.s32 %s16, 1
      %s22 = ssub.s32 %s16, 2
      %s29 = sadd.s32 1, %s24
      %p30 = scmp.ge.s32.totalorder %s29, 1
      %s31 = scalar_select %p30, 0, %s29
      %s32 = sadd.s32 1, %s23
      %s33 = scalar_select %p30, %s32, %s23
      %p34 = scmp.ge.s32.totalorder %s33, 2
      %s35 = scalar_select %p34, 0, %s33
      %s36 = sadd.s32 %s23, %s24
      %s37 = sadd.s32 %s35, %s31
      %s38 = ssub.s32 %s36, %s37
      %p39 = scmp.eq.s32.totalorder %s38, 0
      %s41 = sadd.s32 %s40, 1
      %s42 = scalar_select %p39, %s40, %s41
      %p45 = pneg %p39
      %p46 = scmp.eq.s32.totalorder %s16, 1
      %p47 = por %p45, %p46
      %p48 = scmp.ne.s32.totalorder %s40, %s43
      %p49 = scmp.eq.s32.totalorder %s16, 0
      %p50 = por %p48, %p49
      %p51 = scmp.ne.s32.totalorder %s40, %s43
      %p52 = scmp.eq.s32.totalorder %s21, 1
      %p53 = por %p51, %p52
      %p54 = scmp.ne.s32.totalorder %s43, %s44
      %p55 = scmp.eq.s32.totalorder %s21, 0
      %p56 = por %p54, %p55
      %p57 = scmp.ne.s32.totalorder %s43, %s44
      %p58 = scmp.eq.s32.totalorder %s22, 1
      %p59 = por %p57, %p58
      %p61 = scmp.ne.s32.totalorder %s44, %s60
      %p62 = scmp.eq.s32.totalorder %s22, 0
      %p63 = por %p61, %p62
      %s65 = sadd.s32 %s64, 1
      %p68 = scmp.eq.s32.totalorder %s16, 1
      %p69 = scmp.ne.s32.totalorder %s64, %s66
      %p70 = scmp.eq.s32.totalorder %s16, 0
      %p71 = por %p69, %p70
      %p72 = scmp.ne.s32.totalorder %s64, %s66
      %p73 = scmp.eq.s32.totalorder %s21, 1
      %p74 = por %p72, %p73
      %p75 = scmp.ne.s32.totalorder %s66, %s67
      %p76 = scmp.eq.s32.totalorder %s21, 0
      %p77 = por %p75, %p76
      %p78 = scmp.ne.s32.totalorder %s66, %s67
      %p79 = scmp.eq.s32.totalorder %s22, 1
      %p80 = por %p78, %p79
      %p82 = scmp.ne.s32.totalorder %s67, %s81
      %p83 = scmp.eq.s32.totalorder %s22, 0
      %p84 = por %p82, %p83
      %s85 = ssub.s32 %s23, %s35
      %p86 = scmp.eq.s32.totalorder %s85, 0
      %s88 = sadd.s32 %s87, 1
      %s89 = scalar_select %p86, %s87, %s88
      %p92 = pneg %p86
      %p93 = scmp.eq.s32.totalorder %s16, 1
      %p94 = por %p92, %p93
      %p95 = scmp.ne.s32.totalorder %s87, %s90
      %p96 = scmp.eq.s32.totalorder %s16, 0
      %p97 = por %p95, %p96
      %p98 = scmp.ne.s32.totalorder %s87, %s90
      %p99 = scmp.eq.s32.totalorder %s21, 1
      %p100 = por %p98, %p99
      %p101 = scmp.ne.s32.totalorder %s90, %s91
      %p102 = scmp.eq.s32.totalorder %s21, 0
      %p103 = por %p101, %p102
      %p104 = scmp.ne.s32.totalorder %s90, %s91
      %p105 = scmp.eq.s32.totalorder %s22, 1
      %p106 = por %p104, %p105
      %p108 = scmp.ne.s32.totalorder %s91, %s107
      %p109 = scmp.eq.s32.totalorder %s22, 0
      %p110 = por %p108, %p109
      %s111 = ssub.s32 %s23, %s35
      %p112 = scmp.eq.s32.totalorder %s111, 0
      %s114 = sadd.s32 %s113, 1
      %s115 = scalar_select %p112, %s113, %s114
      %p118 = pneg %p112
      %p119 = scmp.eq.s32.totalorder %s16, 1
      %p120 = por %p118, %p119
      %p121 = scmp.ne.s32.totalorder %s113, %s116
      %p122 = scmp.eq.s32.totalorder %s16, 0
      %p123 = por %p121, %p122
      %p124 = scmp.ne.s32.totalorder %s113, %s116
      %p125 = scmp.eq.s32.totalorder %s21, 1
      %p126 = por %p124, %p125
      %p127 = scmp.ne.s32.totalorder %s116, %s117
      %p128 = scmp.eq.s32.totalorder %s21, 0
      %p129 = por %p127, %p128
      %p130 = scmp.ne.s32.totalorder %s116, %s117
      %p131 = scmp.eq.s32.totalorder %s22, 1
      %p132 = por %p130, %p131
      %p134 = scmp.ne.s32.totalorder %s117, %s133
      %p135 = scmp.eq.s32.totalorder %s22, 0
      %p136 = por %p134, %p135
      %p137 = scmp.le.s32.totalorder 1, %s16
      %p138 = scmp.lt.s32.totalorder %s16, 3
      %p139 = pnand %p137, %p138
      %p140 = pneg %p139
      // Predicated region
      $region9: #{tpu_custom_call.1} parent=5 // pred_check
        _
      $region10: #{tpu_custom_call.1} parent=5 // pred_check_branch
        %142 = sbr.rel (%p139) target = $region12
      $region11: #{tpu_custom_call.1} parent=5 // pred_region
        %s143 = ssub.s32 %s16, 1
        // Predicated region
        $region13: #{tpu_custom_call.1} parent=11 // pred_check
          %p144 = pneg %p77
        $region14: #{tpu_custom_call.1} parent=11 // pred_check_branch
          %146 = sbr.rel (%p144) target = $region16
        $region15: #{tpu_custom_call.1} parent=11 // pred_region
          _
        $region16: #{tpu_custom_call.1} parent=11 // pred_fallthru
          _
      $region12: #{tpu_custom_call.1} parent=5 // pred_fallthru
        _
      %p147 = scmp.lt.s32.totalorder %s16, 2
      // Predicated region
      $region17: #{tpu_custom_call.1} parent=5 // pred_check
        %p148 = pneg %p147
      $region18: #{tpu_custom_call.1} parent=5 // pred_check_branch
        %150 = sbr.rel (%p148) target = $region20
      $region19: #{tpu_custom_call.1} parent=5 // pred_region
        // Predicated region
        $region21: #{tpu_custom_call.1} parent=19 // pred_check
          %p151 = pneg %p50
        $region22: #{tpu_custom_call.1} parent=19 // pred_check_branch
          %153 = sbr.rel (%p151) target = $region24
        $region23: #{tpu_custom_call.1} parent=19 // pred_region
          %s154 = sadd.s32 %s23, %s24
          %p155 = scmp.lt.s32.totalorder %s154, 1
          %s156 = scalar_select %p155, %s154, 1
          %s157 = smul.addr %s156, 41
          %s158 = smul.addr %s157, 4
          %s159 = scalar_lea.vmem %s0, %s158
          %s160 = sadd.s32 %s23, %s24
        $region24: #{tpu_custom_call.1} parent=19 // pred_fallthru
          _
      $region20: #{tpu_custom_call.1} parent=5 // pred_fallthru
        _
      %p161 = scmp.le.s32.totalorder 1, %s16
      %p162 = scmp.lt.s32.totalorder %s16, 3
      %p163 = pnand %p161, %p162
      %p164 = pneg %p163
      // Predicated region
      $region25: #{tpu_custom_call.1} parent=5 // pred_check
        _
      $region26: #{tpu_custom_call.1} parent=5 // pred_check_branch
        %166 = sbr.rel (%p163) target = $region28
      $region27: #{tpu_custom_call.1} parent=5 // pred_region
        %s167 = ssub.s32 %s16, 1
        %s168 = sadd.s32 %s25, %s26
        %p169 = scmp.lt.s32.totalorder %s168, 1
        %s170 = scalar_select %p169, %s168, 1
        %s171 = smul.addr %s170, 41
        %s172 = smul.addr %s171, 4
        %s173 = scalar_lea.vmem %s0, %s172
        %p174 = pneg %p56
        %p175 = pneg %p53
        %p176 = pneg %p77
        %p177 = pneg %p74
        %p178 = pneg %p103
        %p179 = pneg %p100
        %s180 = sand.u32 %s90, 1
        %s181 = scalar_lea.sflag [#allocation3], %s180
        %s182 = sand.u32 %s90, 1
        %s183 = smul.addr %s182, 8
        %s184 = scalar_lea.vmem [#allocation2], %s183
        %p185 = pneg %p129
        %p186 = pneg %p126
        %s187 = sand.u32 %s116, 1
        %s188 = scalar_lea.sflag [#allocation5], %s187
        %s189 = sand.u32 %s116, 1
        %s190 = smul.addr %s189, 8
        %s191 = scalar_lea.vmem [#allocation4], %s190
        %s192 = sadd.s32 %s25, %s26
        %p193 = scmp.lt.s32.totalorder %s192, 1
        %s194 = scalar_select %p193, %s192, 1
        %s195 = smul.addr %s194, 41
        %s196 = smul.addr %s195, 4
        %s197 = scalar_lea.vmem %s0, %s196
        %s198 = sadd.s32 %s25, %s26
        %p200 = scmp.eq.s32.totalorder %s26, 0
        // Predicated region
        $region29: #{tpu_custom_call.1} parent=27 // pred_check
          %p201 = pneg %p200
        $region30: #{tpu_custom_call.1} parent=27 // pred_check_branch
          %203 = sbr.rel (%p201) target = $region32
        $region31: #{tpu_custom_call.1} parent=27 // pred_region
          %204 = vst [vmem:[%s184] sm:$0xff] 0.0
          %205 = vst [vmem:[%s191] sm:$0xff] 0.0
        $region32: #{tpu_custom_call.1} parent=27 // pred_fallthru
          _
        %v206 = vld [vmem:[%s197] sm:$0xf]
        %v207 = vld [vmem:[%s197 + $0x4] sm:$0xf]
        %v208 = vld [vmem:[%s197 + $0x8] sm:$0xf]
        %v209 = vld [vmem:[%s197 + $0xc] sm:$0xf]
        %v210 = vld [vmem:[%s197 + $0x10] sm:$0xf]
        %v211 = vld [vmem:[%s197 + $0x14] sm:$0xf]
        %v212 = vld [vmem:[%s197 + $0x18] sm:$0xf]
        %v213 = vld [vmem:[%s197 + $0x1c] sm:$0xf]
        %v214 = vld [vmem:[%s197 + $0x20] sm:$0xf]
        %v215 = vld [vmem:[%s197 + $0x24] sm:$0xf]
        %v216 = vld [vmem:[%s197 + $0x28] sm:$0xf]
        %v217 = vld [vmem:[%s197 + $0x2c] sm:$0xf]
        %v218 = vld [vmem:[%s197 + $0x30] sm:$0xf]
        %v219 = vld [vmem:[%s197 + $0x34] sm:$0xf]
        %v220 = vld [vmem:[%s197 + $0x38] sm:$0xf]
        %v221 = vld [vmem:[%s197 + $0x3c] sm:$0xf]
        %v222 = vld [vmem:[%s197 + $0x40] sm:$0xf]
        %v223 = vld [vmem:[%s197 + $0x44] sm:$0xf]
        %v224 = vld [vmem:[%s197 + $0x48] sm:$0xf]
        %v225 = vld [vmem:[%s197 + $0x4c] sm:$0xf]
        %v226 = vld [vmem:[%s197 + $0x50] sm:$0xf]
        %v227 = vld [vmem:[%s197 + $0x54] sm:$0xf]
        %v228 = vld [vmem:[%s197 + $0x58] sm:$0xf]
        %v229 = vld [vmem:[%s197 + $0x5c] sm:$0xf]
        %v230 = vld [vmem:[%s197 + $0x60] sm:$0xf]
        %v231 = vld [vmem:[%s197 + $0x64] sm:$0xf]
        %v232 = vld [vmem:[%s197 + $0x68] sm:$0xf]
        %v233 = vld [vmem:[%s197 + $0x6c] sm:$0xf]
        %v234 = vld [vmem:[%s197 + $0x70] sm:$0xf]
        %v235 = vld [vmem:[%s197 + $0x74] sm:$0xf]
        %v236 = vld [vmem:[%s197 + $0x78] sm:$0xf]
        %v237 = vld [vmem:[%s197 + $0x7c] sm:$0xf]
        %v238 = vld [vmem:[%s197 + $0x80] sm:$0xf]
        %v239 = vld [vmem:[%s197 + $0x84] sm:$0xf]
        %v240 = vld [vmem:[%s197 + $0x88] sm:$0xf]
        %v241 = vld [vmem:[%s197 + $0x8c] sm:$0xf]
        %v242 = vld [vmem:[%s1] sm:$0x3]
        %v243 = vld [vmem:[%s197 + $0x90] sm:$0x1]
        %s244 = scalar_lea.vmem %s1, 2
        %v245 = vld [vmem:[%s244] sm:$0x3]
        %v283 = vunpack.c.l.b16 %v206
        %v284 = vunpack.c.l.b16 %v207
        %v285 = vunpack.c.l.b16 %v208
        %v286 = vunpack.c.l.b16 %v209
        %v287 = vunpack.c.l.b16 %v210
        %v288 = vunpack.c.l.b16 %v211
        %v289 = vunpack.c.l.b16 %v212
        %v290 = vunpack.c.l.b16 %v213
        %v291 = vunpack.c.l.b16 %v214
        %v292 = vunpack.c.l.b16 %v215
        %v293 = vunpack.c.l.b16 %v216
        %v294 = vunpack.c.l.b16 %v217
        %v295 = vunpack.c.l.b16 %v218
        %v296 = vunpack.c.l.b16 %v219
        %v297 = vunpack.c.l.b16 %v220
        %v298 = vunpack.c.l.b16 %v221
        %v299 = vunpack.c.l.b16 %v222
        %v300 = vunpack.c.l.b16 %v223
        %v301 = vunpack.c.l.b16 %v224
        %v302 = vunpack.c.l.b16 %v225
        %v303 = vunpack.c.l.b16 %v226
        %v304 = vunpack.c.l.b16 %v227
        %v305 = vunpack.c.l.b16 %v228
        %v306 = vunpack.c.l.b16 %v229
        %v307 = vunpack.c.l.b16 %v230
        %v308 = vunpack.c.l.b16 %v231
        %v309 = vunpack.c.l.b16 %v232
        %v310 = vunpack.c.l.b16 %v233
        %v311 = vunpack.c.l.b16 %v234
        %v312 = vunpack.c.l.b16 %v235
        %v313 = vunpack.c.l.b16 %v236
        %v314 = vunpack.c.l.b16 %v237
        %v315 = vunpack.c.l.b16 %v238
        %v316 = vunpack.c.l.b16 %v239
        %v317 = vunpack.c.l.b16 %v240
        %v318 = vunpack.c.l.b16 %v241
        %v319 = vunpack.c.l.b16 %v243
        %v320 = vpack.c.b16 %v284, %v283
        %v321 = vpack.c.b16 %v286, %v285
        %v322 = vpack.c.b16 %v288, %v287
        %v323 = vpack.c.b16 %v290, %v289
        %v324 = vpack.c.b16 %v292, %v291
        %v325 = vpack.c.b16 %v294, %v293
        %v326 = vpack.c.b16 %v296, %v295
        %v327 = vpack.c.b16 %v298, %v297
        %v328 = vpack.c.b16 %v300, %v299
        %v329 = vpack.c.b16 %v302, %v301
        %v330 = vpack.c.b16 %v304, %v303
        %v331 = vpack.c.b16 %v306, %v305
        %v332 = vpack.c.b16 %v308, %v307
        %v333 = vpack.c.b16 %v310, %v309
        %v334 = vpack.c.b16 %v312, %v311
        %v335 = vpack.c.b16 %v314, %v313
        %v336 = vpack.c.b16 %v316, %v315
        %v337 = vpack.c.b16 %v318, %v317
        %v338 = vpack.c.b16 %v319, %v319
        %vm339 = vsmask.f32 7424
        %v341 = vshrl.u32 %v320, 16
        %v343 = vshll.u32 %v320, 16
        %v345 = vrot.slane %v343, 1
        %v346 = vor.u32 %v341, %v345
        %v348 = vshll.u32 %v321, 16
        %v350 = vrot.slane %v348, 1
        %v351 = vsel %vm339, %v346, %v350
        %v352 = vshrl.u32 %v321, 16
        %v354 = vor.u32 %v352, %v350
        %v356 = vshll.u32 %v322, 16
        %v358 = vrot.slane %v356, 1
        %v359 = vsel %vm339, %v354, %v358
        %v360 = vshrl.u32 %v322, 16
        %v362 = vor.u32 %v360, %v358
        %v364 = vshll.u32 %v323, 16
        %v366 = vrot.slane %v364, 1
        %v367 = vsel %vm339, %v362, %v366
        %v368 = vshrl.u32 %v323, 16
        %v370 = vor.u32 %v368, %v366
        %v372 = vshll.u32 %v324, 16
        %v374 = vrot.slane %v372, 1
        %v375 = vsel %vm339, %v370, %v374
        %v376 = vshrl.u32 %v324, 16
        %v378 = vor.u32 %v376, %v374
        %v380 = vshll.u32 %v325, 16
        %v382 = vrot.slane %v380, 1
        %v383 = vsel %vm339, %v378, %v382
        %v384 = vshrl.u32 %v325, 16
        %v386 = vor.u32 %v384, %v382
        %v388 = vshll.u32 %v326, 16
        %v390 = vrot.slane %v388, 1
        %v391 = vsel %vm339, %v386, %v390
        %v392 = vshrl.u32 %v326, 16
        %v394 = vor.u32 %v392, %v390
        %v396 = vshll.u32 %v327, 16
        %v398 = vrot.slane %v396, 1
        %v399 = vsel %vm339, %v394, %v398
        %v400 = vshrl.u32 %v327, 16
        %v402 = vor.u32 %v400, %v398
        %v404 = vshll.u32 %v328, 16
        %v406 = vrot.slane %v404, 1
        %v407 = vsel %vm339, %v402, %v406
        %v408 = vshrl.u32 %v328, 16
        %v410 = vor.u32 %v408, %v406
        %v412 = vshll.u32 %v329, 16
        %v414 = vrot.slane %v412, 1
        %v415 = vsel %vm339, %v410, %v414
        %v416 = vshrl.u32 %v329, 16
        %v418 = vor.u32 %v416, %v414
        %v420 = vshll.u32 %v330, 16
        %v422 = vrot.slane %v420, 1
        %v423 = vsel %vm339, %v418, %v422
        %v424 = vshrl.u32 %v330, 16
        %v426 = vor.u32 %v424, %v422
        %v428 = vshll.u32 %v331, 16
        %v430 = vrot.slane %v428, 1
        %v431 = vsel %vm339, %v426, %v430
        %v432 = vshrl.u32 %v331, 16
        %v434 = vor.u32 %v432, %v430
        %v436 = vshll.u32 %v332, 16
        %v438 = vrot.slane %v436, 1
        %v439 = vsel %vm339, %v434, %v438
        %v440 = vshrl.u32 %v332, 16
        %v442 = vor.u32 %v440, %v438
        %v444 = vshll.u32 %v333, 16
        %v446 = vrot.slane %v444, 1
        %v447 = vsel %vm339, %v442, %v446
        %v448 = vshrl.u32 %v333, 16
        %v450 = vor.u32 %v448, %v446
        %v452 = vshll.u32 %v334, 16
        %v454 = vrot.slane %v452, 1
        %v455 = vsel %vm339, %v450, %v454
        %v456 = vshrl.u32 %v334, 16
        %v458 = vor.u32 %v456, %v454
        %v460 = vshll.u32 %v335, 16
        %v462 = vrot.slane %v460, 1
        %v463 = vsel %vm339, %v458, %v462
        %v464 = vshrl.u32 %v335, 16
        %v466 = vor.u32 %v464, %v462
        %v468 = vshll.u32 %v336, 16
        %v470 = vrot.slane %v468, 1
        %v471 = vsel %vm339, %v466, %v470
        %v472 = vshrl.u32 %v336, 16
        %v474 = vor.u32 %v472, %v470
        %v476 = vshll.u32 %v337, 16
        %v478 = vrot.slane %v476, 1
        %v479 = vsel %vm339, %v474, %v478
        %v480 = vshrl.u32 %v337, 16
        %v482 = vor.u32 %v480, %v478
        %v484 = vshll.u32 %v338, 16
        %v486 = vrot.slane %v484, 1
        %v487 = vsel %vm339, %v482, %v486
        %vm488 = vcmask 31744
        %v490 = vsel %vm488, %v351, 0
        %v493 = vsel %vm488, %v359, 0
        %v496 = vsel %vm488, %v367, 0
        %v499 = vsel %vm488, %v375, 0
        %v502 = vsel %vm488, %v383, 0
        %v505 = vsel %vm488, %v391, 0
        %v508 = vsel %vm488, %v399, 0
        %v511 = vsel %vm488, %v407, 0
        %v514 = vsel %vm488, %v415, 0
        %v517 = vsel %vm488, %v423, 0
        %v520 = vsel %vm488, %v431, 0
        %v523 = vsel %vm488, %v439, 0
        %v526 = vsel %vm488, %v447, 0
        %v529 = vsel %vm488, %v455, 0
        %v532 = vsel %vm488, %v463, 0
        %v535 = vsel %vm488, %v471, 0
        %v538 = vsel %vm488, %v479, 0
        %v541 = vsel %vm488, %v487, 0
        %vm543 = vcmask 1041408
        %v545 = vsel %vm543, %v245, 0
        %547 = vmatprep.subr.bf16.mxu0 0
        %548 = vmatpush1.bf16.msra.mxu0 %v545
        %549 = vmatprep.subr.bf16.mxu0 0
        %550 = vmatpush1.bf16.msra.mxu0 0
        %551 = vmatprep.subr.bf16.mxu0 0
        %552 = vmatpush1.bf16.msra.mxu0 0
        %553 = vmatprep.subr.bf16.mxu0 0
        %554 = vmatpush1.bf16.msra.mxu0 0
        %555 = vmatprep.subr.bf16.mxu0 0
        %556 = vmatpush1.bf16.msra.mxu0 0
        %557 = vmatprep.subr.bf16.mxu0 0
        %558 = vmatpush1.bf16.msra.mxu0 0
        %559 = vmatprep.subr.bf16.mxu0 0
        %560 = vmatpush1.bf16.msra.mxu0 0
        %561 = vmatprep.subr.bf16.mxu0 0
        %562 = vmatpush1.bf16.msra.mxu0 0
        %563 = vmatprep.subr.bf16.mxu0 0
        %564 = vmatpush1.bf16.msra.mxu0 0
        %565 = vmatprep.subr.bf16.mxu0 0
        %566 = vmatpush1.bf16.msra.mxu0 0
        %567 = vmatprep.subr.bf16.mxu0 0
        %568 = vmatpush1.bf16.msra.mxu0 0
        %569 = vmatprep.subr.bf16.mxu0 0
        %570 = vmatpush1.bf16.msra.mxu0 0
        %571 = vmatprep.subr.bf16.mxu0 0
        %572 = vmatpush1.bf16.msra.mxu0 0
        %573 = vmatprep.subr.bf16.mxu0 0
        %574 = vmatpush1.bf16.msra.mxu0 0
        %575 = vmatprep.subr.bf16.mxu0 0
        %576 = vmatpush1.bf16.msra.mxu0 0
        %577 = vmatprep.subr.bf16.mxu0 0
        %578 = vmatpush1.bf16.msra.mxu0 0
        %579 = vmatprep.mubr.bf16.mxu0 0
        %580 = vmatmul.mubr.bf16.gmra.mrb[0].mxu0 %v490
        %v581 = vpop.f32.mrb[0].mxu0
        %v582 = vadd.f32 0.0, %v581
        %v583 = vpop.f32.mrb[0].mxu0
        %v584 = vpop.f32.mrb[0].mxu0
        %v585 = vadd.f32 0.0, %v584
        %v586 = vpop.f32.mrb[0].mxu0
        %587 = vmatprep.mubr.bf16.mxu0 0
        %588 = vmatmul.mubr.bf16.gmra.mrb[0].mxu0 %v493
        %v589 = vpop.f32.mrb[0].mxu0
        %v590 = vadd.f32 0.0, %v589
        %v591 = vpop.f32.mrb[0].mxu0
        %v592 = vpop.f32.mrb[0].mxu0
        %v593 = vadd.f32 0.0, %v592
        %v594 = vpop.f32.mrb[0].mxu0
        %595 = vmatprep.mubr.bf16.mxu0 0
        %596 = vmatmul.mubr.bf16.gmra.mrb[0].mxu0 %v496
        %v597 = vpop.f32.mrb[0].mxu0
        %v598 = vadd.f32 0.0, %v597
        %v599 = vpop.f32.mrb[0].mxu0
        %v600 = vpop.f32.mrb[0].mxu0
        %v601 = vadd.f32 0.0, %v600
        %v602 = vpop.f32.mrb[0].mxu0
        %603 = vmatprep.mubr.bf16.mxu0 0
        %604 = vmatmul.mubr.bf16.gmra.mrb[0].mxu0 %v499
        %v605 = vpop.f32.mrb[0].mxu0
        %v606 = vadd.f32 0.0, %v605
        %v607 = vpop.f32.mrb[0].mxu0
        %v608 = vpop.f32.mrb[0].mxu0
        %v609 = vadd.f32 0.0, %v608
        %v610 = vpop.f32.mrb[0].mxu0
        %611 = vmatprep.mubr.bf16.mxu0 0
        %612 = vmatmul.mubr.bf16.gmra.mrb[0].mxu0 %v502
        %v613 = vpop.f32.mrb[0].mxu0
        %v614 = vadd.f32 0.0, %v613
        %v615 = vpop.f32.mrb[0].mxu0
        %v616 = vpop.f32.mrb[0].mxu0
        %v617 = vadd.f32 0.0, %v616
        %v618 = vpop.f32.mrb[0].mxu0
        %619 = vmatprep.mubr.bf16.mxu0 0
        %620 = vmatmul.mubr.bf16.gmra.mrb[0].mxu0 %v505
        %v621 = vpop.f32.mrb[0].mxu0
        %v622 = vadd.f32 0.0, %v621
        %v623 = vpop.f32.mrb[0].mxu0
        %v624 = vpop.f32.mrb[0].mxu0
        %v625 = vadd.f32 0.0, %v624
        %v626 = vpop.f32.mrb[0].mxu0
        %627 = vmatprep.mubr.bf16.mxu0 0
        %628 = vmatmul.mubr.bf16.gmra.mrb[0].mxu0 %v508
        %v629 = vpop.f32.mrb[0].mxu0
        %v630 = vadd.f32 0.0, %v629
        %v631 = vpop.f32.mrb[0].mxu0
        %v632 = vpop.f32.mrb[0].mxu0
        %v633 = vadd.f32 0.0, %v632
        %v634 = vpop.f32.mrb[0].mxu0
        %635 = vmatprep.mubr.bf16.mxu0 0
        %636 = vmatmul.mubr.bf16.gmra.mrb[0].mxu0 %v511
        %v637 = vpop.f32.mrb[0].mxu0
        %v638 = vadd.f32 0.0, %v637
        %v639 = vpop.f32.mrb[0].mxu0
        %v640 = vpop.f32.mrb[0].mxu0
        %v641 = vadd.f32 0.0, %v640
        %v642 = vpop.f32.mrb[0].mxu0
        %643 = vmatprep.mubr.bf16.mxu0 0
        %644 = vmatmul.mubr.bf16.gmra.mrb[0].mxu0 %v514
        %v645 = vpop.f32.mrb[0].mxu0
        %v646 = vadd.f32 0.0, %v645
        %v647 = vpop.f32.mrb[0].mxu0
        %v648 = vpop.f32.mrb[0].mxu0
        %v649 = vadd.f32 0.0, %v648
        %v650 = vpop.f32.mrb[0].mxu0
        %651 = vmatprep.mubr.bf16.mxu0 0
        %652 = vmatmul.mubr.bf16.gmra.mrb[0].mxu0 %v517
        %v653 = vpop.f32.mrb[0].mxu0
        %v654 = vadd.f32 0.0, %v653
        %v655 = vpop.f32.mrb[0].mxu0
        %v656 = vpop.f32.mrb[0].mxu0
        %v657 = vadd.f32 0.0, %v656
        %v658 = vpop.f32.mrb[0].mxu0
        %659 = vmatprep.mubr.bf16.mxu0 0
        %660 = vmatmul.mubr.bf16.gmra.mrb[0].mxu0 %v520
        %v661 = vpop.f32.mrb[0].mxu0
        %v662 = vadd.f32 0.0, %v661
        %v663 = vpop.f32.mrb[0].mxu0
        %v664 = vpop.f32.mrb[0].mxu0
        %v665 = vadd.f32 0.0, %v664
        %v666 = vpop.f32.mrb[0].mxu0
        %667 = vmatprep.mubr.bf16.mxu0 0
        %668 = vmatmul.mubr.bf16.gmra.mrb[0].mxu0 %v523
        %v669 = vpop.f32.mrb[0].mxu0
        %v670 = vadd.f32 0.0, %v669
        %v671 = vpop.f32.mrb[0].mxu0
        %v672 = vpop.f32.mrb[0].mxu0
        %v673 = vadd.f32 0.0, %v672
        %v674 = vpop.f32.mrb[0].mxu0
        %675 = vmatprep.mubr.bf16.mxu0 0
        %676 = vmatmul.mubr.bf16.gmra.mrb[0].mxu0 %v526
        %v677 = vpop.f32.mrb[0].mxu0
        %v678 = vadd.f32 0.0, %v677
        %v679 = vpop.f32.mrb[0].mxu0
        %v680 = vpop.f32.mrb[0].mxu0
        %v681 = vadd.f32 0.0, %v680
        %v682 = vpop.f32.mrb[0].mxu0
        %683 = vmatprep.mubr.bf16.mxu0 0
        %684 = vmatmul.mubr.bf16.gmra.mrb[0].mxu0 %v529
        %v685 = vpop.f32.mrb[0].mxu0
        %v686 = vadd.f32 0.0, %v685
        %v687 = vpop.f32.mrb[0].mxu0
        %v688 = vpop.f32.mrb[0].mxu0
        %v689 = vadd.f32 0.0, %v688
        %v690 = vpop.f32.mrb[0].mxu0
        %691 = vmatprep.mubr.bf16.mxu0 0
        %692 = vmatmul.mubr.bf16.gmra.mrb[0].mxu0 %v532
        %v693 = vpop.f32.mrb[0].mxu0
        %v694 = vadd.f32 0.0, %v693
        %v695 = vpop.f32.mrb[0].mxu0
        %v696 = vpop.f32.mrb[0].mxu0
        %v697 = vadd.f32 0.0, %v696
        %v698 = vpop.f32.mrb[0].mxu0
        %699 = vmatprep.mubr.bf16.mxu0 0
        %700 = vmatmul.mubr.bf16.gmra.mrb[0].mxu0 %v535
        %v701 = vpop.f32.mrb[0].mxu0
        %v702 = vadd.f32 0.0, %v701
        %v703 = vpop.f32.mrb[0].mxu0
        %v704 = vpop.f32.mrb[0].mxu0
        %v705 = vadd.f32 0.0, %v704
        %v706 = vpop.f32.mrb[0].mxu0
        %707 = vmatprep.mubr.bf16.mxu0 0
        %708 = vmatmul.mubr.bf16.gmra.mrb[0].mxu0 %v538
        %v709 = vpop.f32.mrb[0].mxu0
        %v710 = vadd.f32 0.0, %v709
        %v711 = vpop.f32.mrb[0].mxu0
        %v712 = vpop.f32.mrb[0].mxu0
        %v713 = vadd.f32 0.0, %v712
        %v714 = vpop.f32.mrb[0].mxu0
        %715 = vmatprep.mubr.bf16.mxu0 0
        %716 = vmatmul.mubr.bf16.gmra.mrb[0].mxu0 %v541
        %v717 = vpop.f32.mrb[0].mxu0
        %v718 = vadd.f32 0.0, %v717
        %v719 = vpop.f32.mrb[0].mxu0
        %v720 = vpop.f32.mrb[0].mxu0
        %v721 = vadd.f32 0.0, %v720
        %v722 = vpop.f32.mrb[0].mxu0
        %723 = vdwg.mxu0
        %v724 = vsel %vm488, %v320, 0
        %v726 = vsel %vm488, %v321, 0
        %v728 = vsel %vm488, %v322, 0
        %v730 = vsel %vm488, %v323, 0
        %v732 = vsel %vm488, %v324, 0
        %v734 = vsel %vm488, %v325, 0
        %v736 = vsel %vm488, %v326, 0
        %v738 = vsel %vm488, %v327, 0
        %v740 = vsel %vm488, %v328, 0
        %v742 = vsel %vm488, %v329, 0
        %v744 = vsel %vm488, %v330, 0
        %v746 = vsel %vm488, %v331, 0
        %v748 = vsel %vm488, %v332, 0
        %v750 = vsel %vm488, %v333, 0
        %v752 = vsel %vm488, %v334, 0
        %v754 = vsel %vm488, %v335, 0
        %v756 = vsel %vm488, %v336, 0
        %v758 = vsel %vm488, %v337, 0
        %v761 = vsel %vm543, %v242, 0
        %763 = vmatprep.subr.bf16.mxu0 0
        %764 = vmatpush1.bf16.msra.mxu0 %v761
        %765 = vmatprep.subr.bf16.mxu0 0
        %766 = vmatpush1.bf16.msra.mxu0 0
        %767 = vmatprep.subr.bf16.mxu0 0
        %768 = vmatpush1.bf16.msra.mxu0 0
        %769 = vmatprep.subr.bf16.mxu0 0
        %770 = vmatpush1.bf16.msra.mxu0 0
        %771 = vmatprep.subr.bf16.mxu0 0
        %772 = vmatpush1.bf16.msra.mxu0 0
        %773 = vmatprep.subr.bf16.mxu0 0
        %774 = vmatpush1.bf16.msra.mxu0 0
        %775 = vmatprep.subr.bf16.mxu0 0
        %776 = vmatpush1.bf16.msra.mxu0 0
        %777 = vmatprep.subr.bf16.mxu0 0
        %778 = vmatpush1.bf16.msra.mxu0 0
        %779 = vmatprep.subr.bf16.mxu0 0
        %780 = vmatpush1.bf16.msra.mxu0 0
        %781 = vmatprep.subr.bf16.mxu0 0
        %782 = vmatpush1.bf16.msra.mxu0 0
        %783 = vmatprep.subr.bf16.mxu0 0
        %784 = vmatpush1.bf16.msra.mxu0 0
        %785 = vmatprep.subr.bf16.mxu0 0
        %786 = vmatpush1.bf16.msra.mxu0 0
        %787 = vmatprep.subr.bf16.mxu0 0
        %788 = vmatpush1.bf16.msra.mxu0 0
        %789 = vmatprep.subr.bf16.mxu0 0
        %790 = vmatpush1.bf16.msra.mxu0 0
        %791 = vmatprep.subr.bf16.mxu0 0
        %792 = vmatpush1.bf16.msra.mxu0 0
        %793 = vmatprep.subr.bf16.mxu0 0
        %794 = vmatpush1.bf16.msra.mxu0 0
        %795 = vmatprep.mubr.bf16.mxu0 0
        %796 = vmatmul.mubr.bf16.gmra.mrb[0].mxu0 %v724
        %v797 = vpop.f32.mrb[0].mxu0
        %v798 = vadd.f32 %v582, %v797
        %v799 = vpop.f32.mrb[0].mxu0
        %v800 = vpop.f32.mrb[0].mxu0
        %v801 = vadd.f32 %v585, %v800
        %v802 = vpop.f32.mrb[0].mxu0
        %803 = vmatprep.mubr.bf16.mxu0 0
        %804 = vmatmul.mubr.bf16.gmra.mrb[0].mxu0 %v726
        %v805 = vpop.f32.mrb[0].mxu0
        %v806 = vadd.f32 %v590, %v805
        %v807 = vpop.f32.mrb[0].mxu0
        %v808 = vpop.f32.mrb[0].mxu0
        %v809 = vadd.f32 %v593, %v808
        %v810 = vpop.f32.mrb[0].mxu0
        %811 = vmatprep.mubr.bf16.mxu0 0
        %812 = vmatmul.mubr.bf16.gmra.mrb[0].mxu0 %v728
        %v813 = vpop.f32.mrb[0].mxu0
        %v814 = vadd.f32 %v598, %v813
        %v815 = vpop.f32.mrb[0].mxu0
        %v816 = vpop.f32.mrb[0].mxu0
        %v817 = vadd.f32 %v601, %v816
        %v818 = vpop.f32.mrb[0].mxu0
        %819 = vmatprep.mubr.bf16.mxu0 0
        %820 = vmatmul.mubr.bf16.gmra.mrb[0].mxu0 %v730
        %v821 = vpop.f32.mrb[0].mxu0
        %v822 = vadd.f32 %v606, %v821
        %v823 = vpop.f32.mrb[0].mxu0
        %v824 = vpop.f32.mrb[0].mxu0
        %v825 = vadd.f32 %v609, %v824
        %v826 = vpop.f32.mrb[0].mxu0
        %827 = vmatprep.mubr.bf16.mxu0 0
        %828 = vmatmul.mubr.bf16.gmra.mrb[0].mxu0 %v732
        %v829 = vpop.f32.mrb[0].mxu0
        %v830 = vadd.f32 %v614, %v829
        %v831 = vpop.f32.mrb[0].mxu0
        %v832 = vpop.f32.mrb[0].mxu0
        %v833 = vadd.f32 %v617, %v832
        %v834 = vpop.f32.mrb[0].mxu0
        %835 = vmatprep.mubr.bf16.mxu0 0
        %836 = vmatmul.mubr.bf16.gmra.mrb[0].mxu0 %v734
        %v837 = vpop.f32.mrb[0].mxu0
        %v838 = vadd.f32 %v622, %v837
        %v839 = vpop.f32.mrb[0].mxu0
        %v840 = vpop.f32.mrb[0].mxu0
        %v841 = vadd.f32 %v625, %v840
        %v842 = vpop.f32.mrb[0].mxu0
        %843 = vmatprep.mubr.bf16.mxu0 0
        %844 = vmatmul.mubr.bf16.gmra.mrb[0].mxu0 %v736
        %v845 = vpop.f32.mrb[0].mxu0
        %v846 = vadd.f32 %v630, %v845
        %v847 = vpop.f32.mrb[0].mxu0
        %v848 = vpop.f32.mrb[0].mxu0
        %v849 = vadd.f32 %v633, %v848
        %v850 = vpop.f32.mrb[0].mxu0
        %851 = vmatprep.mubr.bf16.mxu0 0
        %852 = vmatmul.mubr.bf16.gmra.mrb[0].mxu0 %v738
        %v853 = vpop.f32.mrb[0].mxu0
        %v854 = vadd.f32 %v638, %v853
        %v855 = vpop.f32.mrb[0].mxu0
        %v856 = vpop.f32.mrb[0].mxu0
        %v857 = vadd.f32 %v641, %v856
        %v858 = vpop.f32.mrb[0].mxu0
        %859 = vmatprep.mubr.bf16.mxu0 0
        %860 = vmatmul.mubr.bf16.gmra.mrb[0].mxu0 %v740
        %v861 = vpop.f32.mrb[0].mxu0
        %v862 = vadd.f32 %v646, %v861
        %v863 = vpop.f32.mrb[0].mxu0
        %v864 = vpop.f32.mrb[0].mxu0
        %v865 = vadd.f32 %v649, %v864
        %v866 = vpop.f32.mrb[0].mxu0
        %867 = vmatprep.mubr.bf16.mxu0 0
        %868 = vmatmul.mubr.bf16.gmra.mrb[0].mxu0 %v742
        %v869 = vpop.f32.mrb[0].mxu0
        %v870 = vadd.f32 %v654, %v869
        %v871 = vpop.f32.mrb[0].mxu0
        %v872 = vpop.f32.mrb[0].mxu0
        %v873 = vadd.f32 %v657, %v872
        %v874 = vpop.f32.mrb[0].mxu0
        %875 = vmatprep.mubr.bf16.mxu0 0
        %876 = vmatmul.mubr.bf16.gmra.mrb[0].mxu0 %v744
        %v877 = vpop.f32.mrb[0].mxu0
        %v878 = vadd.f32 %v662, %v877
        %v879 = vpop.f32.mrb[0].mxu0
        %v880 = vpop.f32.mrb[0].mxu0
        %v881 = vadd.f32 %v665, %v880
        %v882 = vpop.f32.mrb[0].mxu0
        %883 = vmatprep.mubr.bf16.mxu0 0
        %884 = vmatmul.mubr.bf16.gmra.mrb[0].mxu0 %v746
        %v885 = vpop.f32.mrb[0].mxu0
        %v886 = vadd.f32 %v670, %v885
        %v887 = vpop.f32.mrb[0].mxu0
        %v888 = vpop.f32.mrb[0].mxu0
        %v889 = vadd.f32 %v673, %v888
        %v890 = vpop.f32.mrb[0].mxu0
        %891 = vmatprep.mubr.bf16.mxu0 0
        %892 = vmatmul.mubr.bf16.gmra.mrb[0].mxu0 %v748
        %v893 = vpop.f32.mrb[0].mxu0
        %v894 = vadd.f32 %v678, %v893
        %v895 = vpop.f32.mrb[0].mxu0
        %v896 = vpop.f32.mrb[0].mxu0
        %v897 = vadd.f32 %v681, %v896
        %v898 = vpop.f32.mrb[0].mxu0
        %899 = vmatprep.mubr.bf16.mxu0 0
        %900 = vmatmul.mubr.bf16.gmra.mrb[0].mxu0 %v750
        %v901 = vpop.f32.mrb[0].mxu0
        %v902 = vadd.f32 %v686, %v901
        %v903 = vpop.f32.mrb[0].mxu0
        %v904 = vpop.f32.mrb[0].mxu0
        %v905 = vadd.f32 %v689, %v904
        %v906 = vpop.f32.mrb[0].mxu0
        %907 = vmatprep.mubr.bf16.mxu0 0
        %908 = vmatmul.mubr.bf16.gmra.mrb[0].mxu0 %v752
        %v909 = vpop.f32.mrb[0].mxu0
        %v910 = vadd.f32 %v694, %v909
        %v911 = vpop.f32.mrb[0].mxu0
        %v912 = vpop.f32.mrb[0].mxu0
        %v913 = vadd.f32 %v697, %v912
        %v914 = vpop.f32.mrb[0].mxu0
        %915 = vmatprep.mubr.bf16.mxu0 0
        %916 = vmatmul.mubr.bf16.gmra.mrb[0].mxu0 %v754
        %v917 = vpop.f32.mrb[0].mxu0
        %v918 = vadd.f32 %v702, %v917
        %v919 = vpop.f32.mrb[0].mxu0
        %v920 = vpop.f32.mrb[0].mxu0
        %v921 = vadd.f32 %v705, %v920
        %v922 = vpop.f32.mrb[0].mxu0
        %923 = vmatprep.mubr.bf16.mxu0 0
        %924 = vmatmul.mubr.bf16.gmra.mrb[0].mxu0 %v756
        %v925 = vpop.f32.mrb[0].mxu0
        %v926 = vadd.f32 %v710, %v925
        %v927 = vpop.f32.mrb[0].mxu0
        %v928 = vpop.f32.mrb[0].mxu0
        %v929 = vadd.f32 %v713, %v928
        %v930 = vpop.f32.mrb[0].mxu0
        %931 = vmatprep.mubr.bf16.mxu0 0
        %932 = vmatmul.mubr.bf16.gmra.mrb[0].mxu0 %v758
        %v933 = vpop.f32.mrb[0].mxu0
        %v934 = vadd.f32 %v718, %v933
        %v935 = vpop.f32.mrb[0].mxu0
        %v936 = vpop.f32.mrb[0].mxu0
        %v937 = vadd.f32 %v721, %v936
        %v938 = vpop.f32.mrb[0].mxu0
        %939 = vdwg.mxu0
        %v940 = vld [vmem:[%s197] sm:$0xe]
        %s941 = scalar_lea.vmem %s1, 4
        %v942 = vld [vmem:[%s941] sm:$0x3]
        %v944 = vunpack.c.l.b16 %v940
        %v945 = vpack.c.b16 %v284, %v944
        %vm946 = vcmask 1046528
        %v947 = vrot.slane %v945, 1
        %v948 = vrot.slane %v321, 1
        %v949 = vsel %vm946, %v947, %v948
        %v950 = vrot.slane %v322, 1
        %v951 = vsel %vm946, %v948, %v950
        %v952 = vrot.slane %v323, 1
        %v953 = vsel %vm946, %v950, %v952
        %v954 = vrot.slane %v324, 1
        %v955 = vsel %vm946, %v952, %v954
        %v956 = vrot.slane %v325, 1
        %v957 = vsel %vm946, %v954, %v956
        %v958 = vrot.slane %v326, 1
        %v959 = vsel %vm946, %v956, %v958
        %v960 = vrot.slane %v327, 1
        %v961 = vsel %vm946, %v958, %v960
        %v962 = vrot.slane %v328, 1
        %v963 = vsel %vm946, %v960, %v962
        %v964 = vrot.slane %v329, 1
        %v965 = vsel %vm946, %v962, %v964
        %v966 = vrot.slane %v330, 1
        %v967 = vsel %vm946, %v964, %v966
        %v968 = vrot.slane %v331, 1
        %v969 = vsel %vm946, %v966, %v968
        %v970 = vrot.slane %v332, 1
        %v971 = vsel %vm946, %v968, %v970
        %v972 = vrot.slane %v333, 1
        %v973 = vsel %vm946, %v970, %v972
        %v974 = vrot.slane %v334, 1
        %v975 = vsel %vm946, %v972, %v974
        %v976 = vrot.slane %v335, 1
        %v977 = vsel %vm946, %v974, %v976
        %v978 = vrot.slane %v336, 1
        %v979 = vsel %vm946, %v976, %v978
        %v980 = vrot.slane %v337, 1
        %v981 = vsel %vm946, %v978, %v980
        %v982 = vrot.slane %v338, 1
        %v983 = vsel %vm946, %v980, %v982
        %v985 = vsel %vm488, %v949, 0
        %v988 = vsel %vm488, %v951, 0
        %v991 = vsel %vm488, %v953, 0
        %v994 = vsel %vm488, %v955, 0
        %v997 = vsel %vm488, %v957, 0
        %v1000 = vsel %vm488, %v959, 0
        %v1003 = vsel %vm488, %v961, 0
        %v1006 = vsel %vm488, %v963, 0
        %v1009 = vsel %vm488, %v965, 0
        %v1012 = vsel %vm488, %v967, 0
        %v1015 = vsel %vm488, %v969, 0
        %v1018 = vsel %vm488, %v971, 0
        %v1021 = vsel %vm488, %v973, 0
        %v1024 = vsel %vm488, %v975, 0
        %v1027 = vsel %vm488, %v977, 0
        %v1030 = vsel %vm488, %v979, 0
        %v1033 = vsel %vm488, %v981, 0
        %v1036 = vsel %vm488, %v983, 0
        %v1039 = vsel %vm543, %v942, 0
        %1041 = vmatprep.subr.bf16.mxu0 0
        %1042 = vmatpush1.bf16.msra.mxu0 %v1039
        %1043 = vmatprep.subr.bf16.mxu0 0
        %1044 = vmatpush1.bf16.msra.mxu0 0
        %1045 = vmatprep.subr.bf16.mxu0 0
        %1046 = vmatpush1.bf16.msra.mxu0 0
        %1047 = vmatprep.subr.bf16.mxu0 0
        %1048 = vmatpush1.bf16.msra.mxu0 0
        %1049 = vmatprep.subr.bf16.mxu0 0
        %1050 = vmatpush1.bf16.msra.mxu0 0
        %1051 = vmatprep.subr.bf16.mxu0 0
        %1052 = vmatpush1.bf16.msra.mxu0 0
        %1053 = vmatprep.subr.bf16.mxu0 0
        %1054 = vmatpush1.bf16.msra.mxu0 0
        %1055 = vmatprep.subr.bf16.mxu0 0
        %1056 = vmatpush1.bf16.msra.mxu0 0
        %1057 = vmatprep.subr.bf16.mxu0 0
        %1058 = vmatpush1.bf16.msra.mxu0 0
        %1059 = vmatprep.subr.bf16.mxu0 0
        %1060 = vmatpush1.bf16.msra.mxu0 0
        %1061 = vmatprep.subr.bf16.mxu0 0
        %1062 = vmatpush1.bf16.msra.mxu0 0
        %1063 = vmatprep.subr.bf16.mxu0 0
        %1064 = vmatpush1.bf16.msra.mxu0 0
        %1065 = vmatprep.subr.bf16.mxu0 0
        %1066 = vmatpush1.bf16.msra.mxu0 0
        %1067 = vmatprep.subr.bf16.mxu0 0
        %1068 = vmatpush1.bf16.msra.mxu0 0
        %1069 = vmatprep.subr.bf16.mxu0 0
        %1070 = vmatpush1.bf16.msra.mxu0 0
        %1071 = vmatprep.subr.bf16.mxu0 0
        %1072 = vmatpush1.bf16.msra.mxu0 0
        %1073 = vmatprep.mubr.bf16.mxu0 0
        %1074 = vmatmul.mubr.bf16.gmra.mrb[0].mxu0 %v985
        %v1075 = vpop.f32.mrb[0].mxu0
        %v1076 = vadd.f32 0.0, %v1075
        %v1077 = vpop.f32.mrb[0].mxu0
        %v1078 = vpop.f32.mrb[0].mxu0
        %v1079 = vadd.f32 0.0, %v1078
        %v1080 = vpop.f32.mrb[0].mxu0
        %1081 = vmatprep.mubr.bf16.mxu0 0
        %1082 = vmatmul.mubr.bf16.gmra.mrb[0].mxu0 %v988
        %v1083 = vpop.f32.mrb[0].mxu0
        %v1084 = vadd.f32 0.0, %v1083
        %v1085 = vpop.f32.mrb[0].mxu0
        %v1086 = vpop.f32.mrb[0].mxu0
        %v1087 = vadd.f32 0.0, %v1086
        %v1088 = vpop.f32.mrb[0].mxu0
        %1089 = vmatprep.mubr.bf16.mxu0 0
        %1090 = vmatmul.mubr.bf16.gmra.mrb[0].mxu0 %v991
        %v1091 = vpop.f32.mrb[0].mxu0
        %v1092 = vadd.f32 0.0, %v1091
        %v1093 = vpop.f32.mrb[0].mxu0
        %v1094 = vpop.f32.mrb[0].mxu0
        %v1095 = vadd.f32 0.0, %v1094
        %v1096 = vpop.f32.mrb[0].mxu0
        %1097 = vmatprep.mubr.bf16.mxu0 0
        %1098 = vmatmul.mubr.bf16.gmra.mrb[0].mxu0 %v994
        %v1099 = vpop.f32.mrb[0].mxu0
        %v1100 = vadd.f32 0.0, %v1099
        %v1101 = vpop.f32.mrb[0].mxu0
        %v1102 = vpop.f32.mrb[0].mxu0
        %v1103 = vadd.f32 0.0, %v1102
        %v1104 = vpop.f32.mrb[0].mxu0
        %1105 = vmatprep.mubr.bf16.mxu0 0
        %1106 = vmatmul.mubr.bf16.gmra.mrb[0].mxu0 %v997
        %v1107 = vpop.f32.mrb[0].mxu0
        %v1108 = vadd.f32 0.0, %v1107
        %v1109 = vpop.f32.mrb[0].mxu0
        %v1110 = vpop.f32.mrb[0].mxu0
        %v1111 = vadd.f32 0.0, %v1110
        %v1112 = vpop.f32.mrb[0].mxu0
        %1113 = vmatprep.mubr.bf16.mxu0 0
        %1114 = vmatmul.mubr.bf16.gmra.mrb[0].mxu0 %v1000
        %v1115 = vpop.f32.mrb[0].mxu0
        %v1116 = vadd.f32 0.0, %v1115
        %v1117 = vpop.f32.mrb[0].mxu0
        %v1118 = vpop.f32.mrb[0].mxu0
        %v1119 = vadd.f32 0.0, %v1118
        %v1120 = vpop.f32.mrb[0].mxu0
        %1121 = vmatprep.mubr.bf16.mxu0 0
        %1122 = vmatmul.mubr.bf16.gmra.mrb[0].mxu0 %v1003
        %v1123 = vpop.f32.mrb[0].mxu0
        %v1124 = vadd.f32 0.0, %v1123
        %v1125 = vpop.f32.mrb[0].mxu0
        %v1126 = vpop.f32.mrb[0].mxu0
        %v1127 = vadd.f32 0.0, %v1126
        %v1128 = vpop.f32.mrb[0].mxu0
        %1129 = vmatprep.mubr.bf16.mxu0 0
        %1130 = vmatmul.mubr.bf16.gmra.mrb[0].mxu0 %v1006
        %v1131 = vpop.f32.mrb[0].mxu0
        %v1132 = vadd.f32 0.0, %v1131
        %v1133 = vpop.f32.mrb[0].mxu0
        %v1134 = vpop.f32.mrb[0].mxu0
        %v1135 = vadd.f32 0.0, %v1134
        %v1136 = vpop.f32.mrb[0].mxu0
        %1137 = vmatprep.mubr.bf16.mxu0 0
        %1138 = vmatmul.mubr.bf16.gmra.mrb[0].mxu0 %v1009
        %v1139 = vpop.f32.mrb[0].mxu0
        %v1140 = vadd.f32 0.0, %v1139
        %v1141 = vpop.f32.mrb[0].mxu0
        %v1142 = vpop.f32.mrb[0].mxu0
        %v1143 = vadd.f32 0.0, %v1142
        %v1144 = vpop.f32.mrb[0].mxu0
        %1145 = vmatprep.mubr.bf16.mxu0 0
        %1146 = vmatmul.mubr.bf16.gmra.mrb[0].mxu0 %v1012
        %v1147 = vpop.f32.mrb[0].mxu0
        %v1148 = vadd.f32 0.0, %v1147
        %v1149 = vpop.f32.mrb[0].mxu0
        %v1150 = vpop.f32.mrb[0].mxu0
        %v1151 = vadd.f32 0.0, %v1150
        %v1152 = vpop.f32.mrb[0].mxu0
        %1153 = vmatprep.mubr.bf16.mxu0 0
        %1154 = vmatmul.mubr.bf16.gmra.mrb[0].mxu0 %v1015
        %v1155 = vpop.f32.mrb[0].mxu0
        %v1156 = vadd.f32 0.0, %v1155
        %v1157 = vpop.f32.mrb[0].mxu0
        %v1158 = vpop.f32.mrb[0].mxu0
        %v1159 = vadd.f32 0.0, %v1158
        %v1160 = vpop.f32.mrb[0].mxu0
        %1161 = vmatprep.mubr.bf16.mxu0 0
        %1162 = vmatmul.mubr.bf16.gmra.mrb[0].mxu0 %v1018
        %v1163 = vpop.f32.mrb[0].mxu0
        %v1164 = vadd.f32 0.0, %v1163
        %v1165 = vpop.f32.mrb[0].mxu0
        %v1166 = vpop.f32.mrb[0].mxu0
        %v1167 = vadd.f32 0.0, %v1166
        %v1168 = vpop.f32.mrb[0].mxu0
        %1169 = vmatprep.mubr.bf16.mxu0 0
        %1170 = vmatmul.mubr.bf16.gmra.mrb[0].mxu0 %v1021
        %v1171 = vpop.f32.mrb[0].mxu0
        %v1172 = vadd.f32 0.0, %v1171
        %v1173 = vpop.f32.mrb[0].mxu0
        %v1174 = vpop.f32.mrb[0].mxu0
        %v1175 = vadd.f32 0.0, %v1174
        %v1176 = vpop.f32.mrb[0].mxu0
        %1177 = vmatprep.mubr.bf16.mxu0 0
        %1178 = vmatmul.mubr.bf16.gmra.mrb[0].mxu0 %v1024
        %v1179 = vpop.f32.mrb[0].mxu0
        %v1180 = vadd.f32 0.0, %v1179
        %v1181 = vpop.f32.mrb[0].mxu0
        %v1182 = vpop.f32.mrb[0].mxu0
        %v1183 = vadd.f32 0.0, %v1182
        %v1184 = vpop.f32.mrb[0].mxu0
        %1185 = vmatprep.mubr.bf16.mxu0 0
        %1186 = vmatmul.mubr.bf16.gmra.mrb[0].mxu0 %v1027
        %v1187 = vpop.f32.mrb[0].mxu0
        %v1188 = vadd.f32 0.0, %v1187
        %v1189 = vpop.f32.mrb[0].mxu0
        %v1190 = vpop.f32.mrb[0].mxu0
        %v1191 = vadd.f32 0.0, %v1190
        %v1192 = vpop.f32.mrb[0].mxu0
        %1193 = vmatprep.mubr.bf16.mxu0 0
        %1194 = vmatmul.mubr.bf16.gmra.mrb[0].mxu0 %v1030
        %v1195 = vpop.f32.mrb[0].mxu0
        %v1196 = vadd.f32 0.0, %v1195
        %v1197 = vpop.f32.mrb[0].mxu0
        %v1198 = vpop.f32.mrb[0].mxu0
        %v1199 = vadd.f32 0.0, %v1198
        %v1200 = vpop.f32.mrb[0].mxu0
        %1201 = vmatprep.mubr.bf16.mxu0 0
        %1202 = vmatmul.mubr.bf16.gmra.mrb[0].mxu0 %v1033
        %v1203 = vpop.f32.mrb[0].mxu0
        %v1204 = vadd.f32 0.0, %v1203
        %v1205 = vpop.f32.mrb[0].mxu0
        %v1206 = vpop.f32.mrb[0].mxu0
        %v1207 = vadd.f32 0.0, %v1206
        %v1208 = vpop.f32.mrb[0].mxu0
        %1209 = vmatprep.mubr.bf16.mxu0 0
        %1210 = vmatmul.mubr.bf16.gmra.mrb[0].mxu0 %v1036
        %v1211 = vpop.f32.mrb[0].mxu0
        %v1212 = vadd.f32 0.0, %v1211
        %v1213 = vpop.f32.mrb[0].mxu0
        %v1214 = vpop.f32.mrb[0].mxu0
        %v1215 = vadd.f32 0.0, %v1214
        %v1216 = vpop.f32.mrb[0].mxu0
        %1217 = vdwg.mxu0
        %v1218 = vadd.f32 %v798, %v1076
        %v1219 = vadd.f32 %v801, %v1079
        %v1220 = vadd.f32 %v806, %v1084
        %v1221 = vadd.f32 %v809, %v1087
        %v1222 = vadd.f32 %v814, %v1092
        %v1223 = vadd.f32 %v817, %v1095
        %v1224 = vadd.f32 %v822, %v1100
        %v1225 = vadd.f32 %v825, %v1103
        %v1226 = vadd.f32 %v830, %v1108
        %v1227 = vadd.f32 %v833, %v1111
        %v1228 = vadd.f32 %v838, %v1116
        %v1229 = vadd.f32 %v841, %v1119
        %v1230 = vadd.f32 %v846, %v1124
        %v1231 = vadd.f32 %v849, %v1127
        %v1232 = vadd.f32 %v854, %v1132
        %v1233 = vadd.f32 %v857, %v1135
        %v1234 = vadd.f32 %v862, %v1140
        %v1235 = vadd.f32 %v865, %v1143
        %v1236 = vadd.f32 %v870, %v1148
        %v1237 = vadd.f32 %v873, %v1151
        %v1238 = vadd.f32 %v878, %v1156
        %v1239 = vadd.f32 %v881, %v1159
        %v1240 = vadd.f32 %v886, %v1164
        %v1241 = vadd.f32 %v889, %v1167
        %v1242 = vadd.f32 %v894, %v1172
        %v1243 = vadd.f32 %v897, %v1175
        %v1244 = vadd.f32 %v902, %v1180
        %v1245 = vadd.f32 %v905, %v1183
        %v1246 = vadd.f32 %v910, %v1188
        %v1247 = vadd.f32 %v913, %v1191
        %v1248 = vadd.f32 %v918, %v1196
        %v1249 = vadd.f32 %v921, %v1199
        %v1250 = vadd.f32 %v926, %v1204
        %v1251 = vadd.f32 %v929, %v1207
        %v1252 = vadd.f32 %v934, %v1212
        %v1253 = vadd.f32 %v937, %v1215
        %v1254 = vld [vmem:[%s197 + $0x8] sm:$0xe]
        %v1255 = vld [vmem:[%s197 + $0xc] sm:$0xf]
        %v1256 = vld [vmem:[%s197 + $0x10] sm:$0xf]
        %v1257 = vld [vmem:[%s197 + $0x14] sm:$0xf]
        %v1258 = vld [vmem:[%s197 + $0x18] sm:$0xf]
        %v1259 = vld [vmem:[%s197 + $0x1c] sm:$0xf]
        %v1260 = vld [vmem:[%s197 + $0x20] sm:$0xf]
        %v1261 = vld [vmem:[%s197 + $0x24] sm:$0xf]
        %v1262 = vld [vmem:[%s197 + $0x28] sm:$0xf]
        %v1263 = vld [vmem:[%s197 + $0x2c] sm:$0xf]
        %v1264 = vld [vmem:[%s197 + $0x30] sm:$0xf]
        %v1265 = vld [vmem:[%s197 + $0x34] sm:$0xf]
        %v1266 = vld [vmem:[%s197 + $0x38] sm:$0xf]
        %v1267 = vld [vmem:[%s197 + $0x3c] sm:$0xf]
        %v1268 = vld [vmem:[%s197 + $0x40] sm:$0xf]
        %v1269 = vld [vmem:[%s197 + $0x44] sm:$0xf]
        %v1270 = vld [vmem:[%s197 + $0x48] sm:$0xf]
        %v1271 = vld [vmem:[%s197 + $0x4c] sm:$0xf]
        %v1272 = vld [vmem:[%s197 + $0x50] sm:$0xf]
        %v1273 = vld [vmem:[%s197 + $0x54] sm:$0xf]
        %v1274 = vld [vmem:[%s197 + $0x58] sm:$0xf]
        %v1275 = vld [vmem:[%s197 + $0x5c] sm:$0xf]
        %v1276 = vld [vmem:[%s197 + $0x60] sm:$0xf]
        %v1277 = vld [vmem:[%s197 + $0x64] sm:$0xf]
        %v1278 = vld [vmem:[%s197 + $0x68] sm:$0xf]
        %v1279 = vld [vmem:[%s197 + $0x6c] sm:$0xf]
        %v1280 = vld [vmem:[%s197 + $0x70] sm:$0xf]
        %v1281 = vld [vmem:[%s197 + $0x74] sm:$0xf]
        %v1282 = vld [vmem:[%s197 + $0x78] sm:$0xf]
        %v1283 = vld [vmem:[%s197 + $0x7c] sm:$0xf]
        %v1284 = vld [vmem:[%s197 + $0x80] sm:$0xf]
        %v1285 = vld [vmem:[%s197 + $0x84] sm:$0xf]
        %v1286 = vld [vmem:[%s197 + $0x88] sm:$0xf]
        %v1287 = vld [vmem:[%s197 + $0x8c] sm:$0xf]
        %v1288 = vld [vmem:[%s197 + $0x90] sm:$0xf]
        %v1289 = vld [vmem:[%s197 + $0x94] sm:$0xf]
        %v1290 = vld [vmem:[%s197 + $0x98] sm:$0x1]
        %s1291 = scalar_lea.vmem %s1, 6
        %v1292 = vld [vmem:[%s1291] sm:$0x3]
        %v1330 = vunpack.c.l.b16 %v1254
        %v1331 = vunpack.c.l.b16 %v1255
        %v1332 = vunpack.c.l.b16 %v1256
        %v1333 = vunpack.c.l.b16 %v1257
        %v1334 = vunpack.c.l.b16 %v1258
        %v1335 = vunpack.c.l.b16 %v1259
        %v1336 = vunpack.c.l.b16 %v1260
        %v1337 = vunpack.c.l.b16 %v1261
        %v1338 = vunpack.c.l.b16 %v1262
        %v1339 = vunpack.c.l.b16 %v1263
        %v1340 = vunpack.c.l.b16 %v1264
        %v1341 = vunpack.c.l.b16 %v1265
        %v1342 = vunpack.c.l.b16 %v1266
        %v1343 = vunpack.c.l.b16 %v1267
        %v1344 = vunpack.c.l.b16 %v1268
        %v1345 = vunpack.c.l.b16 %v1269
        %v1346 = vunpack.c.l.b16 %v1270
        %v1347 = vunpack.c.l.b16 %v1271
        %v1348 = vunpack.c.l.b16 %v1272
        %v1349 = vunpack.c.l.b16 %v1273
        %v1350 = vunpack.c.l.b16 %v1274
        %v1351 = vunpack.c.l.b16 %v1275
        %v1352 = vunpack.c.l.b16 %v1276
        %v1353 = vunpack.c.l.b16 %v1277
        %v1354 = vunpack.c.l.b16 %v1278
        %v1355 = vunpack.c.l.b16 %v1279
        %v1356 = vunpack.c.l.b16 %v1280
        %v1357 = vunpack.c.l.b16 %v1281
        %v1358 = vunpack.c.l.b16 %v1282
        %v1359 = vunpack.c.l.b16 %v1283
        %v1360 = vunpack.c.l.b16 %v1284
        %v1361 = vunpack.c.l.b16 %v1285
        %v1362 = vunpack.c.l.b16 %v1286
        %v1363 = vunpack.c.l.b16 %v1287
        %v1364 = vunpack.c.l.b16 %v1288
        %v1365 = vunpack.c.l.b16 %v1289
        %v1366 = vunpack.c.l.b16 %v1290
        %v1367 = vpack.c.b16 %v1331, %v1330
        %v1368 = vpack.c.b16 %v1333, %v1332
        %v1369 = vpack.c.b16 %v1335, %v1334
        %v1370 = vpack.c.b16 %v1337, %v1336
        %v1371 = vpack.c.b16 %v1339, %v1338
        %v1372 = vpack.c.b16 %v1341, %v1340
        %v1373 = vpack.c.b16 %v1343, %v1342
        %v1374 = vpack.c.b16 %v1345, %v1344
        %v1375 = vpack.c.b16 %v1347, %v1346
        %v1376 = vpack.c.b16 %v1349, %v1348
        %v1377 = vpack.c.b16 %v1351, %v1350
        %v1378 = vpack.c.b16 %v1353, %v1352
        %v1379 = vpack.c.b16 %v1355, %v1354
        %v1380 = vpack.c.b16 %v1357, %v1356
        %v1381 = vpack.c.b16 %v1359, %v1358
        %v1382 = vpack.c.b16 %v1361, %v1360
        %v1383 = vpack.c.b16 %v1363, %v1362
        %v1384 = vpack.c.b16 %v1365, %v1364
        %v1385 = vpack.c.b16 %v1366, %v1366
        %v1386 = vrot.slane %v1367, 1
        %v1387 = vrot.slane %v1368, 1
        %v1388 = vsel %vm946, %v1386, %v1387
        %v1389 = vrot.slane %v1369, 1
        %v1390 = vsel %vm946, %v1387, %v1389
        %v1391 = vrot.slane %v1370, 1
        %v1392 = vsel %vm946, %v1389, %v1391
        %v1393 = vrot.slane %v1371, 1
        %v1394 = vsel %vm946, %v1391, %v1393
        %v1395 = vrot.slane %v1372, 1
        %v1396 = vsel %vm946, %v1393, %v1395
        %v1397 = vrot.slane %v1373, 1
        %v1398 = vsel %vm946, %v1395, %v1397
        %v1399 = vrot.slane %v1374, 1
        %v1400 = vsel %vm946, %v1397, %v1399
        %v1401 = vrot.slane %v1375, 1
        %v1402 = vsel %vm946, %v1399, %v1401
        %v1403 = vrot.slane %v1376, 1
        %v1404 = vsel %vm946, %v1401, %v1403
        %v1405 = vrot.slane %v1377, 1
        %v1406 = vsel %vm946, %v1403, %v1405
        %v1407 = vrot.slane %v1378, 1
        %v1408 = vsel %vm946, %v1405, %v1407
        %v1409 = vrot.slane %v1379, 1
        %v1410 = vsel %vm946, %v1407, %v1409
        %v1411 = vrot.slane %v1380, 1
        %v1412 = vsel %vm946, %v1409, %v1411
        %v1413 = vrot.slane %v1381, 1
        %v1414 = vsel %vm946, %v1411, %v1413
        %v1415 = vrot.slane %v1382, 1
        %v1416 = vsel %vm946, %v1413, %v1415
        %v1417 = vrot.slane %v1383, 1
        %v1418 = vsel %vm946, %v1415, %v1417
        %v1419 = vrot.slane %v1384, 1
        %v1420 = vsel %vm946, %v1417, %v1419
        %v1421 = vrot.slane %v1385, 1
        %v1422 = vsel %vm946, %v1419, %v1421
        %v1424 = vsel %vm488, %v1388, 0
        %v1427 = vsel %vm488, %v1390, 0
        %v1430 = vsel %vm488, %v1392, 0
        %v1433 = vsel %vm488, %v1394, 0
        %v1436 = vsel %vm488, %v1396, 0
        %v1439 = vsel %vm488, %v1398, 0
        %v1442 = vsel %vm488, %v1400, 0
        %v1445 = vsel %vm488, %v1402, 0
        %v1448 = vsel %vm488, %v1404, 0
        %v1451 = vsel %vm488, %v1406, 0
        %v1454 = vsel %vm488, %v1408, 0
        %v1457 = vsel %vm488, %v1410, 0
        %v1460 = vsel %vm488, %v1412, 0
        %v1463 = vsel %vm488, %v1414, 0
        %v1466 = vsel %vm488, %v1416, 0
        %v1469 = vsel %vm488, %v1418, 0
        %v1472 = vsel %vm488, %v1420, 0
        %v1475 = vsel %vm488, %v1422, 0
        %v1478 = vsel %vm543, %v1292, 0
        %1480 = vmatprep.subr.bf16.mxu0 0
        %1481 = vmatpush1.bf16.msra.mxu0 %v1478
        %1482 = vmatprep.subr.bf16.mxu0 0
        %1483 = vmatpush1.bf16.msra.mxu0 0
        %1484 = vmatprep.subr.bf16.mxu0 0
        %1485 = vmatpush1.bf16.msra.mxu0 0
        %1486 = vmatprep.subr.bf16.mxu0 0
        %1487 = vmatpush1.bf16.msra.mxu0 0
        %1488 = vmatprep.subr.bf16.mxu0 0
        %1489 = vmatpush1.bf16.msra.mxu0 0
        %1490 = vmatprep.subr.bf16.mxu0 0
        %1491 = vmatpush1.bf16.msra.mxu0 0
        %1492 = vmatprep.subr.bf16.mxu0 0
        %1493 = vmatpush1.bf16.msra.mxu0 0
        %1494 = vmatprep.subr.bf16.mxu0 0
        %1495 = vmatpush1.bf16.msra.mxu0 0
        %1496 = vmatprep.subr.bf16.mxu0 0
        %1497 = vmatpush1.bf16.msra.mxu0 0
        %1498 = vmatprep.subr.bf16.mxu0 0
        %1499 = vmatpush1.bf16.msra.mxu0 0
        %1500 = vmatprep.subr.bf16.mxu0 0
        %1501 = vmatpush1.bf16.msra.mxu0 0
        %1502 = vmatprep.subr.bf16.mxu0 0
        %1503 = vmatpush1.bf16.msra.mxu0 0
        %1504 = vmatprep.subr.bf16.mxu0 0
        %1505 = vmatpush1.bf16.msra.mxu0 0
        %1506 = vmatprep.subr.bf16.mxu0 0
        %1507 = vmatpush1.bf16.msra.mxu0 0
        %1508 = vmatprep.subr.bf16.mxu0 0
        %1509 = vmatpush1.bf16.msra.mxu0 0
        %1510 = vmatprep.subr.bf16.mxu0 0
        %1511 = vmatpush1.bf16.msra.mxu0 0
        %1512 = vmatprep.mubr.bf16.mxu0 0
        %1513 = vmatmul.mubr.bf16.gmra.mrb[0].mxu0 %v1424
        %v1514 = vpop.f32.mrb[0].mxu0
        %v1515 = vadd.f32 0.0, %v1514
        %v1516 = vpop.f32.mrb[0].mxu0
        %v1517 = vpop.f32.mrb[0].mxu0
        %v1518 = vadd.f32 0.0, %v1517
        %v1519 = vpop.f32.mrb[0].mxu0
        %1520 = vmatprep.mubr.bf16.mxu0 0
        %1521 = vmatmul.mubr.bf16.gmra.mrb[0].mxu0 %v1427
        %v1522 = vpop.f32.mrb[0].mxu0
        %v1523 = vadd.f32 0.0, %v1522
        %v1524 = vpop.f32.mrb[0].mxu0
        %v1525 = vpop.f32.mrb[0].mxu0
        %v1526 = vadd.f32 0.0, %v1525
        %v1527 = vpop.f32.mrb[0].mxu0
        %1528 = vmatprep.mubr.bf16.mxu0 0
        %1529 = vmatmul.mubr.bf16.gmra.mrb[0].mxu0 %v1430
        %v1530 = vpop.f32.mrb[0].mxu0
        %v1531 = vadd.f32 0.0, %v1530
        %v1532 = vpop.f32.mrb[0].mxu0
        %v1533 = vpop.f32.mrb[0].mxu0
        %v1534 = vadd.f32 0.0, %v1533
        %v1535 = vpop.f32.mrb[0].mxu0
        %1536 = vmatprep.mubr.bf16.mxu0 0
        %1537 = vmatmul.mubr.bf16.gmra.mrb[0].mxu0 %v1433
        %v1538 = vpop.f32.mrb[0].mxu0
        %v1539 = vadd.f32 0.0, %v1538
        %v1540 = vpop.f32.mrb[0].mxu0
        %v1541 = vpop.f32.mrb[0].mxu0
        %v1542 = vadd.f32 0.0, %v1541
        %v1543 = vpop.f32.mrb[0].mxu0
        %1544 = vmatprep.mubr.bf16.mxu0 0
        %1545 = vmatmul.mubr.bf16.gmra.mrb[0].mxu0 %v1436
        %v1546 = vpop.f32.mrb[0].mxu0
        %v1547 = vadd.f32 0.0, %v1546
        %v1548 = vpop.f32.mrb[0].mxu0
        %v1549 = vpop.f32.mrb[0].mxu0
        %v1550 = vadd.f32 0.0, %v1549
        %v1551 = vpop.f32.mrb[0].mxu0
        %1552 = vmatprep.mubr.bf16.mxu0 0
        %1553 = vmatmul.mubr.bf16.gmra.mrb[0].mxu0 %v1439
        %v1554 = vpop.f32.mrb[0].mxu0
        %v1555 = vadd.f32 0.0, %v1554
        %v1556 = vpop.f32.mrb[0].mxu0
        %v1557 = vpop.f32.mrb[0].mxu0
        %v1558 = vadd.f32 0.0, %v1557
        %v1559 = vpop.f32.mrb[0].mxu0
        %1560 = vmatprep.mubr.bf16.mxu0 0
        %1561 = vmatmul.mubr.bf16.gmra.mrb[0].mxu0 %v1442
        %v1562 = vpop.f32.mrb[0].mxu0
        %v1563 = vadd.f32 0.0, %v1562
        %v1564 = vpop.f32.mrb[0].mxu0
        %v1565 = vpop.f32.mrb[0].mxu0
        %v1566 = vadd.f32 0.0, %v1565
        %v1567 = vpop.f32.mrb[0].mxu0
        %1568 = vmatprep.mubr.bf16.mxu0 0
        %1569 = vmatmul.mubr.bf16.gmra.mrb[0].mxu0 %v1445
        %v1570 = vpop.f32.mrb[0].mxu0
        %v1571 = vadd.f32 0.0, %v1570
        %v1572 = vpop.f32.mrb[0].mxu0
        %v1573 = vpop.f32.mrb[0].mxu0
        %v1574 = vadd.f32 0.0, %v1573
        %v1575 = vpop.f32.mrb[0].mxu0
        %1576 = vmatprep.mubr.bf16.mxu0 0
        %1577 = vmatmul.mubr.bf16.gmra.mrb[0].mxu0 %v1448
        %v1578 = vpop.f32.mrb[0].mxu0
        %v1579 = vadd.f32 0.0, %v1578
        %v1580 = vpop.f32.mrb[0].mxu0
        %v1581 = vpop.f32.mrb[0].mxu0
        %v1582 = vadd.f32 0.0, %v1581
        %v1583 = vpop.f32.mrb[0].mxu0
        %1584 = vmatprep.mubr.bf16.mxu0 0
        %1585 = vmatmul.mubr.bf16.gmra.mrb[0].mxu0 %v1451
        %v1586 = vpop.f32.mrb[0].mxu0
        %v1587 = vadd.f32 0.0, %v1586
        %v1588 = vpop.f32.mrb[0].mxu0
        %v1589 = vpop.f32.mrb[0].mxu0
        %v1590 = vadd.f32 0.0, %v1589
        %v1591 = vpop.f32.mrb[0].mxu0
        %1592 = vmatprep.mubr.bf16.mxu0 0
        %1593 = vmatmul.mubr.bf16.gmra.mrb[0].mxu0 %v1454
        %v1594 = vpop.f32.mrb[0].mxu0
        %v1595 = vadd.f32 0.0, %v1594
        %v1596 = vpop.f32.mrb[0].mxu0
        %v1597 = vpop.f32.mrb[0].mxu0
        %v1598 = vadd.f32 0.0, %v1597
        %v1599 = vpop.f32.mrb[0].mxu0
        %1600 = vmatprep.mubr.bf16.mxu0 0
        %1601 = vmatmul.mubr.bf16.gmra.mrb[0].mxu0 %v1457
        %v1602 = vpop.f32.mrb[0].mxu0
        %v1603 = vadd.f32 0.0, %v1602
        %v1604 = vpop.f32.mrb[0].mxu0
        %v1605 = vpop.f32.mrb[0].mxu0
        %v1606 = vadd.f32 0.0, %v1605
        %v1607 = vpop.f32.mrb[0].mxu0
        %1608 = vmatprep.mubr.bf16.mxu0 0
        %1609 = vmatmul.mubr.bf16.gmra.mrb[0].mxu0 %v1460
        %v1610 = vpop.f32.mrb[0].mxu0
        %v1611 = vadd.f32 0.0, %v1610
        %v1612 = vpop.f32.mrb[0].mxu0
        %v1613 = vpop.f32.mrb[0].mxu0
        %v1614 = vadd.f32 0.0, %v1613
        %v1615 = vpop.f32.mrb[0].mxu0
        %1616 = vmatprep.mubr.bf16.mxu0 0
        %1617 = vmatmul.mubr.bf16.gmra.mrb[0].mxu0 %v1463
        %v1618 = vpop.f32.mrb[0].mxu0
        %v1619 = vadd.f32 0.0, %v1618
        %v1620 = vpop.f32.mrb[0].mxu0
        %v1621 = vpop.f32.mrb[0].mxu0
        %v1622 = vadd.f32 0.0, %v1621
        %v1623 = vpop.f32.mrb[0].mxu0
        %1624 = vmatprep.mubr.bf16.mxu0 0
        %1625 = vmatmul.mubr.bf16.gmra.mrb[0].mxu0 %v1466
        %v1626 = vpop.f32.mrb[0].mxu0
        %v1627 = vadd.f32 0.0, %v1626
        %v1628 = vpop.f32.mrb[0].mxu0
        %v1629 = vpop.f32.mrb[0].mxu0
        %v1630 = vadd.f32 0.0, %v1629
        %v1631 = vpop.f32.mrb[0].mxu0
        %1632 = vmatprep.mubr.bf16.mxu0 0
        %1633 = vmatmul.mubr.bf16.gmra.mrb[0].mxu0 %v1469
        %v1634 = vpop.f32.mrb[0].mxu0
        %v1635 = vadd.f32 0.0, %v1634
        %v1636 = vpop.f32.mrb[0].mxu0
        %v1637 = vpop.f32.mrb[0].mxu0
        %v1638 = vadd.f32 0.0, %v1637
        %v1639 = vpop.f32.mrb[0].mxu0
        %1640 = vmatprep.mubr.bf16.mxu0 0
        %1641 = vmatmul.mubr.bf16.gmra.mrb[0].mxu0 %v1472
        %v1642 = vpop.f32.mrb[0].mxu0
        %v1643 = vadd.f32 0.0, %v1642
        %v1644 = vpop.f32.mrb[0].mxu0
        %v1645 = vpop.f32.mrb[0].mxu0
        %v1646 = vadd.f32 0.0, %v1645
        %v1647 = vpop.f32.mrb[0].mxu0
        %1648 = vmatprep.mubr.bf16.mxu0 0
        %1649 = vmatmul.mubr.bf16.gmra.mrb[0].mxu0 %v1475
        %v1650 = vpop.f32.mrb[0].mxu0
        %v1651 = vadd.f32 0.0, %v1650
        %v1652 = vpop.f32.mrb[0].mxu0
        %v1653 = vpop.f32.mrb[0].mxu0
        %v1654 = vadd.f32 0.0, %v1653
        %v1655 = vpop.f32.mrb[0].mxu0
        %1656 = vdwg.mxu0
        %v1657 = vadd.f32 %v1218, %v1515
        %v1658 = vadd.f32 %v1219, %v1518
        %v1659 = vadd.f32 %v1220, %v1523
        %v1660 = vadd.f32 %v1221, %v1526
        %v1661 = vadd.f32 %v1222, %v1531
        %v1662 = vadd.f32 %v1223, %v1534
        %v1663 = vadd.f32 %v1224, %v1539
        %v1664 = vadd.f32 %v1225, %v1542
        %v1665 = vadd.f32 %v1226, %v1547
        %v1666 = vadd.f32 %v1227, %v1550
        %v1667 = vadd.f32 %v1228, %v1555
        %v1668 = vadd.f32 %v1229, %v1558
        %v1669 = vadd.f32 %v1230, %v1563
        %v1670 = vadd.f32 %v1231, %v1566
        %v1671 = vadd.f32 %v1232, %v1571
        %v1672 = vadd.f32 %v1233, %v1574
        %v1673 = vadd.f32 %v1234, %v1579
        %v1674 = vadd.f32 %v1235, %v1582
        %v1675 = vadd.f32 %v1236, %v1587
        %v1676 = vadd.f32 %v1237, %v1590
        %v1677 = vadd.f32 %v1238, %v1595
        %v1678 = vadd.f32 %v1239, %v1598
        %v1679 = vadd.f32 %v1240, %v1603
        %v1680 = vadd.f32 %v1241, %v1606
        %v1681 = vadd.f32 %v1242, %v1611
        %v1682 = vadd.f32 %v1243, %v1614
        %v1683 = vadd.f32 %v1244, %v1619
        %v1684 = vadd.f32 %v1245, %v1622
        %v1685 = vadd.f32 %v1246, %v1627
        %v1686 = vadd.f32 %v1247, %v1630
        %v1687 = vadd.f32 %v1248, %v1635
        %v1688 = vadd.f32 %v1249, %v1638
        %v1689 = vadd.f32 %v1250, %v1643
        %v1690 = vadd.f32 %v1251, %v1646
        %v1691 = vadd.f32 %v1252, %v1651
        %v1692 = vadd.f32 %v1253, %v1654
        %v1693 = vld [vmem:[%s197 + $0x98] sm:$0x3]
        %s1694 = scalar_lea.vmem %s1, 8
        %v1695 = vld [vmem:[%s1694] sm:$0x3]
        %v1697 = vunpack.c.l.b16 %v1693
        %v1698 = vpack.c.b16 %v1697, %v1697
        %vm1699 = vsmask.f32 6400
        %v1701 = vshrl.u32 %v1367, 16
        %v1703 = vrot.slane %v1701, 1
        %v1704 = vshll.u32 %v1367, 16
        %v1706 = vrot.slane %v1704, 2
        %v1707 = vor.u32 %v1703, %v1706
        %v1709 = vshrl.u32 %v1368, 16
        %v1711 = vrot.slane %v1709, 1
        %v1712 = vshll.u32 %v1368, 16
        %v1714 = vrot.slane %v1712, 2
        %v1715 = vor.u32 %v1711, %v1714
        %v1716 = vsel %vm1699, %v1707, %v1715
        %v1718 = vshrl.u32 %v1369, 16
        %v1720 = vrot.slane %v1718, 1
        %v1721 = vshll.u32 %v1369, 16
        %v1723 = vrot.slane %v1721, 2
        %v1724 = vor.u32 %v1720, %v1723
        %v1725 = vsel %vm1699, %v1715, %v1724
        %v1727 = vshrl.u32 %v1370, 16
        %v1729 = vrot.slane %v1727, 1
        %v1730 = vshll.u32 %v1370, 16
        %v1732 = vrot.slane %v1730, 2
        %v1733 = vor.u32 %v1729, %v1732
        %v1734 = vsel %vm1699, %v1724, %v1733
        %v1736 = vshrl.u32 %v1371, 16
        %v1738 = vrot.slane %v1736, 1
        %v1739 = vshll.u32 %v1371, 16
        %v1741 = vrot.slane %v1739, 2
        %v1742 = vor.u32 %v1738, %v1741
        %v1743 = vsel %vm1699, %v1733, %v1742
        %v1745 = vshrl.u32 %v1372, 16
        %v1747 = vrot.slane %v1745, 1
        %v1748 = vshll.u32 %v1372, 16
        %v1750 = vrot.slane %v1748, 2
        %v1751 = vor.u32 %v1747, %v1750
        %v1752 = vsel %vm1699, %v1742, %v1751
        %v1754 = vshrl.u32 %v1373, 16
        %v1756 = vrot.slane %v1754, 1
        %v1757 = vshll.u32 %v1373, 16
        %v1759 = vrot.slane %v1757, 2
        %v1760 = vor.u32 %v1756, %v1759
        %v1761 = vsel %vm1699, %v1751, %v1760
        %v1763 = vshrl.u32 %v1374, 16
        %v1765 = vrot.slane %v1763, 1
        %v1766 = vshll.u32 %v1374, 16
        %v1768 = vrot.slane %v1766, 2
        %v1769 = vor.u32 %v1765, %v1768
        %v1770 = vsel %vm1699, %v1760, %v1769
        %v1772 = vshrl.u32 %v1375, 16
        %v1774 = vrot.slane %v1772, 1
        %v1775 = vshll.u32 %v1375, 16
        %v1777 = vrot.slane %v1775, 2
        %v1778 = vor.u32 %v1774, %v1777
        %v1779 = vsel %vm1699, %v1769, %v1778
        %v1781 = vshrl.u32 %v1376, 16
        %v1783 = vrot.slane %v1781, 1
        %v1784 = vshll.u32 %v1376, 16
        %v1786 = vrot.slane %v1784, 2
        %v1787 = vor.u32 %v1783, %v1786
        %v1788 = vsel %vm1699, %v1778, %v1787
        %v1790 = vshrl.u32 %v1377, 16
        %v1792 = vrot.slane %v1790, 1
        %v1793 = vshll.u32 %v1377, 16
        %v1795 = vrot.slane %v1793, 2
        %v1796 = vor.u32 %v1792, %v1795
        %v1797 = vsel %vm1699, %v1787, %v1796
        %v1799 = vshrl.u32 %v1378, 16
        %v1801 = vrot.slane %v1799, 1
        %v1802 = vshll.u32 %v1378, 16
        %v1804 = vrot.slane %v1802, 2
        %v1805 = vor.u32 %v1801, %v1804
        %v1806 = vsel %vm1699, %v1796, %v1805
        %v1808 = vshrl.u32 %v1379, 16
        %v1810 = vrot.slane %v1808, 1
        %v1811 = vshll.u32 %v1379, 16
        %v1813 = vrot.slane %v1811, 2
        %v1814 = vor.u32 %v1810, %v1813
        %v1815 = vsel %vm1699, %v1805, %v1814
        %v1817 = vshrl.u32 %v1380, 16
        %v1819 = vrot.slane %v1817, 1
        %v1820 = vshll.u32 %v1380, 16
        %v1822 = vrot.slane %v1820, 2
        %v1823 = vor.u32 %v1819, %v1822
        %v1824 = vsel %vm1699, %v1814, %v1823
        %v1826 = vshrl.u32 %v1381, 16
        %v1828 = vrot.slane %v1826, 1
        %v1829 = vshll.u32 %v1381, 16
        %v1831 = vrot.slane %v1829, 2
        %v1832 = vor.u32 %v1828, %v1831
        %v1833 = vsel %vm1699, %v1823, %v1832
        %v1835 = vshrl.u32 %v1382, 16
        %v1837 = vrot.slane %v1835, 1
        %v1838 = vshll.u32 %v1382, 16
        %v1840 = vrot.slane %v1838, 2
        %v1841 = vor.u32 %v1837, %v1840
        %v1842 = vsel %vm1699, %v1832, %v1841
        %v1844 = vshrl.u32 %v1383, 16
        %v1846 = vrot.slane %v1844, 1
        %v1847 = vshll.u32 %v1383, 16
        %v1849 = vrot.slane %v1847, 2
        %v1850 = vor.u32 %v1846, %v1849
        %v1851 = vsel %vm1699, %v1841, %v1850
        %v1853 = vshrl.u32 %v1384, 16
        %v1855 = vrot.slane %v1853, 1
        %v1856 = vshll.u32 %v1384, 16
        %v1858 = vrot.slane %v1856, 2
        %v1859 = vor.u32 %v1855, %v1858
        %v1860 = vsel %vm1699, %v1850, %v1859
        %v1862 = vshrl.u32 %v1698, 16
        %v1864 = vrot.slane %v1862, 1
        %v1865 = vshll.u32 %v1698, 16
        %v1867 = vrot.slane %v1865, 2
        %v1868 = vor.u32 %v1864, %v1867
        %v1869 = vsel %vm1699, %v1859, %v1868
        %v1871 = vsel %vm488, %v1716, 0
        %v1874 = vsel %vm488, %v1725, 0
        %v1877 = vsel %vm488, %v1734, 0
        %v1880 = vsel %vm488, %v1743, 0
        %v1883 = vsel %vm488, %v1752, 0
        %v1886 = vsel %vm488, %v1761, 0
        %v1889 = vsel %vm488, %v1770, 0
        %v1892 = vsel %vm488, %v1779, 0
        %v1895 = vsel %vm488, %v1788, 0
        %v1898 = vsel %vm488, %v1797, 0
        %v1901 = vsel %vm488, %v1806, 0
        %v1904 = vsel %vm488, %v1815, 0
        %v1907 = vsel %vm488, %v1824, 0
        %v1910 = vsel %vm488, %v1833, 0
        %v1913 = vsel %vm488, %v1842, 0
        %v1916 = vsel %vm488, %v1851, 0
        %v1919 = vsel %vm488, %v1860, 0
        %v1922 = vsel %vm488, %v1869, 0
        %v1925 = vsel %vm543, %v1695, 0
        %1927 = vmatprep.subr.bf16.mxu0 0
        %1928 = vmatpush1.bf16.msra.mxu0 %v1925
        %1929 = vmatprep.subr.bf16.mxu0 0
        %1930 = vmatpush1.bf16.msra.mxu0 0
        %1931 = vmatprep.subr.bf16.mxu0 0
        %1932 = vmatpush1.bf16.msra.mxu0 0
        %1933 = vmatprep.subr.bf16.mxu0 0
        %1934 = vmatpush1.bf16.msra.mxu0 0
        %1935 = vmatprep.subr.bf16.mxu0 0
        %1936 = vmatpush1.bf16.msra.mxu0 0
        %1937 = vmatprep.subr.bf16.mxu0 0
        %1938 = vmatpush1.bf16.msra.mxu0 0
        %1939 = vmatprep.subr.bf16.mxu0 0
        %1940 = vmatpush1.bf16.msra.mxu0 0
        %1941 = vmatprep.subr.bf16.mxu0 0
        %1942 = vmatpush1.bf16.msra.mxu0 0
        %1943 = vmatprep.subr.bf16.mxu0 0
        %1944 = vmatpush1.bf16.msra.mxu0 0
        %1945 = vmatprep.subr.bf16.mxu0 0
        %1946 = vmatpush1.bf16.msra.mxu0 0
        %1947 = vmatprep.subr.bf16.mxu0 0
        %1948 = vmatpush1.bf16.msra.mxu0 0
        %1949 = vmatprep.subr.bf16.mxu0 0
        %1950 = vmatpush1.bf16.msra.mxu0 0
        %1951 = vmatprep.subr.bf16.mxu0 0
        %1952 = vmatpush1.bf16.msra.mxu0 0
        %1953 = vmatprep.subr.bf16.mxu0 0
        %1954 = vmatpush1.bf16.msra.mxu0 0
        %1955 = vmatprep.subr.bf16.mxu0 0
        %1956 = vmatpush1.bf16.msra.mxu0 0
        %1957 = vmatprep.subr.bf16.mxu0 0
        %1958 = vmatpush1.bf16.msra.mxu0 0
        %1959 = vmatprep.mubr.bf16.mxu0 0
        %1960 = vmatmul.mubr.bf16.gmra.mrb[0].mxu0 %v1871
        %v1961 = vpop.f32.mrb[0].mxu0
        %v1962 = vadd.f32 0.0, %v1961
        %v1963 = vpop.f32.mrb[0].mxu0
        %v1964 = vpop.f32.mrb[0].mxu0
        %v1965 = vadd.f32 0.0, %v1964
        %v1966 = vpop.f32.mrb[0].mxu0
        %1967 = vmatprep.mubr.bf16.mxu0 0
        %1968 = vmatmul.mubr.bf16.gmra.mrb[0].mxu0 %v1874
        %v1969 = vpop.f32.mrb[0].mxu0
        %v1970 = vadd.f32 0.0, %v1969
        %v1971 = vpop.f32.mrb[0].mxu0
        %v1972 = vpop.f32.mrb[0].mxu0
        %v1973 = vadd.f32 0.0, %v1972
        %v1974 = vpop.f32.mrb[0].mxu0
        %1975 = vmatprep.mubr.bf16.mxu0 0
        %1976 = vmatmul.mubr.bf16.gmra.mrb[0].mxu0 %v1877
        %v1977 = vpop.f32.mrb[0].mxu0
        %v1978 = vadd.f32 0.0, %v1977
        %v1979 = vpop.f32.mrb[0].mxu0
        %v1980 = vpop.f32.mrb[0].mxu0
        %v1981 = vadd.f32 0.0, %v1980
        %v1982 = vpop.f32.mrb[0].mxu0
        %1983 = vmatprep.mubr.bf16.mxu0 0
        %1984 = vmatmul.mubr.bf16.gmra.mrb[0].mxu0 %v1880
        %v1985 = vpop.f32.mrb[0].mxu0
        %v1986 = vadd.f32 0.0, %v1985
        %v1987 = vpop.f32.mrb[0].mxu0
        %v1988 = vpop.f32.mrb[0].mxu0
        %v1989 = vadd.f32 0.0, %v1988
        %v1990 = vpop.f32.mrb[0].mxu0
        %1991 = vmatprep.mubr.bf16.mxu0 0
        %1992 = vmatmul.mubr.bf16.gmra.mrb[0].mxu0 %v1883
        %v1993 = vpop.f32.mrb[0].mxu0
        %v1994 = vadd.f32 0.0, %v1993
        %v1995 = vpop.f32.mrb[0].mxu0
        %v1996 = vpop.f32.mrb[0].mxu0
        %v1997 = vadd.f32 0.0, %v1996
        %v1998 = vpop.f32.mrb[0].mxu0
        %1999 = vmatprep.mubr.bf16.mxu0 0
        %2000 = vmatmul.mubr.bf16.gmra.mrb[0].mxu0 %v1886
        %v2001 = vpop.f32.mrb[0].mxu0
        %v2002 = vadd.f32 0.0, %v2001
        %v2003 = vpop.f32.mrb[0].mxu0
        %v2004 = vpop.f32.mrb[0].mxu0
        %v2005 = vadd.f32 0.0, %v2004
        %v2006 = vpop.f32.mrb[0].mxu0
        %2007 = vmatprep.mubr.bf16.mxu0 0
        %2008 = vmatmul.mubr.bf16.gmra.mrb[0].mxu0 %v1889
        %v2009 = vpop.f32.mrb[0].mxu0
        %v2010 = vadd.f32 0.0, %v2009
        %v2011 = vpop.f32.mrb[0].mxu0
        %v2012 = vpop.f32.mrb[0].mxu0
        %v2013 = vadd.f32 0.0, %v2012
        %v2014 = vpop.f32.mrb[0].mxu0
        %2015 = vmatprep.mubr.bf16.mxu0 0
        %2016 = vmatmul.mubr.bf16.gmra.mrb[0].mxu0 %v1892
        %v2017 = vpop.f32.mrb[0].mxu0
        %v2018 = vadd.f32 0.0, %v2017
        %v2019 = vpop.f32.mrb[0].mxu0
        %v2020 = vpop.f32.mrb[0].mxu0
        %v2021 = vadd.f32 0.0, %v2020
        %v2022 = vpop.f32.mrb[0].mxu0
        %2023 = vmatprep.mubr.bf16.mxu0 0
        %2024 = vmatmul.mubr.bf16.gmra.mrb[0].mxu0 %v1895
        %v2025 = vpop.f32.mrb[0].mxu0
        %v2026 = vadd.f32 0.0, %v2025
        %v2027 = vpop.f32.mrb[0].mxu0
        %v2028 = vpop.f32.mrb[0].mxu0
        %v2029 = vadd.f32 0.0, %v2028
        %v2030 = vpop.f32.mrb[0].mxu0
        %2031 = vmatprep.mubr.bf16.mxu0 0
        %2032 = vmatmul.mubr.bf16.gmra.mrb[0].mxu0 %v1898
        %v2033 = vpop.f32.mrb[0].mxu0
        %v2034 = vadd.f32 0.0, %v2033
        %v2035 = vpop.f32.mrb[0].mxu0
        %v2036 = vpop.f32.mrb[0].mxu0
        %v2037 = vadd.f32 0.0, %v2036
        %v2038 = vpop.f32.mrb[0].mxu0
        %2039 = vmatprep.mubr.bf16.mxu0 0
        %2040 = vmatmul.mubr.bf16.gmra.mrb[0].mxu0 %v1901
        %v2041 = vpop.f32.mrb[0].mxu0
        %v2042 = vadd.f32 0.0, %v2041
        %v2043 = vpop.f32.mrb[0].mxu0
        %v2044 = vpop.f32.mrb[0].mxu0
        %v2045 = vadd.f32 0.0, %v2044
        %v2046 = vpop.f32.mrb[0].mxu0
        %2047 = vmatprep.mubr.bf16.mxu0 0
        %2048 = vmatmul.mubr.bf16.gmra.mrb[0].mxu0 %v1904
        %v2049 = vpop.f32.mrb[0].mxu0
        %v2050 = vadd.f32 0.0, %v2049
        %v2051 = vpop.f32.mrb[0].mxu0
        %v2052 = vpop.f32.mrb[0].mxu0
        %v2053 = vadd.f32 0.0, %v2052
        %v2054 = vpop.f32.mrb[0].mxu0
        %2055 = vmatprep.mubr.bf16.mxu0 0
        %2056 = vmatmul.mubr.bf16.gmra.mrb[0].mxu0 %v1907
        %v2057 = vpop.f32.mrb[0].mxu0
        %v2058 = vadd.f32 0.0, %v2057
        %v2059 = vpop.f32.mrb[0].mxu0
        %v2060 = vpop.f32.mrb[0].mxu0
        %v2061 = vadd.f32 0.0, %v2060
        %v2062 = vpop.f32.mrb[0].mxu0
        %2063 = vmatprep.mubr.bf16.mxu0 0
        %2064 = vmatmul.mubr.bf16.gmra.mrb[0].mxu0 %v1910
        %v2065 = vpop.f32.mrb[0].mxu0
        %v2066 = vadd.f32 0.0, %v2065
        %v2067 = vpop.f32.mrb[0].mxu0
        %v2068 = vpop.f32.mrb[0].mxu0
        %v2069 = vadd.f32 0.0, %v2068
        %v2070 = vpop.f32.mrb[0].mxu0
        %2071 = vmatprep.mubr.bf16.mxu0 0
        %2072 = vmatmul.mubr.bf16.gmra.mrb[0].mxu0 %v1913
        %v2073 = vpop.f32.mrb[0].mxu0
        %v2074 = vadd.f32 0.0, %v2073
        %v2075 = vpop.f32.mrb[0].mxu0
        %v2076 = vpop.f32.mrb[0].mxu0
        %v2077 = vadd.f32 0.0, %v2076
        %v2078 = vpop.f32.mrb[0].mxu0
        %2079 = vmatprep.mubr.bf16.mxu0 0
        %2080 = vmatmul.mubr.bf16.gmra.mrb[0].mxu0 %v1916
        %v2081 = vpop.f32.mrb[0].mxu0
        %v2082 = vadd.f32 0.0, %v2081
        %v2083 = vpop.f32.mrb[0].mxu0
        %v2084 = vpop.f32.mrb[0].mxu0
        %v2085 = vadd.f32 0.0, %v2084
        %v2086 = vpop.f32.mrb[0].mxu0
        %2087 = vmatprep.mubr.bf16.mxu0 0
        %2088 = vmatmul.mubr.bf16.gmra.mrb[0].mxu0 %v1919
        %v2089 = vpop.f32.mrb[0].mxu0
        %v2090 = vadd.f32 0.0, %v2089
        %v2091 = vpop.f32.mrb[0].mxu0
        %v2092 = vpop.f32.mrb[0].mxu0
        %v2093 = vadd.f32 0.0, %v2092
        %v2094 = vpop.f32.mrb[0].mxu0
        %2095 = vmatprep.mubr.bf16.mxu0 0
        %2096 = vmatmul.mubr.bf16.gmra.mrb[0].mxu0 %v1922
        %v2097 = vpop.f32.mrb[0].mxu0
        %v2098 = vadd.f32 0.0, %v2097
        %v2099 = vpop.f32.mrb[0].mxu0
        %v2100 = vpop.f32.mrb[0].mxu0
        %v2101 = vadd.f32 0.0, %v2100
        %v2102 = vpop.f32.mrb[0].mxu0
        %2103 = vdwg.mxu0
        %v2104 = vadd.f32 %v1657, %v1962
        %v2105 = vadd.f32 %v1658, %v1965
        %v2106 = vadd.f32 %v1659, %v1970
        %v2107 = vadd.f32 %v1660, %v1973
        %v2108 = vadd.f32 %v1661, %v1978
        %v2109 = vadd.f32 %v1662, %v1981
        %v2110 = vadd.f32 %v1663, %v1986
        %v2111 = vadd.f32 %v1664, %v1989
        %v2112 = vadd.f32 %v1665, %v1994
        %v2113 = vadd.f32 %v1666, %v1997
        %v2114 = vadd.f32 %v1667, %v2002
        %v2115 = vadd.f32 %v1668, %v2005
        %v2116 = vadd.f32 %v1669, %v2010
        %v2117 = vadd.f32 %v1670, %v2013
        %v2118 = vadd.f32 %v1671, %v2018
        %v2119 = vadd.f32 %v1672, %v2021
        %v2120 = vadd.f32 %v1673, %v2026
        %v2121 = vadd.f32 %v1674, %v2029
        %v2122 = vadd.f32 %v1675, %v2034
        %v2123 = vadd.f32 %v1676, %v2037
        %v2124 = vadd.f32 %v1677, %v2042
        %v2125 = vadd.f32 %v1678, %v2045
        %v2126 = vadd.f32 %v1679, %v2050
        %v2127 = vadd.f32 %v1680, %v2053
        %v2128 = vadd.f32 %v1681, %v2058
        %v2129 = vadd.f32 %v1682, %v2061
        %v2130 = vadd.f32 %v1683, %v2066
        %v2131 = vadd.f32 %v1684, %v2069
        %v2132 = vadd.f32 %v1685, %v2074
        %v2133 = vadd.f32 %v1686, %v2077
        %v2134 = vadd.f32 %v1687, %v2082
        %v2135 = vadd.f32 %v1688, %v2085
        %v2136 = vadd.f32 %v1689, %v2090
        %v2137 = vadd.f32 %v1690, %v2093
        %v2138 = vadd.f32 %v1691, %v2098
        %v2139 = vadd.f32 %v1692, %v2101
        %v2140 = vld [vmem:[%s197 + $0x8] sm:$0xc]
        %s2141 = scalar_lea.vmem %s1, 10
        %v2142 = vld [vmem:[%s2141] sm:$0x3]
        %v2144 = vunpack.c.l.b16 %v2140
        %v2145 = vpack.c.b16 %v1331, %v2144
        %vm2146 = vcmask 1045504
        %v2147 = vrot.slane %v2145, 2
        %v2148 = vrot.slane %v1368, 2
        %v2149 = vsel %vm2146, %v2147, %v2148
        %v2150 = vrot.slane %v1369, 2
        %v2151 = vsel %vm2146, %v2148, %v2150
        %v2152 = vrot.slane %v1370, 2
        %v2153 = vsel %vm2146, %v2150, %v2152
        %v2154 = vrot.slane %v1371, 2
        %v2155 = vsel %vm2146, %v2152, %v2154
        %v2156 = vrot.slane %v1372, 2
        %v2157 = vsel %vm2146, %v2154, %v2156
        %v2158 = vrot.slane %v1373, 2
        %v2159 = vsel %vm2146, %v2156, %v2158
        %v2160 = vrot.slane %v1374, 2
        %v2161 = vsel %vm2146, %v2158, %v2160
        %v2162 = vrot.slane %v1375, 2
        %v2163 = vsel %vm2146, %v2160, %v2162
        %v2164 = vrot.slane %v1376, 2
        %v2165 = vsel %vm2146, %v2162, %v2164
        %v2166 = vrot.slane %v1377, 2
        %v2167 = vsel %vm2146, %v2164, %v2166
        %v2168 = vrot.slane %v1378, 2
        %v2169 = vsel %vm2146, %v2166, %v2168
        %v2170 = vrot.slane %v1379, 2
        %v2171 = vsel %vm2146, %v2168, %v2170
        %v2172 = vrot.slane %v1380, 2
        %v2173 = vsel %vm2146, %v2170, %v2172
        %v2174 = vrot.slane %v1381, 2
        %v2175 = vsel %vm2146, %v2172, %v2174
        %v2176 = vrot.slane %v1382, 2
        %v2177 = vsel %vm2146, %v2174, %v2176
        %v2178 = vrot.slane %v1383, 2
        %v2179 = vsel %vm2146, %v2176, %v2178
        %v2180 = vrot.slane %v1384, 2
        %v2181 = vsel %vm2146, %v2178, %v2180
        %v2182 = vrot.slane %v1698, 2
        %v2183 = vsel %vm2146, %v2180, %v2182
        %v2185 = vsel %vm488, %v2149, 0
        %v2188 = vsel %vm488, %v2151, 0
        %v2191 = vsel %vm488, %v2153, 0
        %v2194 = vsel %vm488, %v2155, 0
        %v2197 = vsel %vm488, %v2157, 0
        %v2200 = vsel %vm488, %v2159, 0
        %v2203 = vsel %vm488, %v2161, 0
        %v2206 = vsel %vm488, %v2163, 0
        %v2209 = vsel %vm488, %v2165, 0
        %v2212 = vsel %vm488, %v2167, 0
        %v2215 = vsel %vm488, %v2169, 0
        %v2218 = vsel %vm488, %v2171, 0
        %v2221 = vsel %vm488, %v2173, 0
        %v2224 = vsel %vm488, %v2175, 0
        %v2227 = vsel %vm488, %v2177, 0
        %v2230 = vsel %vm488, %v2179, 0
        %v2233 = vsel %vm488, %v2181, 0
        %v2236 = vsel %vm488, %v2183, 0
        %v2239 = vsel %vm543, %v2142, 0
        %2241 = vmatprep.subr.bf16.mxu0 0
        %2242 = vmatpush1.bf16.msra.mxu0 %v2239
        %2243 = vmatprep.subr.bf16.mxu0 0
        %2244 = vmatpush1.bf16.msra.mxu0 0
        %2245 = vmatprep.subr.bf16.mxu0 0
        %2246 = vmatpush1.bf16.msra.mxu0 0
        %2247 = vmatprep.subr.bf16.mxu0 0
        %2248 = vmatpush1.bf16.msra.mxu0 0
        %2249 = vmatprep.subr.bf16.mxu0 0
        %2250 = vmatpush1.bf16.msra.mxu0 0
        %2251 = vmatprep.subr.bf16.mxu0 0
        %2252 = vmatpush1.bf16.msra.mxu0 0
        %2253 = vmatprep.subr.bf16.mxu0 0
        %2254 = vmatpush1.bf16.msra.mxu0 0
        %2255 = vmatprep.subr.bf16.mxu0 0
        %2256 = vmatpush1.bf16.msra.mxu0 0
        %2257 = vmatprep.subr.bf16.mxu0 0
        %2258 = vmatpush1.bf16.msra.mxu0 0
        %2259 = vmatprep.subr.bf16.mxu0 0
        %2260 = vmatpush1.bf16.msra.mxu0 0
        %2261 = vmatprep.subr.bf16.mxu0 0
        %2262 = vmatpush1.bf16.msra.mxu0 0
        %2263 = vmatprep.subr.bf16.mxu0 0
        %2264 = vmatpush1.bf16.msra.mxu0 0
        %2265 = vmatprep.subr.bf16.mxu0 0
        %2266 = vmatpush1.bf16.msra.mxu0 0
        %2267 = vmatprep.subr.bf16.mxu0 0
        %2268 = vmatpush1.bf16.msra.mxu0 0
        %2269 = vmatprep.subr.bf16.mxu0 0
        %2270 = vmatpush1.bf16.msra.mxu0 0
        %2271 = vmatprep.subr.bf16.mxu0 0
        %2272 = vmatpush1.bf16.msra.mxu0 0
        %2273 = vmatprep.mubr.bf16.mxu0 0
        %2274 = vmatmul.mubr.bf16.gmra.mrb[0].mxu0 %v2185
        %v2275 = vpop.f32.mrb[0].mxu0
        %v2276 = vadd.f32 0.0, %v2275
        %v2277 = vpop.f32.mrb[0].mxu0
        %v2278 = vpop.f32.mrb[0].mxu0
        %v2279 = vadd.f32 0.0, %v2278
        %v2280 = vpop.f32.mrb[0].mxu0
        %2281 = vmatprep.mubr.bf16.mxu0 0
        %2282 = vmatmul.mubr.bf16.gmra.mrb[0].mxu0 %v2188
        %v2283 = vpop.f32.mrb[0].mxu0
        %v2284 = vadd.f32 0.0, %v2283
        %v2285 = vpop.f32.mrb[0].mxu0
        %v2286 = vpop.f32.mrb[0].mxu0
        %v2287 = vadd.f32 0.0, %v2286
        %v2288 = vpop.f32.mrb[0].mxu0
        %2289 = vmatprep.mubr.bf16.mxu0 0
        %2290 = vmatmul.mubr.bf16.gmra.mrb[0].mxu0 %v2191
        %v2291 = vpop.f32.mrb[0].mxu0
        %v2292 = vadd.f32 0.0, %v2291
        %v2293 = vpop.f32.mrb[0].mxu0
        %v2294 = vpop.f32.mrb[0].mxu0
        %v2295 = vadd.f32 0.0, %v2294
        %v2296 = vpop.f32.mrb[0].mxu0
        %2297 = vmatprep.mubr.bf16.mxu0 0
        %2298 = vmatmul.mubr.bf16.gmra.mrb[0].mxu0 %v2194
        %v2299 = vpop.f32.mrb[0].mxu0
        %v2300 = vadd.f32 0.0, %v2299
        %v2301 = vpop.f32.mrb[0].mxu0
        %v2302 = vpop.f32.mrb[0].mxu0
        %v2303 = vadd.f32 0.0, %v2302
        %v2304 = vpop.f32.mrb[0].mxu0
        %2305 = vmatprep.mubr.bf16.mxu0 0
        %2306 = vmatmul.mubr.bf16.gmra.mrb[0].mxu0 %v2197
        %v2307 = vpop.f32.mrb[0].mxu0
        %v2308 = vadd.f32 0.0, %v2307
        %v2309 = vpop.f32.mrb[0].mxu0
        %v2310 = vpop.f32.mrb[0].mxu0
        %v2311 = vadd.f32 0.0, %v2310
        %v2312 = vpop.f32.mrb[0].mxu0
        %2313 = vmatprep.mubr.bf16.mxu0 0
        %2314 = vmatmul.mubr.bf16.gmra.mrb[0].mxu0 %v2200
        %v2315 = vpop.f32.mrb[0].mxu0
        %v2316 = vadd.f32 0.0, %v2315
        %v2317 = vpop.f32.mrb[0].mxu0
        %v2318 = vpop.f32.mrb[0].mxu0
        %v2319 = vadd.f32 0.0, %v2318
        %v2320 = vpop.f32.mrb[0].mxu0
        %2321 = vmatprep.mubr.bf16.mxu0 0
        %2322 = vmatmul.mubr.bf16.gmra.mrb[0].mxu0 %v2203
        %v2323 = vpop.f32.mrb[0].mxu0
        %v2324 = vadd.f32 0.0, %v2323
        %v2325 = vpop.f32.mrb[0].mxu0
        %v2326 = vpop.f32.mrb[0].mxu0
        %v2327 = vadd.f32 0.0, %v2326
        %v2328 = vpop.f32.mrb[0].mxu0
        %2329 = vmatprep.mubr.bf16.mxu0 0
        %2330 = vmatmul.mubr.bf16.gmra.mrb[0].mxu0 %v2206
        %v2331 = vpop.f32.mrb[0].mxu0
        %v2332 = vadd.f32 0.0, %v2331
        %v2333 = vpop.f32.mrb[0].mxu0
        %v2334 = vpop.f32.mrb[0].mxu0
        %v2335 = vadd.f32 0.0, %v2334
        %v2336 = vpop.f32.mrb[0].mxu0
        %2337 = vmatprep.mubr.bf16.mxu0 0
        %2338 = vmatmul.mubr.bf16.gmra.mrb[0].mxu0 %v2209
        %v2339 = vpop.f32.mrb[0].mxu0
        %v2340 = vadd.f32 0.0, %v2339
        %v2341 = vpop.f32.mrb[0].mxu0
        %v2342 = vpop.f32.mrb[0].mxu0
        %v2343 = vadd.f32 0.0, %v2342
        %v2344 = vpop.f32.mrb[0].mxu0
        %2345 = vmatprep.mubr.bf16.mxu0 0
        %2346 = vmatmul.mubr.bf16.gmra.mrb[0].mxu0 %v2212
        %v2347 = vpop.f32.mrb[0].mxu0
        %v2348 = vadd.f32 0.0, %v2347
        %v2349 = vpop.f32.mrb[0].mxu0
        %v2350 = vpop.f32.mrb[0].mxu0
        %v2351 = vadd.f32 0.0, %v2350
        %v2352 = vpop.f32.mrb[0].mxu0
        %2353 = vmatprep.mubr.bf16.mxu0 0
        %2354 = vmatmul.mubr.bf16.gmra.mrb[0].mxu0 %v2215
        %v2355 = vpop.f32.mrb[0].mxu0
        %v2356 = vadd.f32 0.0, %v2355
        %v2357 = vpop.f32.mrb[0].mxu0
        %v2358 = vpop.f32.mrb[0].mxu0
        %v2359 = vadd.f32 0.0, %v2358
        %v2360 = vpop.f32.mrb[0].mxu0
        %2361 = vmatprep.mubr.bf16.mxu0 0
        %2362 = vmatmul.mubr.bf16.gmra.mrb[0].mxu0 %v2218
        %v2363 = vpop.f32.mrb[0].mxu0
        %v2364 = vadd.f32 0.0, %v2363
        %v2365 = vpop.f32.mrb[0].mxu0
        %v2366 = vpop.f32.mrb[0].mxu0
        %v2367 = vadd.f32 0.0, %v2366
        %v2368 = vpop.f32.mrb[0].mxu0
        %2369 = vmatprep.mubr.bf16.mxu0 0
        %2370 = vmatmul.mubr.bf16.gmra.mrb[0].mxu0 %v2221
        %v2371 = vpop.f32.mrb[0].mxu0
        %v2372 = vadd.f32 0.0, %v2371
        %v2373 = vpop.f32.mrb[0].mxu0
        %v2374 = vpop.f32.mrb[0].mxu0
        %v2375 = vadd.f32 0.0, %v2374
        %v2376 = vpop.f32.mrb[0].mxu0
        %2377 = vmatprep.mubr.bf16.mxu0 0
        %2378 = vmatmul.mubr.bf16.gmra.mrb[0].mxu0 %v2224
        %v2379 = vpop.f32.mrb[0].mxu0
        %v2380 = vadd.f32 0.0, %v2379
        %v2381 = vpop.f32.mrb[0].mxu0
        %v2382 = vpop.f32.mrb[0].mxu0
        %v2383 = vadd.f32 0.0, %v2382
        %v2384 = vpop.f32.mrb[0].mxu0
        %2385 = vmatprep.mubr.bf16.mxu0 0
        %2386 = vmatmul.mubr.bf16.gmra.mrb[0].mxu0 %v2227
        %v2387 = vpop.f32.mrb[0].mxu0
        %v2388 = vadd.f32 0.0, %v2387
        %v2389 = vpop.f32.mrb[0].mxu0
        %v2390 = vpop.f32.mrb[0].mxu0
        %v2391 = vadd.f32 0.0, %v2390
        %v2392 = vpop.f32.mrb[0].mxu0
        %2393 = vmatprep.mubr.bf16.mxu0 0
        %2394 = vmatmul.mubr.bf16.gmra.mrb[0].mxu0 %v2230
        %v2395 = vpop.f32.mrb[0].mxu0
        %v2396 = vadd.f32 0.0, %v2395
        %v2397 = vpop.f32.mrb[0].mxu0
        %v2398 = vpop.f32.mrb[0].mxu0
        %v2399 = vadd.f32 0.0, %v2398
        %v2400 = vpop.f32.mrb[0].mxu0
        %2401 = vmatprep.mubr.bf16.mxu0 0
        %2402 = vmatmul.mubr.bf16.gmra.mrb[0].mxu0 %v2233
        %v2403 = vpop.f32.mrb[0].mxu0
        %v2404 = vadd.f32 0.0, %v2403
        %v2405 = vpop.f32.mrb[0].mxu0
        %v2406 = vpop.f32.mrb[0].mxu0
        %v2407 = vadd.f32 0.0, %v2406
        %v2408 = vpop.f32.mrb[0].mxu0
        %2409 = vmatprep.mubr.bf16.mxu0 0
        %2410 = vmatmul.mubr.bf16.gmra.mrb[0].mxu0 %v2236
        %v2411 = vpop.f32.mrb[0].mxu0
        %v2412 = vadd.f32 0.0, %v2411
        %v2413 = vpop.f32.mrb[0].mxu0
        %v2414 = vpop.f32.mrb[0].mxu0
        %v2415 = vadd.f32 0.0, %v2414
        %v2416 = vpop.f32.mrb[0].mxu0
        %2417 = vdwg.mxu0
        %v2418 = vadd.f32 %v2104, %v2276
        %v2419 = vadd.f32 %v2105, %v2279
        %v2420 = vadd.f32 %v2106, %v2284
        %v2421 = vadd.f32 %v2107, %v2287
        %v2422 = vadd.f32 %v2108, %v2292
        %v2423 = vadd.f32 %v2109, %v2295
        %v2424 = vadd.f32 %v2110, %v2300
        %v2425 = vadd.f32 %v2111, %v2303
        %v2426 = vadd.f32 %v2112, %v2308
        %v2427 = vadd.f32 %v2113, %v2311
        %v2428 = vadd.f32 %v2114, %v2316
        %v2429 = vadd.f32 %v2115, %v2319
        %v2430 = vadd.f32 %v2116, %v2324
        %v2431 = vadd.f32 %v2117, %v2327
        %v2432 = vadd.f32 %v2118, %v2332
        %v2433 = vadd.f32 %v2119, %v2335
        %v2434 = vadd.f32 %v2120, %v2340
        %v2435 = vadd.f32 %v2121, %v2343
        %v2436 = vadd.f32 %v2122, %v2348
        %v2437 = vadd.f32 %v2123, %v2351
        %v2438 = vadd.f32 %v2124, %v2356
        %v2439 = vadd.f32 %v2125, %v2359
        %v2440 = vadd.f32 %v2126, %v2364
        %v2441 = vadd.f32 %v2127, %v2367
        %v2442 = vadd.f32 %v2128, %v2372
        %v2443 = vadd.f32 %v2129, %v2375
        %v2444 = vadd.f32 %v2130, %v2380
        %v2445 = vadd.f32 %v2131, %v2383
        %v2446 = vadd.f32 %v2132, %v2388
        %v2447 = vadd.f32 %v2133, %v2391
        %v2448 = vadd.f32 %v2134, %v2396
        %v2449 = vadd.f32 %v2135, %v2399
        %v2450 = vadd.f32 %v2136, %v2404
        %v2451 = vadd.f32 %v2137, %v2407
        %v2452 = vadd.f32 %v2138, %v2412
        %v2453 = vadd.f32 %v2139, %v2415
        %v2454 = vld [vmem:[%s197 + $0x10] sm:$0xc]
        %v2455 = vld [vmem:[%s197 + $0x14] sm:$0xf]
        %v2456 = vld [vmem:[%s197 + $0x18] sm:$0xf]
        %v2457 = vld [vmem:[%s197 + $0x1c] sm:$0xf]
        %v2458 = vld [vmem:[%s197 + $0x20] sm:$0xf]
        %v2459 = vld [vmem:[%s197 + $0x24] sm:$0xf]
        %v2460 = vld [vmem:[%s197 + $0x28] sm:$0xf]
        %v2461 = vld [vmem:[%s197 + $0x2c] sm:$0xf]
        %v2462 = vld [vmem:[%s197 + $0x30] sm:$0xf]
        %v2463 = vld [vmem:[%s197 + $0x34] sm:$0xf]
        %v2464 = vld [vmem:[%s197 + $0x38] sm:$0xf]
        %v2465 = vld [vmem:[%s197 + $0x3c] sm:$0xf]
        %v2466 = vld [vmem:[%s197 + $0x40] sm:$0xf]
        %v2467 = vld [vmem:[%s197 + $0x44] sm:$0xf]
        %v2468 = vld [vmem:[%s197 + $0x48] sm:$0xf]
        %v2469 = vld [vmem:[%s197 + $0x4c] sm:$0xf]
        %v2470 = vld [vmem:[%s197 + $0x50] sm:$0xf]
        %v2471 = vld [vmem:[%s197 + $0x54] sm:$0xf]
        %v2472 = vld [vmem:[%s197 + $0x58] sm:$0xf]
        %v2473 = vld [vmem:[%s197 + $0x5c] sm:$0xf]
        %v2474 = vld [vmem:[%s197 + $0x60] sm:$0xf]
        %v2475 = vld [vmem:[%s197 + $0x64] sm:$0xf]
        %v2476 = vld [vmem:[%s197 + $0x68] sm:$0xf]
        %v2477 = vld [vmem:[%s197 + $0x6c] sm:$0xf]
        %v2478 = vld [vmem:[%s197 + $0x70] sm:$0xf]
        %v2479 = vld [vmem:[%s197 + $0x74] sm:$0xf]
        %v2480 = vld [vmem:[%s197 + $0x78] sm:$0xf]
        %v2481 = vld [vmem:[%s197 + $0x7c] sm:$0xf]
        %v2482 = vld [vmem:[%s197 + $0x80] sm:$0xf]
        %v2483 = vld [vmem:[%s197 + $0x84] sm:$0xf]
        %v2484 = vld [vmem:[%s197 + $0x88] sm:$0xf]
        %v2485 = vld [vmem:[%s197 + $0x8c] sm:$0xf]
        %v2486 = vld [vmem:[%s197 + $0x90] sm:$0xf]
        %v2487 = vld [vmem:[%s197 + $0x94] sm:$0xf]
        %v2488 = vld [vmem:[%s197 + $0x98] sm:$0xf]
        %v2489 = vld [vmem:[%s197 + $0x9c] sm:$0xf]
        %v2490 = vld [vmem:[%s197 + $0xa0] sm:$0x3]
        %s2491 = scalar_lea.vmem %s1, 12
        %v2492 = vld [vmem:[%s2491] sm:$0x3]
        %v2530 = vunpack.c.l.b16 %v2454
        %v2531 = vunpack.c.l.b16 %v2455
        %v2532 = vunpack.c.l.b16 %v2456
        %v2533 = vunpack.c.l.b16 %v2457
        %v2534 = vunpack.c.l.b16 %v2458
        %v2535 = vunpack.c.l.b16 %v2459
        %v2536 = vunpack.c.l.b16 %v2460
        %v2537 = vunpack.c.l.b16 %v2461
        %v2538 = vunpack.c.l.b16 %v2462
        %v2539 = vunpack.c.l.b16 %v2463
        %v2540 = vunpack.c.l.b16 %v2464
        %v2541 = vunpack.c.l.b16 %v2465
        %v2542 = vunpack.c.l.b16 %v2466
        %v2543 = vunpack.c.l.b16 %v2467
        %v2544 = vunpack.c.l.b16 %v2468
        %v2545 = vunpack.c.l.b16 %v2469
        %v2546 = vunpack.c.l.b16 %v2470
        %v2547 = vunpack.c.l.b16 %v2471
        %v2548 = vunpack.c.l.b16 %v2472
        %v2549 = vunpack.c.l.b16 %v2473
        %v2550 = vunpack.c.l.b16 %v2474
        %v2551 = vunpack.c.l.b16 %v2475
        %v2552 = vunpack.c.l.b16 %v2476
        %v2553 = vunpack.c.l.b16 %v2477
        %v2554 = vunpack.c.l.b16 %v2478
        %v2555 = vunpack.c.l.b16 %v2479
        %v2556 = vunpack.c.l.b16 %v2480
        %v2557 = vunpack.c.l.b16 %v2481
        %v2558 = vunpack.c.l.b16 %v2482
        %v2559 = vunpack.c.l.b16 %v2483
        %v2560 = vunpack.c.l.b16 %v2484
        %v2561 = vunpack.c.l.b16 %v2485
        %v2562 = vunpack.c.l.b16 %v2486
        %v2563 = vunpack.c.l.b16 %v2487
        %v2564 = vunpack.c.l.b16 %v2488
        %v2565 = vunpack.c.l.b16 %v2489
        %v2566 = vunpack.c.l.b16 %v2490
        %v2567 = vpack.c.b16 %v2531, %v2530
        %v2568 = vpack.c.b16 %v2533, %v2532
        %v2569 = vpack.c.b16 %v2535, %v2534
        %v2570 = vpack.c.b16 %v2537, %v2536
        %v2571 = vpack.c.b16 %v2539, %v2538
        %v2572 = vpack.c.b16 %v2541, %v2540
        %v2573 = vpack.c.b16 %v2543, %v2542
        %v2574 = vpack.c.b16 %v2545, %v2544
        %v2575 = vpack.c.b16 %v2547, %v2546
        %v2576 = vpack.c.b16 %v2549, %v2548
        %v2577 = vpack.c.b16 %v2551, %v2550
        %v2578 = vpack.c.b16 %v2553, %v2552
        %v2579 = vpack.c.b16 %v2555, %v2554
        %v2580 = vpack.c.b16 %v2557, %v2556
        %v2581 = vpack.c.b16 %v2559, %v2558
        %v2582 = vpack.c.b16 %v2561, %v2560
        %v2583 = vpack.c.b16 %v2563, %v2562
        %v2584 = vpack.c.b16 %v2565, %v2564
        %v2585 = vpack.c.b16 %v2566, %v2566
        %v2586 = vrot.slane %v2567, 2
        %v2587 = vrot.slane %v2568, 2
        %v2588 = vsel %vm2146, %v2586, %v2587
        %v2589 = vrot.slane %v2569, 2
        %v2590 = vsel %vm2146, %v2587, %v2589
        %v2591 = vrot.slane %v2570, 2
        %v2592 = vsel %vm2146, %v2589, %v2591
        %v2593 = vrot.slane %v2571, 2
        %v2594 = vsel %vm2146, %v2591, %v2593
        %v2595 = vrot.slane %v2572, 2
        %v2596 = vsel %vm2146, %v2593, %v2595
        %v2597 = vrot.slane %v2573, 2
        %v2598 = vsel %vm2146, %v2595, %v2597
        %v2599 = vrot.slane %v2574, 2
        %v2600 = vsel %vm2146, %v2597, %v2599
        %v2601 = vrot.slane %v2575, 2
        %v2602 = vsel %vm2146, %v2599, %v2601
        %v2603 = vrot.slane %v2576, 2
        %v2604 = vsel %vm2146, %v2601, %v2603
        %v2605 = vrot.slane %v2577, 2
        %v2606 = vsel %vm2146, %v2603, %v2605
        %v2607 = vrot.slane %v2578, 2
        %v2608 = vsel %vm2146, %v2605, %v2607
        %v2609 = vrot.slane %v2579, 2
        %v2610 = vsel %vm2146, %v2607, %v2609
        %v2611 = vrot.slane %v2580, 2
        %v2612 = vsel %vm2146, %v2609, %v2611
        %v2613 = vrot.slane %v2581, 2
        %v2614 = vsel %vm2146, %v2611, %v2613
        %v2615 = vrot.slane %v2582, 2
        %v2616 = vsel %vm2146, %v2613, %v2615
        %v2617 = vrot.slane %v2583, 2
        %v2618 = vsel %vm2146, %v2615, %v2617
        %v2619 = vrot.slane %v2584, 2
        %v2620 = vsel %vm2146, %v2617, %v2619
        %v2621 = vrot.slane %v2585, 2
        %v2622 = vsel %vm2146, %v2619, %v2621
        %v2624 = vsel %vm488, %v2588, 0
        %v2627 = vsel %vm488, %v2590, 0
        %v2630 = vsel %vm488, %v2592, 0
        %v2633 = vsel %vm488, %v2594, 0
        %v2636 = vsel %vm488, %v2596, 0
        %v2639 = vsel %vm488, %v2598, 0
        %v2642 = vsel %vm488, %v2600, 0
        %v2645 = vsel %vm488, %v2602, 0
        %v2648 = vsel %vm488, %v2604, 0
        %v2651 = vsel %vm488, %v2606, 0
        %v2654 = vsel %vm488, %v2608, 0
        %v2657 = vsel %vm488, %v2610, 0
        %v2660 = vsel %vm488, %v2612, 0
        %v2663 = vsel %vm488, %v2614, 0
        %v2666 = vsel %vm488, %v2616, 0
        %v2669 = vsel %vm488, %v2618, 0
        %v2672 = vsel %vm488, %v2620, 0
        %v2675 = vsel %vm488, %v2622, 0
        %v2678 = vsel %vm543, %v2492, 0
        %2680 = vmatprep.subr.bf16.mxu0 0
        %2681 = vmatpush1.bf16.msra.mxu0 %v2678
        %2682 = vmatprep.subr.bf16.mxu0 0
        %2683 = vmatpush1.bf16.msra.mxu0 0
        %2684 = vmatprep.subr.bf16.mxu0 0
        %2685 = vmatpush1.bf16.msra.mxu0 0
        %2686 = vmatprep.subr.bf16.mxu0 0
        %2687 = vmatpush1.bf16.msra.mxu0 0
        %2688 = vmatprep.subr.bf16.mxu0 0
        %2689 = vmatpush1.bf16.msra.mxu0 0
        %2690 = vmatprep.subr.bf16.mxu0 0
        %2691 = vmatpush1.bf16.msra.mxu0 0
        %2692 = vmatprep.subr.bf16.mxu0 0
        %2693 = vmatpush1.bf16.msra.mxu0 0
        %2694 = vmatprep.subr.bf16.mxu0 0
        %2695 = vmatpush1.bf16.msra.mxu0 0
        %2696 = vmatprep.subr.bf16.mxu0 0
        %2697 = vmatpush1.bf16.msra.mxu0 0
        %2698 = vmatprep.subr.bf16.mxu0 0
        %2699 = vmatpush1.bf16.msra.mxu0 0
        %2700 = vmatprep.subr.bf16.mxu0 0
        %2701 = vmatpush1.bf16.msra.mxu0 0
        %2702 = vmatprep.subr.bf16.mxu0 0
        %2703 = vmatpush1.bf16.msra.mxu0 0
        %2704 = vmatprep.subr.bf16.mxu0 0
        %2705 = vmatpush1.bf16.msra.mxu0 0
        %2706 = vmatprep.subr.bf16.mxu0 0
        %2707 = vmatpush1.bf16.msra.mxu0 0
        %2708 = vmatprep.subr.bf16.mxu0 0
        %2709 = vmatpush1.bf16.msra.mxu0 0
        %2710 = vmatprep.subr.bf16.mxu0 0
        %2711 = vmatpush1.bf16.msra.mxu0 0
        %2712 = vmatprep.mubr.bf16.mxu0 0
        %2713 = vmatmul.mubr.bf16.gmra.mrb[0].mxu0 %v2624
        %v2714 = vpop.f32.mrb[0].mxu0
        %v2715 = vadd.f32 0.0, %v2714
        %v2716 = vpop.f32.mrb[0].mxu0
        %v2717 = vpop.f32.mrb[0].mxu0
        %v2718 = vadd.f32 0.0, %v2717
        %v2719 = vpop.f32.mrb[0].mxu0
        %2720 = vmatprep.mubr.bf16.mxu0 0
        %2721 = vmatmul.mubr.bf16.gmra.mrb[0].mxu0 %v2627
        %v2722 = vpop.f32.mrb[0].mxu0
        %v2723 = vadd.f32 0.0, %v2722
        %v2724 = vpop.f32.mrb[0].mxu0
        %v2725 = vpop.f32.mrb[0].mxu0
        %v2726 = vadd.f32 0.0, %v2725
        %v2727 = vpop.f32.mrb[0].mxu0
        %2728 = vmatprep.mubr.bf16.mxu0 0
        %2729 = vmatmul.mubr.bf16.gmra.mrb[0].mxu0 %v2630
        %v2730 = vpop.f32.mrb[0].mxu0
        %v2731 = vadd.f32 0.0, %v2730
        %v2732 = vpop.f32.mrb[0].mxu0
        %v2733 = vpop.f32.mrb[0].mxu0
        %v2734 = vadd.f32 0.0, %v2733
        %v2735 = vpop.f32.mrb[0].mxu0
        %2736 = vmatprep.mubr.bf16.mxu0 0
        %2737 = vmatmul.mubr.bf16.gmra.mrb[0].mxu0 %v2633
        %v2738 = vpop.f32.mrb[0].mxu0
        %v2739 = vadd.f32 0.0, %v2738
        %v2740 = vpop.f32.mrb[0].mxu0
        %v2741 = vpop.f32.mrb[0].mxu0
        %v2742 = vadd.f32 0.0, %v2741
        %v2743 = vpop.f32.mrb[0].mxu0
        %2744 = vmatprep.mubr.bf16.mxu0 0
        %2745 = vmatmul.mubr.bf16.gmra.mrb[0].mxu0 %v2636
        %v2746 = vpop.f32.mrb[0].mxu0
        %v2747 = vadd.f32 0.0, %v2746
        %v2748 = vpop.f32.mrb[0].mxu0
        %v2749 = vpop.f32.mrb[0].mxu0
        %v2750 = vadd.f32 0.0, %v2749
        %v2751 = vpop.f32.mrb[0].mxu0
        %2752 = vmatprep.mubr.bf16.mxu0 0
        %2753 = vmatmul.mubr.bf16.gmra.mrb[0].mxu0 %v2639
        %v2754 = vpop.f32.mrb[0].mxu0
        %v2755 = vadd.f32 0.0, %v2754
        %v2756 = vpop.f32.mrb[0].mxu0
        %v2757 = vpop.f32.mrb[0].mxu0
        %v2758 = vadd.f32 0.0, %v2757
        %v2759 = vpop.f32.mrb[0].mxu0
        %2760 = vmatprep.mubr.bf16.mxu0 0
        %2761 = vmatmul.mubr.bf16.gmra.mrb[0].mxu0 %v2642
        %v2762 = vpop.f32.mrb[0].mxu0
        %v2763 = vadd.f32 0.0, %v2762
        %v2764 = vpop.f32.mrb[0].mxu0
        %v2765 = vpop.f32.mrb[0].mxu0
        %v2766 = vadd.f32 0.0, %v2765
        %v2767 = vpop.f32.mrb[0].mxu0
        %2768 = vmatprep.mubr.bf16.mxu0 0
        %2769 = vmatmul.mubr.bf16.gmra.mrb[0].mxu0 %v2645
        %v2770 = vpop.f32.mrb[0].mxu0
        %v2771 = vadd.f32 0.0, %v2770
        %v2772 = vpop.f32.mrb[0].mxu0
        %v2773 = vpop.f32.mrb[0].mxu0
        %v2774 = vadd.f32 0.0, %v2773
        %v2775 = vpop.f32.mrb[0].mxu0
        %2776 = vmatprep.mubr.bf16.mxu0 0
        %2777 = vmatmul.mubr.bf16.gmra.mrb[0].mxu0 %v2648
        %v2778 = vpop.f32.mrb[0].mxu0
        %v2779 = vadd.f32 0.0, %v2778
        %v2780 = vpop.f32.mrb[0].mxu0
        %v2781 = vpop.f32.mrb[0].mxu0
        %v2782 = vadd.f32 0.0, %v2781
        %v2783 = vpop.f32.mrb[0].mxu0
        %2784 = vmatprep.mubr.bf16.mxu0 0
        %2785 = vmatmul.mubr.bf16.gmra.mrb[0].mxu0 %v2651
        %v2786 = vpop.f32.mrb[0].mxu0
        %v2787 = vadd.f32 0.0, %v2786
        %v2788 = vpop.f32.mrb[0].mxu0
        %v2789 = vpop.f32.mrb[0].mxu0
        %v2790 = vadd.f32 0.0, %v2789
        %v2791 = vpop.f32.mrb[0].mxu0
        %2792 = vmatprep.mubr.bf16.mxu0 0
        %2793 = vmatmul.mubr.bf16.gmra.mrb[0].mxu0 %v2654
        %v2794 = vpop.f32.mrb[0].mxu0
        %v2795 = vadd.f32 0.0, %v2794
        %v2796 = vpop.f32.mrb[0].mxu0
        %v2797 = vpop.f32.mrb[0].mxu0
        %v2798 = vadd.f32 0.0, %v2797
        %v2799 = vpop.f32.mrb[0].mxu0
        %2800 = vmatprep.mubr.bf16.mxu0 0
        %2801 = vmatmul.mubr.bf16.gmra.mrb[0].mxu0 %v2657
        %v2802 = vpop.f32.mrb[0].mxu0
        %v2803 = vadd.f32 0.0, %v2802
        %v2804 = vpop.f32.mrb[0].mxu0
        %v2805 = vpop.f32.mrb[0].mxu0
        %v2806 = vadd.f32 0.0, %v2805
        %v2807 = vpop.f32.mrb[0].mxu0
        %2808 = vmatprep.mubr.bf16.mxu0 0
        %2809 = vmatmul.mubr.bf16.gmra.mrb[0].mxu0 %v2660
        %v2810 = vpop.f32.mrb[0].mxu0
        %v2811 = vadd.f32 0.0, %v2810
        %v2812 = vpop.f32.mrb[0].mxu0
        %v2813 = vpop.f32.mrb[0].mxu0
        %v2814 = vadd.f32 0.0, %v2813
        %v2815 = vpop.f32.mrb[0].mxu0
        %2816 = vmatprep.mubr.bf16.mxu0 0
        %2817 = vmatmul.mubr.bf16.gmra.mrb[0].mxu0 %v2663
        %v2818 = vpop.f32.mrb[0].mxu0
        %v2819 = vadd.f32 0.0, %v2818
        %v2820 = vpop.f32.mrb[0].mxu0
        %v2821 = vpop.f32.mrb[0].mxu0
        %v2822 = vadd.f32 0.0, %v2821
        %v2823 = vpop.f32.mrb[0].mxu0
        %2824 = vmatprep.mubr.bf16.mxu0 0
        %2825 = vmatmul.mubr.bf16.gmra.mrb[0].mxu0 %v2666
        %v2826 = vpop.f32.mrb[0].mxu0
        %v2827 = vadd.f32 0.0, %v2826
        %v2828 = vpop.f32.mrb[0].mxu0
        %v2829 = vpop.f32.mrb[0].mxu0
        %v2830 = vadd.f32 0.0, %v2829
        %v2831 = vpop.f32.mrb[0].mxu0
        %2832 = vmatprep.mubr.bf16.mxu0 0
        %2833 = vmatmul.mubr.bf16.gmra.mrb[0].mxu0 %v2669
        %v2834 = vpop.f32.mrb[0].mxu0
        %v2835 = vadd.f32 0.0, %v2834
        %v2836 = vpop.f32.mrb[0].mxu0
        %v2837 = vpop.f32.mrb[0].mxu0
        %v2838 = vadd.f32 0.0, %v2837
        %v2839 = vpop.f32.mrb[0].mxu0
        %2840 = vmatprep.mubr.bf16.mxu0 0
        %2841 = vmatmul.mubr.bf16.gmra.mrb[0].mxu0 %v2672
        %v2842 = vpop.f32.mrb[0].mxu0
        %v2843 = vadd.f32 0.0, %v2842
        %v2844 = vpop.f32.mrb[0].mxu0
        %v2845 = vpop.f32.mrb[0].mxu0
        %v2846 = vadd.f32 0.0, %v2845
        %v2847 = vpop.f32.mrb[0].mxu0
        %2848 = vmatprep.mubr.bf16.mxu0 0
        %2849 = vmatmul.mubr.bf16.gmra.mrb[0].mxu0 %v2675
        %v2850 = vpop.f32.mrb[0].mxu0
        %v2851 = vadd.f32 0.0, %v2850
        %v2852 = vpop.f32.mrb[0].mxu0
        %v2853 = vpop.f32.mrb[0].mxu0
        %v2854 = vadd.f32 0.0, %v2853
        %v2855 = vpop.f32.mrb[0].mxu0
        %2856 = vdwg.mxu0
        %v2857 = vadd.f32 %v2418, %v2715
        %v2858 = vadd.f32 %v2419, %v2718
        %v2859 = vadd.f32 %v2420, %v2723
        %v2860 = vadd.f32 %v2421, %v2726
        %v2861 = vadd.f32 %v2422, %v2731
        %v2862 = vadd.f32 %v2423, %v2734
        %v2863 = vadd.f32 %v2424, %v2739
        %v2864 = vadd.f32 %v2425, %v2742
        %v2865 = vadd.f32 %v2426, %v2747
        %v2866 = vadd.f32 %v2427, %v2750
        %v2867 = vadd.f32 %v2428, %v2755
        %v2868 = vadd.f32 %v2429, %v2758
        %v2869 = vadd.f32 %v2430, %v2763
        %v2870 = vadd.f32 %v2431, %v2766
        %v2871 = vadd.f32 %v2432, %v2771
        %v2872 = vadd.f32 %v2433, %v2774
        %v2873 = vadd.f32 %v2434, %v2779
        %v2874 = vadd.f32 %v2435, %v2782
        %v2875 = vadd.f32 %v2436, %v2787
        %v2876 = vadd.f32 %v2437, %v2790
        %v2877 = vadd.f32 %v2438, %v2795
        %v2878 = vadd.f32 %v2439, %v2798
        %v2879 = vadd.f32 %v2440, %v2803
        %v2880 = vadd.f32 %v2441, %v2806
        %v2881 = vadd.f32 %v2442, %v2811
        %v2882 = vadd.f32 %v2443, %v2814
        %v2883 = vadd.f32 %v2444, %v2819
        %v2884 = vadd.f32 %v2445, %v2822
        %v2885 = vadd.f32 %v2446, %v2827
        %v2886 = vadd.f32 %v2447, %v2830
        %v2887 = vadd.f32 %v2448, %v2835
        %v2888 = vadd.f32 %v2449, %v2838
        %v2889 = vadd.f32 %v2450, %v2843
        %v2890 = vadd.f32 %v2451, %v2846
        %v2891 = vadd.f32 %v2452, %v2851
        %v2892 = vadd.f32 %v2453, %v2854
        %v2893 = vld [vmem:[%s197 + $0xa0] sm:$0x7]
        %s2894 = scalar_lea.vmem %s1, 14
        %v2895 = vld [vmem:[%s2894] sm:$0x3]
        %v2897 = vunpack.c.l.b16 %v2893
        %v2898 = vpack.c.b16 %v2897, %v2897
        %vm2899 = vsmask.f32 5376
        %v2901 = vshrl.u32 %v2567, 16
        %v2903 = vrot.slane %v2901, 2
        %v2904 = vshll.u32 %v2567, 16
        %v2906 = vrot.slane %v2904, 3
        %v2907 = vor.u32 %v2903, %v2906
        %v2909 = vshrl.u32 %v2568, 16
        %v2911 = vrot.slane %v2909, 2
        %v2912 = vshll.u32 %v2568, 16
        %v2914 = vrot.slane %v2912, 3
        %v2915 = vor.u32 %v2911, %v2914
        %v2916 = vsel %vm2899, %v2907, %v2915
        %v2918 = vshrl.u32 %v2569, 16
        %v2920 = vrot.slane %v2918, 2
        %v2921 = vshll.u32 %v2569, 16
        %v2923 = vrot.slane %v2921, 3
        %v2924 = vor.u32 %v2920, %v2923
        %v2925 = vsel %vm2899, %v2915, %v2924
        %v2927 = vshrl.u32 %v2570, 16
        %v2929 = vrot.slane %v2927, 2
        %v2930 = vshll.u32 %v2570, 16
        %v2932 = vrot.slane %v2930, 3
        %v2933 = vor.u32 %v2929, %v2932
        %v2934 = vsel %vm2899, %v2924, %v2933
        %v2936 = vshrl.u32 %v2571, 16
        %v2938 = vrot.slane %v2936, 2
        %v2939 = vshll.u32 %v2571, 16
        %v2941 = vrot.slane %v2939, 3
        %v2942 = vor.u32 %v2938, %v2941
        %v2943 = vsel %vm2899, %v2933, %v2942
        %v2945 = vshrl.u32 %v2572, 16
        %v2947 = vrot.slane %v2945, 2
        %v2948 = vshll.u32 %v2572, 16
        %v2950 = vrot.slane %v2948, 3
        %v2951 = vor.u32 %v2947, %v2950
        %v2952 = vsel %vm2899, %v2942, %v2951
        %v2954 = vshrl.u32 %v2573, 16
        %v2956 = vrot.slane %v2954, 2
        %v2957 = vshll.u32 %v2573, 16
        %v2959 = vrot.slane %v2957, 3
        %v2960 = vor.u32 %v2956, %v2959
        %v2961 = vsel %vm2899, %v2951, %v2960
        %v2963 = vshrl.u32 %v2574, 16
        %v2965 = vrot.slane %v2963, 2
        %v2966 = vshll.u32 %v2574, 16
        %v2968 = vrot.slane %v2966, 3
        %v2969 = vor.u32 %v2965, %v2968
        %v2970 = vsel %vm2899, %v2960, %v2969
        %v2972 = vshrl.u32 %v2575, 16
        %v2974 = vrot.slane %v2972, 2
        %v2975 = vshll.u32 %v2575, 16
        %v2977 = vrot.slane %v2975, 3
        %v2978 = vor.u32 %v2974, %v2977
        %v2979 = vsel %vm2899, %v2969, %v2978
        %v2981 = vshrl.u32 %v2576, 16
        %v2983 = vrot.slane %v2981, 2
        %v2984 = vshll.u32 %v2576, 16
        %v2986 = vrot.slane %v2984, 3
        %v2987 = vor.u32 %v2983, %v2986
        %v2988 = vsel %vm2899, %v2978, %v2987
        %v2990 = vshrl.u32 %v2577, 16
        %v2992 = vrot.slane %v2990, 2
        %v2993 = vshll.u32 %v2577, 16
        %v2995 = vrot.slane %v2993, 3
        %v2996 = vor.u32 %v2992, %v2995
        %v2997 = vsel %vm2899, %v2987, %v2996
        %v2999 = vshrl.u32 %v2578, 16
        %v3001 = vrot.slane %v2999, 2
        %v3002 = vshll.u32 %v2578, 16
        %v3004 = vrot.slane %v3002, 3
        %v3005 = vor.u32 %v3001, %v3004
        %v3006 = vsel %vm2899, %v2996, %v3005
        %v3008 = vshrl.u32 %v2579, 16
        %v3010 = vrot.slane %v3008, 2
        %v3011 = vshll.u32 %v2579, 16
        %v3013 = vrot.slane %v3011, 3
        %v3014 = vor.u32 %v3010, %v3013
        %v3015 = vsel %vm2899, %v3005, %v3014
        %v3017 = vshrl.u32 %v2580, 16
        %v3019 = vrot.slane %v3017, 2
        %v3020 = vshll.u32 %v2580, 16
        %v3022 = vrot.slane %v3020, 3
        %v3023 = vor.u32 %v3019, %v3022
        %v3024 = vsel %vm2899, %v3014, %v3023
        %v3026 = vshrl.u32 %v2581, 16
        %v3028 = vrot.slane %v3026, 2
        %v3029 = vshll.u32 %v2581, 16
        %v3031 = vrot.slane %v3029, 3
        %v3032 = vor.u32 %v3028, %v3031
        %v3033 = vsel %vm2899, %v3023, %v3032
        %v3035 = vshrl.u32 %v2582, 16
        %v3037 = vrot.slane %v3035, 2
        %v3038 = vshll.u32 %v2582, 16
        %v3040 = vrot.slane %v3038, 3
        %v3041 = vor.u32 %v3037, %v3040
        %v3042 = vsel %vm2899, %v3032, %v3041
        %v3044 = vshrl.u32 %v2583, 16
        %v3046 = vrot.slane %v3044, 2
        %v3047 = vshll.u32 %v2583, 16
        %v3049 = vrot.slane %v3047, 3
        %v3050 = vor.u32 %v3046, %v3049
        %v3051 = vsel %vm2899, %v3041, %v3050
        %v3053 = vshrl.u32 %v2584, 16
        %v3055 = vrot.slane %v3053, 2
        %v3056 = vshll.u32 %v2584, 16
        %v3058 = vrot.slane %v3056, 3
        %v3059 = vor.u32 %v3055, %v3058
        %v3060 = vsel %vm2899, %v3050, %v3059
        %v3062 = vshrl.u32 %v2898, 16
        %v3064 = vrot.slane %v3062, 2
        %v3065 = vshll.u32 %v2898, 16
        %v3067 = vrot.slane %v3065, 3
        %v3068 = vor.u32 %v3064, %v3067
        %v3069 = vsel %vm2899, %v3059, %v3068
        %v3071 = vsel %vm488, %v2916, 0
        %v3074 = vsel %vm488, %v2925, 0
        %v3077 = vsel %vm488, %v2934, 0
        %v3080 = vsel %vm488, %v2943, 0
        %v3083 = vsel %vm488, %v2952, 0
        %v3086 = vsel %vm488, %v2961, 0
        %v3089 = vsel %vm488, %v2970, 0
        %v3092 = vsel %vm488, %v2979, 0
        %v3095 = vsel %vm488, %v2988, 0
        %v3098 = vsel %vm488, %v2997, 0
        %v3101 = vsel %vm488, %v3006, 0
        %v3104 = vsel %vm488, %v3015, 0
        %v3107 = vsel %vm488, %v3024, 0
        %v3110 = vsel %vm488, %v3033, 0
        %v3113 = vsel %vm488, %v3042, 0
        %v3116 = vsel %vm488, %v3051, 0
        %v3119 = vsel %vm488, %v3060, 0
        %v3122 = vsel %vm488, %v3069, 0
        %v3125 = vsel %vm543, %v2895, 0
        %3127 = vmatprep.subr.bf16.mxu0 0
        %3128 = vmatpush1.bf16.msra.mxu0 %v3125
        %3129 = vmatprep.subr.bf16.mxu0 0
        %3130 = vmatpush1.bf16.msra.mxu0 0
        %3131 = vmatprep.subr.bf16.mxu0 0
        %3132 = vmatpush1.bf16.msra.mxu0 0
        %3133 = vmatprep.subr.bf16.mxu0 0
        %3134 = vmatpush1.bf16.msra.mxu0 0
        %3135 = vmatprep.subr.bf16.mxu0 0
        %3136 = vmatpush1.bf16.msra.mxu0 0
        %3137 = vmatprep.subr.bf16.mxu0 0
        %3138 = vmatpush1.bf16.msra.mxu0 0
        %3139 = vmatprep.subr.bf16.mxu0 0
        %3140 = vmatpush1.bf16.msra.mxu0 0
        %3141 = vmatprep.subr.bf16.mxu0 0
        %3142 = vmatpush1.bf16.msra.mxu0 0
        %3143 = vmatprep.subr.bf16.mxu0 0
        %3144 = vmatpush1.bf16.msra.mxu0 0
        %3145 = vmatprep.subr.bf16.mxu0 0
        %3146 = vmatpush1.bf16.msra.mxu0 0
        %3147 = vmatprep.subr.bf16.mxu0 0
        %3148 = vmatpush1.bf16.msra.mxu0 0
        %3149 = vmatprep.subr.bf16.mxu0 0
        %3150 = vmatpush1.bf16.msra.mxu0 0
        %3151 = vmatprep.subr.bf16.mxu0 0
        %3152 = vmatpush1.bf16.msra.mxu0 0
        %3153 = vmatprep.subr.bf16.mxu0 0
        %3154 = vmatpush1.bf16.msra.mxu0 0
        %3155 = vmatprep.subr.bf16.mxu0 0
        %3156 = vmatpush1.bf16.msra.mxu0 0
        %3157 = vmatprep.subr.bf16.mxu0 0
        %3158 = vmatpush1.bf16.msra.mxu0 0
        %3159 = vmatprep.mubr.bf16.mxu0 0
        %3160 = vmatmul.mubr.bf16.gmra.mrb[0].mxu0 %v3071
        %v3161 = vpop.f32.mrb[0].mxu0
        %v3162 = vadd.f32 0.0, %v3161
        %v3163 = vpop.f32.mrb[0].mxu0
        %v3164 = vpop.f32.mrb[0].mxu0
        %v3165 = vadd.f32 0.0, %v3164
        %v3166 = vpop.f32.mrb[0].mxu0
        %3167 = vmatprep.mubr.bf16.mxu0 0
        %3168 = vmatmul.mubr.bf16.gmra.mrb[0].mxu0 %v3074
        %v3169 = vpop.f32.mrb[0].mxu0
        %v3170 = vadd.f32 0.0, %v3169
        %v3171 = vpop.f32.mrb[0].mxu0
        %v3172 = vpop.f32.mrb[0].mxu0
        %v3173 = vadd.f32 0.0, %v3172
        %v3174 = vpop.f32.mrb[0].mxu0
        %3175 = vmatprep.mubr.bf16.mxu0 0
        %3176 = vmatmul.mubr.bf16.gmra.mrb[0].mxu0 %v3077
        %v3177 = vpop.f32.mrb[0].mxu0
        %v3178 = vadd.f32 0.0, %v3177
        %v3179 = vpop.f32.mrb[0].mxu0
        %v3180 = vpop.f32.mrb[0].mxu0
        %v3181 = vadd.f32 0.0, %v3180
        %v3182 = vpop.f32.mrb[0].mxu0
        %3183 = vmatprep.mubr.bf16.mxu0 0
        %3184 = vmatmul.mubr.bf16.gmra.mrb[0].mxu0 %v3080
        %v3185 = vpop.f32.mrb[0].mxu0
        %v3186 = vadd.f32 0.0, %v3185
        %v3187 = vpop.f32.mrb[0].mxu0
        %v3188 = vpop.f32.mrb[0].mxu0
        %v3189 = vadd.f32 0.0, %v3188
        %v3190 = vpop.f32.mrb[0].mxu0
        %3191 = vmatprep.mubr.bf16.mxu0 0
        %3192 = vmatmul.mubr.bf16.gmra.mrb[0].mxu0 %v3083
        %v3193 = vpop.f32.mrb[0].mxu0
        %v3194 = vadd.f32 0.0, %v3193
        %v3195 = vpop.f32.mrb[0].mxu0
        %v3196 = vpop.f32.mrb[0].mxu0
        %v3197 = vadd.f32 0.0, %v3196
        %v3198 = vpop.f32.mrb[0].mxu0
        %3199 = vmatprep.mubr.bf16.mxu0 0
        %3200 = vmatmul.mubr.bf16.gmra.mrb[0].mxu0 %v3086
        %v3201 = vpop.f32.mrb[0].mxu0
        %v3202 = vadd.f32 0.0, %v3201
        %v3203 = vpop.f32.mrb[0].mxu0
        %v3204 = vpop.f32.mrb[0].mxu0
        %v3205 = vadd.f32 0.0, %v3204
        %v3206 = vpop.f32.mrb[0].mxu0
        %3207 = vmatprep.mubr.bf16.mxu0 0
        %3208 = vmatmul.mubr.bf16.gmra.mrb[0].mxu0 %v3089
        %v3209 = vpop.f32.mrb[0].mxu0
        %v3210 = vadd.f32 0.0, %v3209
        %v3211 = vpop.f32.mrb[0].mxu0
        %v3212 = vpop.f32.mrb[0].mxu0
        %v3213 = vadd.f32 0.0, %v3212
        %v3214 = vpop.f32.mrb[0].mxu0
        %3215 = vmatprep.mubr.bf16.mxu0 0
        %3216 = vmatmul.mubr.bf16.gmra.mrb[0].mxu0 %v3092
        %v3217 = vpop.f32.mrb[0].mxu0
        %v3218 = vadd.f32 0.0, %v3217
        %v3219 = vpop.f32.mrb[0].mxu0
        %v3220 = vpop.f32.mrb[0].mxu0
        %v3221 = vadd.f32 0.0, %v3220
        %v3222 = vpop.f32.mrb[0].mxu0
        %3223 = vmatprep.mubr.bf16.mxu0 0
        %3224 = vmatmul.mubr.bf16.gmra.mrb[0].mxu0 %v3095
        %v3225 = vpop.f32.mrb[0].mxu0
        %v3226 = vadd.f32 0.0, %v3225
        %v3227 = vpop.f32.mrb[0].mxu0
        %v3228 = vpop.f32.mrb[0].mxu0
        %v3229 = vadd.f32 0.0, %v3228
        %v3230 = vpop.f32.mrb[0].mxu0
        %3231 = vmatprep.mubr.bf16.mxu0 0
        %3232 = vmatmul.mubr.bf16.gmra.mrb[0].mxu0 %v3098
        %v3233 = vpop.f32.mrb[0].mxu0
        %v3234 = vadd.f32 0.0, %v3233
        %v3235 = vpop.f32.mrb[0].mxu0
        %v3236 = vpop.f32.mrb[0].mxu0
        %v3237 = vadd.f32 0.0, %v3236
        %v3238 = vpop.f32.mrb[0].mxu0
        %3239 = vmatprep.mubr.bf16.mxu0 0
        %3240 = vmatmul.mubr.bf16.gmra.mrb[0].mxu0 %v3101
        %v3241 = vpop.f32.mrb[0].mxu0
        %v3242 = vadd.f32 0.0, %v3241
        %v3243 = vpop.f32.mrb[0].mxu0
        %v3244 = vpop.f32.mrb[0].mxu0
        %v3245 = vadd.f32 0.0, %v3244
        %v3246 = vpop.f32.mrb[0].mxu0
        %3247 = vmatprep.mubr.bf16.mxu0 0
        %3248 = vmatmul.mubr.bf16.gmra.mrb[0].mxu0 %v3104
        %v3249 = vpop.f32.mrb[0].mxu0
        %v3250 = vadd.f32 0.0, %v3249
        %v3251 = vpop.f32.mrb[0].mxu0
        %v3252 = vpop.f32.mrb[0].mxu0
        %v3253 = vadd.f32 0.0, %v3252
        %v3254 = vpop.f32.mrb[0].mxu0
        %3255 = vmatprep.mubr.bf16.mxu0 0
        %3256 = vmatmul.mubr.bf16.gmra.mrb[0].mxu0 %v3107
        %v3257 = vpop.f32.mrb[0].mxu0
        %v3258 = vadd.f32 0.0, %v3257
        %v3259 = vpop.f32.mrb[0].mxu0
        %v3260 = vpop.f32.mrb[0].mxu0
        %v3261 = vadd.f32 0.0, %v3260
        %v3262 = vpop.f32.mrb[0].mxu0
        %3263 = vmatprep.mubr.bf16.mxu0 0
        %3264 = vmatmul.mubr.bf16.gmra.mrb[0].mxu0 %v3110
        %v3265 = vpop.f32.mrb[0].mxu0
        %v3266 = vadd.f32 0.0, %v3265
        %v3267 = vpop.f32.mrb[0].mxu0
        %v3268 = vpop.f32.mrb[0].mxu0
        %v3269 = vadd.f32 0.0, %v3268
        %v3270 = vpop.f32.mrb[0].mxu0
        %3271 = vmatprep.mubr.bf16.mxu0 0
        %3272 = vmatmul.mubr.bf16.gmra.mrb[0].mxu0 %v3113
        %v3273 = vpop.f32.mrb[0].mxu0
        %v3274 = vadd.f32 0.0, %v3273
        %v3275 = vpop.f32.mrb[0].mxu0
        %v3276 = vpop.f32.mrb[0].mxu0
        %v3277 = vadd.f32 0.0, %v3276
        %v3278 = vpop.f32.mrb[0].mxu0
        %3279 = vmatprep.mubr.bf16.mxu0 0
        %3280 = vmatmul.mubr.bf16.gmra.mrb[0].mxu0 %v3116
        %v3281 = vpop.f32.mrb[0].mxu0
        %v3282 = vadd.f32 0.0, %v3281
        %v3283 = vpop.f32.mrb[0].mxu0
        %v3284 = vpop.f32.mrb[0].mxu0
        %v3285 = vadd.f32 0.0, %v3284
        %v3286 = vpop.f32.mrb[0].mxu0
        %3287 = vmatprep.mubr.bf16.mxu0 0
        %3288 = vmatmul.mubr.bf16.gmra.mrb[0].mxu0 %v3119
        %v3289 = vpop.f32.mrb[0].mxu0
        %v3290 = vadd.f32 0.0, %v3289
        %v3291 = vpop.f32.mrb[0].mxu0
        %v3292 = vpop.f32.mrb[0].mxu0
        %v3293 = vadd.f32 0.0, %v3292
        %v3294 = vpop.f32.mrb[0].mxu0
        %3295 = vmatprep.mubr.bf16.mxu0 0
        %3296 = vmatmul.mubr.bf16.gmra.mrb[0].mxu0 %v3122
        %v3297 = vpop.f32.mrb[0].mxu0
        %v3298 = vadd.f32 0.0, %v3297
        %v3299 = vpop.f32.mrb[0].mxu0
        %v3300 = vpop.f32.mrb[0].mxu0
        %v3301 = vadd.f32 0.0, %v3300
        %v3302 = vpop.f32.mrb[0].mxu0
        %3303 = vdwg.mxu0
        %v3304 = vadd.f32 %v2857, %v3162
        %v3305 = vadd.f32 %v2858, %v3165
        %v3306 = vadd.f32 %v2859, %v3170
        %v3307 = vadd.f32 %v2860, %v3173
        %v3308 = vadd.f32 %v2861, %v3178
        %v3309 = vadd.f32 %v2862, %v3181
        %v3310 = vadd.f32 %v2863, %v3186
        %v3311 = vadd.f32 %v2864, %v3189
        %v3312 = vadd.f32 %v2865, %v3194
        %v3313 = vadd.f32 %v2866, %v3197
        %v3314 = vadd.f32 %v2867, %v3202
        %v3315 = vadd.f32 %v2868, %v3205
        %v3316 = vadd.f32 %v2869, %v3210
        %v3317 = vadd.f32 %v2870, %v3213
        %v3318 = vadd.f32 %v2871, %v3218
        %v3319 = vadd.f32 %v2872, %v3221
        %v3320 = vadd.f32 %v2873, %v3226
        %v3321 = vadd.f32 %v2874, %v3229
        %v3322 = vadd.f32 %v2875, %v3234
        %v3323 = vadd.f32 %v2876, %v3237
        %v3324 = vadd.f32 %v2877, %v3242
        %v3325 = vadd.f32 %v2878, %v3245
        %v3326 = vadd.f32 %v2879, %v3250
        %v3327 = vadd.f32 %v2880, %v3253
        %v3328 = vadd.f32 %v2881, %v3258
        %v3329 = vadd.f32 %v2882, %v3261
        %v3330 = vadd.f32 %v2883, %v3266
        %v3331 = vadd.f32 %v2884, %v3269
        %v3332 = vadd.f32 %v2885, %v3274
        %v3333 = vadd.f32 %v2886, %v3277
        %v3334 = vadd.f32 %v2887, %v3282
        %v3335 = vadd.f32 %v2888, %v3285
        %v3336 = vadd.f32 %v2889, %v3290
        %v3337 = vadd.f32 %v2890, %v3293
        %v3338 = vadd.f32 %v2891, %v3298
        %v3339 = vadd.f32 %v2892, %v3301
        %v3340 = vld [vmem:[%s197 + $0x10] sm:$0x8]
        %s3341 = scalar_lea.vmem %s1, 16
        %v3342 = vld [vmem:[%s3341] sm:$0x3]
        %v3344 = vunpack.c.l.b16 %v3340
        %v3345 = vpack.c.b16 %v2531, %v3344
        %vm3346 = vcmask 1044480
        %v3347 = vrot.slane %v3345, 3
        %v3348 = vrot.slane %v2568, 3
        %v3349 = vsel %vm3346, %v3347, %v3348
        %v3350 = vrot.slane %v2569, 3
        %v3351 = vsel %vm3346, %v3348, %v3350
        %v3352 = vrot.slane %v2570, 3
        %v3353 = vsel %vm3346, %v3350, %v3352
        %v3354 = vrot.slane %v2571, 3
        %v3355 = vsel %vm3346, %v3352, %v3354
        %v3356 = vrot.slane %v2572, 3
        %v3357 = vsel %vm3346, %v3354, %v3356
        %v3358 = vrot.slane %v2573, 3
        %v3359 = vsel %vm3346, %v3356, %v3358
        %v3360 = vrot.slane %v2574, 3
        %v3361 = vsel %vm3346, %v3358, %v3360
        %v3362 = vrot.slane %v2575, 3
        %v3363 = vsel %vm3346, %v3360, %v3362
        %v3364 = vrot.slane %v2576, 3
        %v3365 = vsel %vm3346, %v3362, %v3364
        %v3366 = vrot.slane %v2577, 3
        %v3367 = vsel %vm3346, %v3364, %v3366
        %v3368 = vrot.slane %v2578, 3
        %v3369 = vsel %vm3346, %v3366, %v3368
        %v3370 = vrot.slane %v2579, 3
        %v3371 = vsel %vm3346, %v3368, %v3370
        %v3372 = vrot.slane %v2580, 3
        %v3373 = vsel %vm3346, %v3370, %v3372
        %v3374 = vrot.slane %v2581, 3
        %v3375 = vsel %vm3346, %v3372, %v3374
        %v3376 = vrot.slane %v2582, 3
        %v3377 = vsel %vm3346, %v3374, %v3376
        %v3378 = vrot.slane %v2583, 3
        %v3379 = vsel %vm3346, %v3376, %v3378
        %v3380 = vrot.slane %v2584, 3
        %v3381 = vsel %vm3346, %v3378, %v3380
        %v3382 = vrot.slane %v2898, 3
        %v3383 = vsel %vm3346, %v3380, %v3382
        %v3385 = vsel %vm488, %v3349, 0
        %v3388 = vsel %vm488, %v3351, 0
        %v3391 = vsel %vm488, %v3353, 0
        %v3394 = vsel %vm488, %v3355, 0
        %v3397 = vsel %vm488, %v3357, 0
        %v3400 = vsel %vm488, %v3359, 0
        %v3403 = vsel %vm488, %v3361, 0
        %v3406 = vsel %vm488, %v3363, 0
        %v3409 = vsel %vm488, %v3365, 0
        %v3412 = vsel %vm488, %v3367, 0
        %v3415 = vsel %vm488, %v3369, 0
        %v3418 = vsel %vm488, %v3371, 0
        %v3421 = vsel %vm488, %v3373, 0
        %v3424 = vsel %vm488, %v3375, 0
        %v3427 = vsel %vm488, %v3377, 0
        %v3430 = vsel %vm488, %v3379, 0
        %v3433 = vsel %vm488, %v3381, 0
        %v3436 = vsel %vm488, %v3383, 0
        %v3439 = vsel %vm543, %v3342, 0
        %3441 = vmatprep.subr.bf16.mxu0 0
        %3442 = vmatpush1.bf16.msra.mxu0 %v3439
        %3443 = vmatprep.subr.bf16.mxu0 0
        %3444 = vmatpush1.bf16.msra.mxu0 0
        %3445 = vmatprep.subr.bf16.mxu0 0
        %3446 = vmatpush1.bf16.msra.mxu0 0
        %3447 = vmatprep.subr.bf16.mxu0 0
        %3448 = vmatpush1.bf16.msra.mxu0 0
        %3449 = vmatprep.subr.bf16.mxu0 0
        %3450 = vmatpush1.bf16.msra.mxu0 0
        %3451 = vmatprep.subr.bf16.mxu0 0
        %3452 = vmatpush1.bf16.msra.mxu0 0
        %3453 = vmatprep.subr.bf16.mxu0 0
        %3454 = vmatpush1.bf16.msra.mxu0 0
        %3455 = vmatprep.subr.bf16.mxu0 0
        %3456 = vmatpush1.bf16.msra.mxu0 0
        %3457 = vmatprep.subr.bf16.mxu0 0
        %3458 = vmatpush1.bf16.msra.mxu0 0
        %3459 = vmatprep.subr.bf16.mxu0 0
        %3460 = vmatpush1.bf16.msra.mxu0 0
        %3461 = vmatprep.subr.bf16.mxu0 0
        %3462 = vmatpush1.bf16.msra.mxu0 0
        %3463 = vmatprep.subr.bf16.mxu0 0
        %3464 = vmatpush1.bf16.msra.mxu0 0
        %3465 = vmatprep.subr.bf16.mxu0 0
        %3466 = vmatpush1.bf16.msra.mxu0 0
        %3467 = vmatprep.subr.bf16.mxu0 0
        %3468 = vmatpush1.bf16.msra.mxu0 0
        %3469 = vmatprep.subr.bf16.mxu0 0
        %3470 = vmatpush1.bf16.msra.mxu0 0
        %3471 = vmatprep.subr.bf16.mxu0 0
        %3472 = vmatpush1.bf16.msra.mxu0 0
        %3473 = vmatprep.mubr.bf16.mxu0 0
        %3474 = vmatmul.mubr.bf16.gmra.mrb[0].mxu0 %v3385
        %v3475 = vpop.f32.mrb[0].mxu0
        %v3476 = vadd.f32 0.0, %v3475
        %v3477 = vpop.f32.mrb[0].mxu0
        %v3478 = vpop.f32.mrb[0].mxu0
        %v3479 = vadd.f32 0.0, %v3478
        %v3480 = vpop.f32.mrb[0].mxu0
        %3481 = vmatprep.mubr.bf16.mxu0 0
        %3482 = vmatmul.mubr.bf16.gmra.mrb[0].mxu0 %v3388
        %v3483 = vpop.f32.mrb[0].mxu0
        %v3484 = vadd.f32 0.0, %v3483
        %v3485 = vpop.f32.mrb[0].mxu0
        %v3486 = vpop.f32.mrb[0].mxu0
        %v3487 = vadd.f32 0.0, %v3486
        %v3488 = vpop.f32.mrb[0].mxu0
        %3489 = vmatprep.mubr.bf16.mxu0 0
        %3490 = vmatmul.mubr.bf16.gmra.mrb[0].mxu0 %v3391
        %v3491 = vpop.f32.mrb[0].mxu0
        %v3492 = vadd.f32 0.0, %v3491
        %v3493 = vpop.f32.mrb[0].mxu0
        %v3494 = vpop.f32.mrb[0].mxu0
        %v3495 = vadd.f32 0.0, %v3494
        %v3496 = vpop.f32.mrb[0].mxu0
        %3497 = vmatprep.mubr.bf16.mxu0 0
        %3498 = vmatmul.mubr.bf16.gmra.mrb[0].mxu0 %v3394
        %v3499 = vpop.f32.mrb[0].mxu0
        %v3500 = vadd.f32 0.0, %v3499
        %v3501 = vpop.f32.mrb[0].mxu0
        %v3502 = vpop.f32.mrb[0].mxu0
        %v3503 = vadd.f32 0.0, %v3502
        %v3504 = vpop.f32.mrb[0].mxu0
        %3505 = vmatprep.mubr.bf16.mxu0 0
        %3506 = vmatmul.mubr.bf16.gmra.mrb[0].mxu0 %v3397
        %v3507 = vpop.f32.mrb[0].mxu0
        %v3508 = vadd.f32 0.0, %v3507
        %v3509 = vpop.f32.mrb[0].mxu0
        %v3510 = vpop.f32.mrb[0].mxu0
        %v3511 = vadd.f32 0.0, %v3510
        %v3512 = vpop.f32.mrb[0].mxu0
        %3513 = vmatprep.mubr.bf16.mxu0 0
        %3514 = vmatmul.mubr.bf16.gmra.mrb[0].mxu0 %v3400
        %v3515 = vpop.f32.mrb[0].mxu0
        %v3516 = vadd.f32 0.0, %v3515
        %v3517 = vpop.f32.mrb[0].mxu0
        %v3518 = vpop.f32.mrb[0].mxu0
        %v3519 = vadd.f32 0.0, %v3518
        %v3520 = vpop.f32.mrb[0].mxu0
        %3521 = vmatprep.mubr.bf16.mxu0 0
        %3522 = vmatmul.mubr.bf16.gmra.mrb[0].mxu0 %v3403
        %v3523 = vpop.f32.mrb[0].mxu0
        %v3524 = vadd.f32 0.0, %v3523
        %v3525 = vpop.f32.mrb[0].mxu0
        %v3526 = vpop.f32.mrb[0].mxu0
        %v3527 = vadd.f32 0.0, %v3526
        %v3528 = vpop.f32.mrb[0].mxu0
        %3529 = vmatprep.mubr.bf16.mxu0 0
        %3530 = vmatmul.mubr.bf16.gmra.mrb[0].mxu0 %v3406
        %v3531 = vpop.f32.mrb[0].mxu0
        %v3532 = vadd.f32 0.0, %v3531
        %v3533 = vpop.f32.mrb[0].mxu0
        %v3534 = vpop.f32.mrb[0].mxu0
        %v3535 = vadd.f32 0.0, %v3534
        %v3536 = vpop.f32.mrb[0].mxu0
        %3537 = vmatprep.mubr.bf16.mxu0 0
        %3538 = vmatmul.mubr.bf16.gmra.mrb[0].mxu0 %v3409
        %v3539 = vpop.f32.mrb[0].mxu0
        %v3540 = vadd.f32 0.0, %v3539
        %v3541 = vpop.f32.mrb[0].mxu0
        %v3542 = vpop.f32.mrb[0].mxu0
        %v3543 = vadd.f32 0.0, %v3542
        %v3544 = vpop.f32.mrb[0].mxu0
        %3545 = vmatprep.mubr.bf16.mxu0 0
        %3546 = vmatmul.mubr.bf16.gmra.mrb[0].mxu0 %v3412
        %v3547 = vpop.f32.mrb[0].mxu0
        %v3548 = vadd.f32 0.0, %v3547
        %v3549 = vpop.f32.mrb[0].mxu0
        %v3550 = vpop.f32.mrb[0].mxu0
        %v3551 = vadd.f32 0.0, %v3550
        %v3552 = vpop.f32.mrb[0].mxu0
        %3553 = vmatprep.mubr.bf16.mxu0 0
        %3554 = vmatmul.mubr.bf16.gmra.mrb[0].mxu0 %v3415
        %v3555 = vpop.f32.mrb[0].mxu0
        %v3556 = vadd.f32 0.0, %v3555
        %v3557 = vpop.f32.mrb[0].mxu0
        %v3558 = vpop.f32.mrb[0].mxu0
        %v3559 = vadd.f32 0.0, %v3558
        %v3560 = vpop.f32.mrb[0].mxu0
        %3561 = vmatprep.mubr.bf16.mxu0 0
        %3562 = vmatmul.mubr.bf16.gmra.mrb[0].mxu0 %v3418
        %v3563 = vpop.f32.mrb[0].mxu0
        %v3564 = vadd.f32 0.0, %v3563
        %v3565 = vpop.f32.mrb[0].mxu0
        %v3566 = vpop.f32.mrb[0].mxu0
        %v3567 = vadd.f32 0.0, %v3566
        %v3568 = vpop.f32.mrb[0].mxu0
        %3569 = vmatprep.mubr.bf16.mxu0 0
        %3570 = vmatmul.mubr.bf16.gmra.mrb[0].mxu0 %v3421
        %v3571 = vpop.f32.mrb[0].mxu0
        %v3572 = vadd.f32 0.0, %v3571
        %v3573 = vpop.f32.mrb[0].mxu0
        %v3574 = vpop.f32.mrb[0].mxu0
        %v3575 = vadd.f32 0.0, %v3574
        %v3576 = vpop.f32.mrb[0].mxu0
        %3577 = vmatprep.mubr.bf16.mxu0 0
        %3578 = vmatmul.mubr.bf16.gmra.mrb[0].mxu0 %v3424
        %v3579 = vpop.f32.mrb[0].mxu0
        %v3580 = vadd.f32 0.0, %v3579
        %v3581 = vpop.f32.mrb[0].mxu0
        %v3582 = vpop.f32.mrb[0].mxu0
        %v3583 = vadd.f32 0.0, %v3582
        %v3584 = vpop.f32.mrb[0].mxu0
        %3585 = vmatprep.mubr.bf16.mxu0 0
        %3586 = vmatmul.mubr.bf16.gmra.mrb[0].mxu0 %v3427
        %v3587 = vpop.f32.mrb[0].mxu0
        %v3588 = vadd.f32 0.0, %v3587
        %v3589 = vpop.f32.mrb[0].mxu0
        %v3590 = vpop.f32.mrb[0].mxu0
        %v3591 = vadd.f32 0.0, %v3590
        %v3592 = vpop.f32.mrb[0].mxu0
        %3593 = vmatprep.mubr.bf16.mxu0 0
        %3594 = vmatmul.mubr.bf16.gmra.mrb[0].mxu0 %v3430
        %v3595 = vpop.f32.mrb[0].mxu0
        %v3596 = vadd.f32 0.0, %v3595
        %v3597 = vpop.f32.mrb[0].mxu0
        %v3598 = vpop.f32.mrb[0].mxu0
        %v3599 = vadd.f32 0.0, %v3598
        %v3600 = vpop.f32.mrb[0].mxu0
        %3601 = vmatprep.mubr.bf16.mxu0 0
        %3602 = vmatmul.mubr.bf16.gmra.mrb[0].mxu0 %v3433
        %v3603 = vpop.f32.mrb[0].mxu0
        %v3604 = vadd.f32 0.0, %v3603
        %v3605 = vpop.f32.mrb[0].mxu0
        %v3606 = vpop.f32.mrb[0].mxu0
        %v3607 = vadd.f32 0.0, %v3606
        %v3608 = vpop.f32.mrb[0].mxu0
        %3609 = vmatprep.mubr.bf16.mxu0 0
        %3610 = vmatmul.mubr.bf16.gmra.mrb[0].mxu0 %v3436
        %v3611 = vpop.f32.mrb[0].mxu0
        %v3612 = vadd.f32 0.0, %v3611
        %v3613 = vpop.f32.mrb[0].mxu0
        %v3614 = vpop.f32.mrb[0].mxu0
        %v3615 = vadd.f32 0.0, %v3614
        %v3616 = vpop.f32.mrb[0].mxu0
        %3617 = vdwg.mxu0
        %v3618 = vadd.f32 %v3304, %v3476
        %v3619 = vadd.f32 %v3305, %v3479
        %v3620 = vadd.f32 %v3306, %v3484
        %v3621 = vadd.f32 %v3307, %v3487
        %v3622 = vadd.f32 %v3308, %v3492
        %v3623 = vadd.f32 %v3309, %v3495
        %v3624 = vadd.f32 %v3310, %v3500
        %v3625 = vadd.f32 %v3311, %v3503
        %v3626 = vadd.f32 %v3312, %v3508
        %v3627 = vadd.f32 %v3313, %v3511
        %v3628 = vadd.f32 %v3314, %v3516
        %v3629 = vadd.f32 %v3315, %v3519
        %v3630 = vadd.f32 %v3316, %v3524
        %v3631 = vadd.f32 %v3317, %v3527
        %v3632 = vadd.f32 %v3318, %v3532
        %v3633 = vadd.f32 %v3319, %v3535
        %v3634 = vadd.f32 %v3320, %v3540
        %v3635 = vadd.f32 %v3321, %v3543
        %v3636 = vadd.f32 %v3322, %v3548
        %v3637 = vadd.f32 %v3323, %v3551
        %v3638 = vadd.f32 %v3324, %v3556
        %v3639 = vadd.f32 %v3325, %v3559
        %v3640 = vadd.f32 %v3326, %v3564
        %v3641 = vadd.f32 %v3327, %v3567
        %v3642 = vadd.f32 %v3328, %v3572
        %v3643 = vadd.f32 %v3329, %v3575
        %v3644 = vadd.f32 %v3330, %v3580
        %v3645 = vadd.f32 %v3331, %v3583
        %v3646 = vadd.f32 %v3332, %v3588
        %v3647 = vadd.f32 %v3333, %v3591
        %v3648 = vadd.f32 %v3334, %v3596
        %v3649 = vadd.f32 %v3335, %v3599
        %v3650 = vadd.f32 %v3336, %v3604
        %v3651 = vadd.f32 %v3337, %v3607
        %v3652 = vadd.f32 %v3338, %v3612
        %v3653 = vadd.f32 %v3339, %v3615
        %v3654 = vlaneseq
        %v3655 = vshrl.u32 %v3654, 7
        %v3656 = vadd.s32 %v3655, 8
        %v3657 = vadd.s32 %v3655, 16
        %v3658 = vadd.s32 %v3655, 24
        %v3659 = vadd.s32 %v3655, 32
        %v3660 = vadd.s32 %v3655, 40
        %v3661 = vadd.s32 %v3655, 48
        %v3662 = vadd.s32 %v3655, 56
        %v3663 = vadd.s32 %v3655, 64
        %v3664 = vadd.s32 %v3655, 72
        %v3665 = vadd.s32 %v3655, 80
        %v3666 = vadd.s32 %v3655, 88
        %v3667 = vadd.s32 %v3655, 96
        %v3668 = vadd.s32 %v3655, 104
        %v3669 = vadd.s32 %v3655, 112
        %v3670 = vadd.s32 %v3655, 120
        %v3671 = vadd.s32 %v3655, 128
        %v3672 = vadd.s32 %v3655, 136
        %v3673 = vadd.s32 %v3655, 144
        %v3674 = vadd.s32 %v3655, 152
        %v3675 = vadd.s32 %v3655, 160
        %v3676 = vadd.s32 %v3655, 168
        %v3677 = vadd.s32 %v3655, 176
        %v3678 = vadd.s32 %v3655, 184
        %v3679 = vadd.s32 %v3655, 192
        %v3680 = vadd.s32 %v3655, 200
        %v3681 = vadd.s32 %v3655, 208
        %v3682 = vadd.s32 %v3655, 216
        %v3683 = vadd.s32 %v3655, 224
        %v3684 = vadd.s32 %v3655, 232
        %v3685 = vadd.s32 %v3655, 240
        %v3686 = vadd.s32 %v3655, 248
        %v3687 = vadd.s32 %v3655, 256
        %v3688 = vadd.s32 %v3655, 264
        %v3689 = vadd.s32 %v3655, 272
        %v3690 = vadd.s32 %v3655, 280
        %vm3691 = vcmp.lt.s32.totalorder %v3655, 0
        %v3692 = vsub.s32 0, %v3655
        %v3693 = vsel %vm3691, %v3692, %v3655
        %v3694 = vmul.u32.u64.compose %v3693, 3817748708
        %v3695 = vextract.low.u32 %v3694
        %v3696 = vextract.high.u32 %v3694
        %v3697 = vshrl.u32 %v3696, 4
        %v3698 = vmul.u32 %v3697, 18
        %v3699 = vsub.s32 %v3693, %v3698
        %v3700 = vsub.s32 0, %v3699
        %v3701 = vsel %vm3691, %v3700, %v3699
        %vm3702 = vcmp.lt.s32.totalorder %v3656, 0
        %v3703 = vsub.s32 0, %v3656
        %v3704 = vsel %vm3702, %v3703, %v3656
        %v3705 = vmul.u32.u64.compose %v3704, 3817748708
        %v3706 = vextract.low.u32 %v3705
        %v3707 = vextract.high.u32 %v3705
        %v3708 = vshrl.u32 %v3707, 4
        %v3709 = vmul.u32 %v3708, 18
        %v3710 = vsub.s32 %v3704, %v3709
        %v3711 = vsub.s32 0, %v3710
        %v3712 = vsel %vm3702, %v3711, %v3710
        %vm3713 = vcmp.lt.s32.totalorder %v3657, 0
        %v3714 = vsub.s32 0, %v3657
        %v3715 = vsel %vm3713, %v3714, %v3657
        %v3716 = vmul.u32.u64.compose %v3715, 3817748708
        %v3717 = vextract.low.u32 %v3716
        %v3718 = vextract.high.u32 %v3716
        %v3719 = vshrl.u32 %v3718, 4
        %v3720 = vmul.u32 %v3719, 18
        %v3721 = vsub.s32 %v3715, %v3720
        %v3722 = vsub.s32 0, %v3721
        %v3723 = vsel %vm3713, %v3722, %v3721
        %vm3724 = vcmp.lt.s32.totalorder %v3658, 0
        %v3725 = vsub.s32 0, %v3658
        %v3726 = vsel %vm3724, %v3725, %v3658
        %v3727 = vmul.u32.u64.compose %v3726, 3817748708
        %v3728 = vextract.low.u32 %v3727
        %v3729 = vextract.high.u32 %v3727
        %v3730 = vshrl.u32 %v3729, 4
        %v3731 = vmul.u32 %v3730, 18
        %v3732 = vsub.s32 %v3726, %v3731
        %v3733 = vsub.s32 0, %v3732
        %v3734 = vsel %vm3724, %v3733, %v3732
        %vm3735 = vcmp.lt.s32.totalorder %v3659, 0
        %v3736 = vsub.s32 0, %v3659
        %v3737 = vsel %vm3735, %v3736, %v3659
        %v3738 = vmul.u32.u64.compose %v3737, 3817748708
        %v3739 = vextract.low.u32 %v3738
        %v3740 = vextract.high.u32 %v3738
        %v3741 = vshrl.u32 %v3740, 4
        %v3742 = vmul.u32 %v3741, 18
        %v3743 = vsub.s32 %v3737, %v3742
        %v3744 = vsub.s32 0, %v3743
        %v3745 = vsel %vm3735, %v3744, %v3743
        %vm3746 = vcmp.lt.s32.totalorder %v3660, 0
        %v3747 = vsub.s32 0, %v3660
        %v3748 = vsel %vm3746, %v3747, %v3660
        %v3749 = vmul.u32.u64.compose %v3748, 3817748708
        %v3750 = vextract.low.u32 %v3749
        %v3751 = vextract.high.u32 %v3749
        %v3752 = vshrl.u32 %v3751, 4
        %v3753 = vmul.u32 %v3752, 18
        %v3754 = vsub.s32 %v3748, %v3753
        %v3755 = vsub.s32 0, %v3754
        %v3756 = vsel %vm3746, %v3755, %v3754
        %vm3757 = vcmp.lt.s32.totalorder %v3661, 0
        %v3758 = vsub.s32 0, %v3661
        %v3759 = vsel %vm3757, %v3758, %v3661
        %v3760 = vmul.u32.u64.compose %v3759, 3817748708
        %v3761 = vextract.low.u32 %v3760
        %v3762 = vextract.high.u32 %v3760
        %v3763 = vshrl.u32 %v3762, 4
        %v3764 = vmul.u32 %v3763, 18
        %v3765 = vsub.s32 %v3759, %v3764
        %v3766 = vsub.s32 0, %v3765
        %v3767 = vsel %vm3757, %v3766, %v3765
        %vm3768 = vcmp.lt.s32.totalorder %v3662, 0
        %v3769 = vsub.s32 0, %v3662
        %v3770 = vsel %vm3768, %v3769, %v3662
        %v3771 = vmul.u32.u64.compose %v3770, 3817748708
        %v3772 = vextract.low.u32 %v3771
        %v3773 = vextract.high.u32 %v3771
        %v3774 = vshrl.u32 %v3773, 4
        %v3775 = vmul.u32 %v3774, 18
        %v3776 = vsub.s32 %v3770, %v3775
        %v3777 = vsub.s32 0, %v3776
        %v3778 = vsel %vm3768, %v3777, %v3776
        %vm3779 = vcmp.lt.s32.totalorder %v3663, 0
        %v3780 = vsub.s32 0, %v3663
        %v3781 = vsel %vm3779, %v3780, %v3663
        %v3782 = vmul.u32.u64.compose %v3781, 3817748708
        %v3783 = vextract.low.u32 %v3782
        %v3784 = vextract.high.u32 %v3782
        %v3785 = vshrl.u32 %v3784, 4
        %v3786 = vmul.u32 %v3785, 18
        %v3787 = vsub.s32 %v3781, %v3786
        %v3788 = vsub.s32 0, %v3787
        %v3789 = vsel %vm3779, %v3788, %v3787
        %vm3790 = vcmp.lt.s32.totalorder %v3664, 0
        %v3791 = vsub.s32 0, %v3664
        %v3792 = vsel %vm3790, %v3791, %v3664
        %v3793 = vmul.u32.u64.compose %v3792, 3817748708
        %v3794 = vextract.low.u32 %v3793
        %v3795 = vextract.high.u32 %v3793
        %v3796 = vshrl.u32 %v3795, 4
        %v3797 = vmul.u32 %v3796, 18
        %v3798 = vsub.s32 %v3792, %v3797
        %v3799 = vsub.s32 0, %v3798
        %v3800 = vsel %vm3790, %v3799, %v3798
        %vm3801 = vcmp.lt.s32.totalorder %v3665, 0
        %v3802 = vsub.s32 0, %v3665
        %v3803 = vsel %vm3801, %v3802, %v3665
        %v3804 = vmul.u32.u64.compose %v3803, 3817748708
        %v3805 = vextract.low.u32 %v3804
        %v3806 = vextract.high.u32 %v3804
        %v3807 = vshrl.u32 %v3806, 4
        %v3808 = vmul.u32 %v3807, 18
        %v3809 = vsub.s32 %v3803, %v3808
        %v3810 = vsub.s32 0, %v3809
        %v3811 = vsel %vm3801, %v3810, %v3809
        %vm3812 = vcmp.lt.s32.totalorder %v3666, 0
        %v3813 = vsub.s32 0, %v3666
        %v3814 = vsel %vm3812, %v3813, %v3666
        %v3815 = vmul.u32.u64.compose %v3814, 3817748708
        %v3816 = vextract.low.u32 %v3815
        %v3817 = vextract.high.u32 %v3815
        %v3818 = vshrl.u32 %v3817, 4
        %v3819 = vmul.u32 %v3818, 18
        %v3820 = vsub.s32 %v3814, %v3819
        %v3821 = vsub.s32 0, %v3820
        %v3822 = vsel %vm3812, %v3821, %v3820
        %vm3823 = vcmp.lt.s32.totalorder %v3667, 0
        %v3824 = vsub.s32 0, %v3667
        %v3825 = vsel %vm3823, %v3824, %v3667
        %v3826 = vmul.u32.u64.compose %v3825, 3817748708
        %v3827 = vextract.low.u32 %v3826
        %v3828 = vextract.high.u32 %v3826
        %v3829 = vshrl.u32 %v3828, 4
        %v3830 = vmul.u32 %v3829, 18
        %v3831 = vsub.s32 %v3825, %v3830
        %v3832 = vsub.s32 0, %v3831
        %v3833 = vsel %vm3823, %v3832, %v3831
        %vm3834 = vcmp.lt.s32.totalorder %v3668, 0
        %v3835 = vsub.s32 0, %v3668
        %v3836 = vsel %vm3834, %v3835, %v3668
        %v3837 = vmul.u32.u64.compose %v3836, 3817748708
        %v3838 = vextract.low.u32 %v3837
        %v3839 = vextract.high.u32 %v3837
        %v3840 = vshrl.u32 %v3839, 4
        %v3841 = vmul.u32 %v3840, 18
        %v3842 = vsub.s32 %v3836, %v3841
        %v3843 = vsub.s32 0, %v3842
        %v3844 = vsel %vm3834, %v3843, %v3842
        %vm3845 = vcmp.lt.s32.totalorder %v3669, 0
        %v3846 = vsub.s32 0, %v3669
        %v3847 = vsel %vm3845, %v3846, %v3669
        %v3848 = vmul.u32.u64.compose %v3847, 3817748708
        %v3849 = vextract.low.u32 %v3848
        %v3850 = vextract.high.u32 %v3848
        %v3851 = vshrl.u32 %v3850, 4
        %v3852 = vmul.u32 %v3851, 18
        %v3853 = vsub.s32 %v3847, %v3852
        %v3854 = vsub.s32 0, %v3853
        %v3855 = vsel %vm3845, %v3854, %v3853
        %vm3856 = vcmp.lt.s32.totalorder %v3670, 0
        %v3857 = vsub.s32 0, %v3670
        %v3858 = vsel %vm3856, %v3857, %v3670
        %v3859 = vmul.u32.u64.compose %v3858, 3817748708
        %v3860 = vextract.low.u32 %v3859
        %v3861 = vextract.high.u32 %v3859
        %v3862 = vshrl.u32 %v3861, 4
        %v3863 = vmul.u32 %v3862, 18
        %v3864 = vsub.s32 %v3858, %v3863
        %v3865 = vsub.s32 0, %v3864
        %v3866 = vsel %vm3856, %v3865, %v3864
        %vm3867 = vcmp.lt.s32.totalorder %v3671, 0
        %v3868 = vsub.s32 0, %v3671
        %v3869 = vsel %vm3867, %v3868, %v3671
        %v3870 = vmul.u32.u64.compose %v3869, 3817748708
        %v3871 = vextract.low.u32 %v3870
        %v3872 = vextract.high.u32 %v3870
        %v3873 = vshrl.u32 %v3872, 4
        %v3874 = vmul.u32 %v3873, 18
        %v3875 = vsub.s32 %v3869, %v3874
        %v3876 = vsub.s32 0, %v3875
        %v3877 = vsel %vm3867, %v3876, %v3875
        %vm3878 = vcmp.lt.s32.totalorder %v3672, 0
        %v3879 = vsub.s32 0, %v3672
        %v3880 = vsel %vm3878, %v3879, %v3672
        %v3881 = vmul.u32.u64.compose %v3880, 3817748708
        %v3882 = vextract.low.u32 %v3881
        %v3883 = vextract.high.u32 %v3881
        %v3884 = vshrl.u32 %v3883, 4
        %v3885 = vmul.u32 %v3884, 18
        %v3886 = vsub.s32 %v3880, %v3885
        %v3887 = vsub.s32 0, %v3886
        %v3888 = vsel %vm3878, %v3887, %v3886
        %vm3889 = vcmp.lt.s32.totalorder %v3673, 0
        %v3890 = vsub.s32 0, %v3673
        %v3891 = vsel %vm3889, %v3890, %v3673
        %v3892 = vmul.u32.u64.compose %v3891, 3817748708
        %v3893 = vextract.low.u32 %v3892
        %v3894 = vextract.high.u32 %v3892
        %v3895 = vshrl.u32 %v3894, 4
        %v3896 = vmul.u32 %v3895, 18
        %v3897 = vsub.s32 %v3891, %v3896
        %v3898 = vsub.s32 0, %v3897
        %v3899 = vsel %vm3889, %v3898, %v3897
        %vm3900 = vcmp.lt.s32.totalorder %v3674, 0
        %v3901 = vsub.s32 0, %v3674
        %v3902 = vsel %vm3900, %v3901, %v3674
        %v3903 = vmul.u32.u64.compose %v3902, 3817748708
        %v3904 = vextract.low.u32 %v3903
        %v3905 = vextract.high.u32 %v3903
        %v3906 = vshrl.u32 %v3905, 4
        %v3907 = vmul.u32 %v3906, 18
        %v3908 = vsub.s32 %v3902, %v3907
        %v3909 = vsub.s32 0, %v3908
        %v3910 = vsel %vm3900, %v3909, %v3908
        %vm3911 = vcmp.lt.s32.totalorder %v3675, 0
        %v3912 = vsub.s32 0, %v3675
        %v3913 = vsel %vm3911, %v3912, %v3675
        %v3914 = vmul.u32.u64.compose %v3913, 3817748708
        %v3915 = vextract.low.u32 %v3914
        %v3916 = vextract.high.u32 %v3914
        %v3917 = vshrl.u32 %v3916, 4
        %v3918 = vmul.u32 %v3917, 18
        %v3919 = vsub.s32 %v3913, %v3918
        %v3920 = vsub.s32 0, %v3919
        %v3921 = vsel %vm3911, %v3920, %v3919
        %vm3922 = vcmp.lt.s32.totalorder %v3676, 0
        %v3923 = vsub.s32 0, %v3676
        %v3924 = vsel %vm3922, %v3923, %v3676
        %v3925 = vmul.u32.u64.compose %v3924, 3817748708
        %v3926 = vextract.low.u32 %v3925
        %v3927 = vextract.high.u32 %v3925
        %v3928 = vshrl.u32 %v3927, 4
        %v3929 = vmul.u32 %v3928, 18
        %v3930 = vsub.s32 %v3924, %v3929
        %v3931 = vsub.s32 0, %v3930
        %v3932 = vsel %vm3922, %v3931, %v3930
        %vm3933 = vcmp.lt.s32.totalorder %v3677, 0
        %v3934 = vsub.s32 0, %v3677
        %v3935 = vsel %vm3933, %v3934, %v3677
        %v3936 = vmul.u32.u64.compose %v3935, 3817748708
        %v3937 = vextract.low.u32 %v3936
        %v3938 = vextract.high.u32 %v3936
        %v3939 = vshrl.u32 %v3938, 4
        %v3940 = vmul.u32 %v3939, 18
        %v3941 = vsub.s32 %v3935, %v3940
        %v3942 = vsub.s32 0, %v3941
        %v3943 = vsel %vm3933, %v3942, %v3941
        %vm3944 = vcmp.lt.s32.totalorder %v3678, 0
        %v3945 = vsub.s32 0, %v3678
        %v3946 = vsel %vm3944, %v3945, %v3678
        %v3947 = vmul.u32.u64.compose %v3946, 3817748708
        %v3948 = vextract.low.u32 %v3947
        %v3949 = vextract.high.u32 %v3947
        %v3950 = vshrl.u32 %v3949, 4
        %v3951 = vmul.u32 %v3950, 18
        %v3952 = vsub.s32 %v3946, %v3951
        %v3953 = vsub.s32 0, %v3952
        %v3954 = vsel %vm3944, %v3953, %v3952
        %vm3955 = vcmp.lt.s32.totalorder %v3679, 0
        %v3956 = vsub.s32 0, %v3679
        %v3957 = vsel %vm3955, %v3956, %v3679
        %v3958 = vmul.u32.u64.compose %v3957, 3817748708
        %v3959 = vextract.low.u32 %v3958
        %v3960 = vextract.high.u32 %v3958
        %v3961 = vshrl.u32 %v3960, 4
        %v3962 = vmul.u32 %v3961, 18
        %v3963 = vsub.s32 %v3957, %v3962
        %v3964 = vsub.s32 0, %v3963
        %v3965 = vsel %vm3955, %v3964, %v3963
        %vm3966 = vcmp.lt.s32.totalorder %v3680, 0
        %v3967 = vsub.s32 0, %v3680
        %v3968 = vsel %vm3966, %v3967, %v3680
        %v3969 = vmul.u32.u64.compose %v3968, 3817748708
        %v3970 = vextract.low.u32 %v3969
        %v3971 = vextract.high.u32 %v3969
        %v3972 = vshrl.u32 %v3971, 4
        %v3973 = vmul.u32 %v3972, 18
        %v3974 = vsub.s32 %v3968, %v3973
        %v3975 = vsub.s32 0, %v3974
        %v3976 = vsel %vm3966, %v3975, %v3974
        %vm3977 = vcmp.lt.s32.totalorder %v3681, 0
        %v3978 = vsub.s32 0, %v3681
        %v3979 = vsel %vm3977, %v3978, %v3681
        %v3980 = vmul.u32.u64.compose %v3979, 3817748708
        %v3981 = vextract.low.u32 %v3980
        %v3982 = vextract.high.u32 %v3980
        %v3983 = vshrl.u32 %v3982, 4
        %v3984 = vmul.u32 %v3983, 18
        %v3985 = vsub.s32 %v3979, %v3984
        %v3986 = vsub.s32 0, %v3985
        %v3987 = vsel %vm3977, %v3986, %v3985
        %vm3988 = vcmp.lt.s32.totalorder %v3682, 0
        %v3989 = vsub.s32 0, %v3682
        %v3990 = vsel %vm3988, %v3989, %v3682
        %v3991 = vmul.u32.u64.compose %v3990, 3817748708
        %v3992 = vextract.low.u32 %v3991
        %v3993 = vextract.high.u32 %v3991
        %v3994 = vshrl.u32 %v3993, 4
        %v3995 = vmul.u32 %v3994, 18
        %v3996 = vsub.s32 %v3990, %v3995
        %v3997 = vsub.s32 0, %v3996
        %v3998 = vsel %vm3988, %v3997, %v3996
        %vm3999 = vcmp.lt.s32.totalorder %v3683, 0
        %v4000 = vsub.s32 0, %v3683
        %v4001 = vsel %vm3999, %v4000, %v3683
        %v4002 = vmul.u32.u64.compose %v4001, 3817748708
        %v4003 = vextract.low.u32 %v4002
        %v4004 = vextract.high.u32 %v4002
        %v4005 = vshrl.u32 %v4004, 4
        %v4006 = vmul.u32 %v4005, 18
        %v4007 = vsub.s32 %v4001, %v4006
        %v4008 = vsub.s32 0, %v4007
        %v4009 = vsel %vm3999, %v4008, %v4007
        %vm4010 = vcmp.lt.s32.totalorder %v3684, 0
        %v4011 = vsub.s32 0, %v3684
        %v4012 = vsel %vm4010, %v4011, %v3684
        %v4013 = vmul.u32.u64.compose %v4012, 3817748708
        %v4014 = vextract.low.u32 %v4013
        %v4015 = vextract.high.u32 %v4013
        %v4016 = vshrl.u32 %v4015, 4
        %v4017 = vmul.u32 %v4016, 18
        %v4018 = vsub.s32 %v4012, %v4017
        %v4019 = vsub.s32 0, %v4018
        %v4020 = vsel %vm4010, %v4019, %v4018
        %vm4021 = vcmp.lt.s32.totalorder %v3685, 0
        %v4022 = vsub.s32 0, %v3685
        %v4023 = vsel %vm4021, %v4022, %v3685
        %v4024 = vmul.u32.u64.compose %v4023, 3817748708
        %v4025 = vextract.low.u32 %v4024
        %v4026 = vextract.high.u32 %v4024
        %v4027 = vshrl.u32 %v4026, 4
        %v4028 = vmul.u32 %v4027, 18
        %v4029 = vsub.s32 %v4023, %v4028
        %v4030 = vsub.s32 0, %v4029
        %v4031 = vsel %vm4021, %v4030, %v4029
        %vm4032 = vcmp.lt.s32.totalorder %v3686, 0
        %v4033 = vsub.s32 0, %v3686
        %v4034 = vsel %vm4032, %v4033, %v3686
        %v4035 = vmul.u32.u64.compose %v4034, 3817748708
        %v4036 = vextract.low.u32 %v4035
        %v4037 = vextract.high.u32 %v4035
        %v4038 = vshrl.u32 %v4037, 4
        %v4039 = vmul.u32 %v4038, 18
        %v4040 = vsub.s32 %v4034, %v4039
        %v4041 = vsub.s32 0, %v4040
        %v4042 = vsel %vm4032, %v4041, %v4040
        %vm4043 = vcmp.lt.s32.totalorder %v3687, 0
        %v4044 = vsub.s32 0, %v3687
        %v4045 = vsel %vm4043, %v4044, %v3687
        %v4046 = vmul.u32.u64.compose %v4045, 3817748708
        %v4047 = vextract.low.u32 %v4046
        %v4048 = vextract.high.u32 %v4046
        %v4049 = vshrl.u32 %v4048, 4
        %v4050 = vmul.u32 %v4049, 18
        %v4051 = vsub.s32 %v4045, %v4050
        %v4052 = vsub.s32 0, %v4051
        %v4053 = vsel %vm4043, %v4052, %v4051
        %vm4054 = vcmp.lt.s32.totalorder %v3688, 0
        %v4055 = vsub.s32 0, %v3688
        %v4056 = vsel %vm4054, %v4055, %v3688
        %v4057 = vmul.u32.u64.compose %v4056, 3817748708
        %v4058 = vextract.low.u32 %v4057
        %v4059 = vextract.high.u32 %v4057
        %v4060 = vshrl.u32 %v4059, 4
        %v4061 = vmul.u32 %v4060, 18
        %v4062 = vsub.s32 %v4056, %v4061
        %v4063 = vsub.s32 0, %v4062
        %v4064 = vsel %vm4054, %v4063, %v4062
        %vm4065 = vcmp.lt.s32.totalorder %v3689, 0
        %v4066 = vsub.s32 0, %v3689
        %v4067 = vsel %vm4065, %v4066, %v3689
        %v4068 = vmul.u32.u64.compose %v4067, 3817748708
        %v4069 = vextract.low.u32 %v4068
        %v4070 = vextract.high.u32 %v4068
        %v4071 = vshrl.u32 %v4070, 4
        %v4072 = vmul.u32 %v4071, 18
        %v4073 = vsub.s32 %v4067, %v4072
        %v4074 = vsub.s32 0, %v4073
        %v4075 = vsel %vm4065, %v4074, %v4073
        %vm4076 = vcmp.lt.s32.totalorder %v3690, 0
        %v4077 = vsub.s32 0, %v3690
        %v4078 = vsel %vm4076, %v4077, %v3690
        %v4079 = vmul.u32.u64.compose %v4078, 3817748708
        %v4080 = vextract.low.u32 %v4079
        %v4081 = vextract.high.u32 %v4079
        %v4082 = vshrl.u32 %v4081, 4
        %v4083 = vmul.u32 %v4082, 18
        %v4084 = vsub.s32 %v4078, %v4083
        %v4085 = vsub.s32 0, %v4084
        %v4086 = vsel %vm4076, %v4085, %v4084
        %vm4087 = vcmp.ne.s32.totalorder %v3701, 0
        %vm4088 = vcmp.ne.s32.totalorder %v3712, 0
        %vm4089 = vcmp.ne.s32.totalorder %v3723, 0
        %vm4090 = vcmp.ne.s32.totalorder %v3734, 0
        %vm4091 = vcmp.ne.s32.totalorder %v3745, 0
        %vm4092 = vcmp.ne.s32.totalorder %v3756, 0
        %vm4093 = vcmp.ne.s32.totalorder %v3767, 0
        %vm4094 = vcmp.ne.s32.totalorder %v3778, 0
        %vm4095 = vcmp.ne.s32.totalorder %v3789, 0
        %vm4096 = vcmp.ne.s32.totalorder %v3800, 0
        %vm4097 = vcmp.ne.s32.totalorder %v3811, 0
        %vm4098 = vcmp.ne.s32.totalorder %v3822, 0
        %vm4099 = vcmp.ne.s32.totalorder %v3833, 0
        %vm4100 = vcmp.ne.s32.totalorder %v3844, 0
        %vm4101 = vcmp.ne.s32.totalorder %v3855, 0
        %vm4102 = vcmp.ne.s32.totalorder %v3866, 0
        %vm4103 = vcmp.ne.s32.totalorder %v3877, 0
        %vm4104 = vcmp.ne.s32.totalorder %v3888, 0
        %vm4105 = vcmp.ne.s32.totalorder %v3899, 0
        %vm4106 = vcmp.ne.s32.totalorder %v3910, 0
        %vm4107 = vcmp.ne.s32.totalorder %v3921, 0
        %vm4108 = vcmp.ne.s32.totalorder %v3932, 0
        %vm4109 = vcmp.ne.s32.totalorder %v3943, 0
        %vm4110 = vcmp.ne.s32.totalorder %v3954, 0
        %vm4111 = vcmp.ne.s32.totalorder %v3965, 0
        %vm4112 = vcmp.ne.s32.totalorder %v3976, 0
        %vm4113 = vcmp.ne.s32.totalorder %v3987, 0
        %vm4114 = vcmp.ne.s32.totalorder %v3998, 0
        %vm4115 = vcmp.ne.s32.totalorder %v4009, 0
        %vm4116 = vcmp.ne.s32.totalorder %v4020, 0
        %vm4117 = vcmp.ne.s32.totalorder %v4031, 0
        %vm4118 = vcmp.ne.s32.totalorder %v4042, 0
        %vm4119 = vcmp.ne.s32.totalorder %v4053, 0
        %vm4120 = vcmp.ne.s32.totalorder %v4064, 0
        %vm4121 = vcmp.ne.s32.totalorder %v4075, 0
        %vm4122 = vcmp.ne.s32.totalorder %v4086, 0
        %vm4123 = vcmp.lt.s32.totalorder %v3701, 0
        %vm4124 = vcmp.lt.s32.totalorder %v3712, 0
        %vm4125 = vcmp.lt.s32.totalorder %v3723, 0
        %vm4126 = vcmp.lt.s32.totalorder %v3734, 0
        %vm4127 = vcmp.lt.s32.totalorder %v3745, 0
        %vm4128 = vcmp.lt.s32.totalorder %v3756, 0
        %vm4129 = vcmp.lt.s32.totalorder %v3767, 0
        %vm4130 = vcmp.lt.s32.totalorder %v3778, 0
        %vm4131 = vcmp.lt.s32.totalorder %v3789, 0
        %vm4132 = vcmp.lt.s32.totalorder %v3800, 0
        %vm4133 = vcmp.lt.s32.totalorder %v3811, 0
        %vm4134 = vcmp.lt.s32.totalorder %v3822, 0
        %vm4135 = vcmp.lt.s32.totalorder %v3833, 0
        %vm4136 = vcmp.lt.s32.totalorder %v3844, 0
        %vm4137 = vcmp.lt.s32.totalorder %v3855, 0
        %vm4138 = vcmp.lt.s32.totalorder %v3866, 0
        %vm4139 = vcmp.lt.s32.totalorder %v3877, 0
        %vm4140 = vcmp.lt.s32.totalorder %v3888, 0
        %vm4141 = vcmp.lt.s32.totalorder %v3899, 0
        %vm4142 = vcmp.lt.s32.totalorder %v3910, 0
        %vm4143 = vcmp.lt.s32.totalorder %v3921, 0
        %vm4144 = vcmp.lt.s32.totalorder %v3932, 0
        %vm4145 = vcmp.lt.s32.totalorder %v3943, 0
        %vm4146 = vcmp.lt.s32.totalorder %v3954, 0
        %vm4147 = vcmp.lt.s32.totalorder %v3965, 0
        %vm4148 = vcmp.lt.s32.totalorder %v3976, 0
        %vm4149 = vcmp.lt.s32.totalorder %v3987, 0
        %vm4150 = vcmp.lt.s32.totalorder %v3998, 0
        %vm4151 = vcmp.lt.s32.totalorder %v4009, 0
        %vm4152 = vcmp.lt.s32.totalorder %v4020, 0
        %vm4153 = vcmp.lt.s32.totalorder %v4031, 0
        %vm4154 = vcmp.lt.s32.totalorder %v4042, 0
        %vm4155 = vcmp.lt.s32.totalorder %v4053, 0
        %vm4156 = vcmp.lt.s32.totalorder %v4064, 0
        %vm4157 = vcmp.lt.s32.totalorder %v4075, 0
        %vm4158 = vcmp.lt.s32.totalorder %v4086, 0
        %vm4159 = vmand %vm4123, %vm4087
        %vm4160 = vmand %vm4124, %vm4088
        %vm4161 = vmand %vm4125, %vm4089
        %vm4162 = vmand %vm4126, %vm4090
        %vm4163 = vmand %vm4127, %vm4091
        %vm4164 = vmand %vm4128, %vm4092
        %vm4165 = vmand %vm4129, %vm4093
        %vm4166 = vmand %vm4130, %vm4094
        %vm4167 = vmand %vm4131, %vm4095
        %vm4168 = vmand %vm4132, %vm4096
        %vm4169 = vmand %vm4133, %vm4097
        %vm4170 = vmand %vm4134, %vm4098
        %vm4171 = vmand %vm4135, %vm4099
        %vm4172 = vmand %vm4136, %vm4100
        %vm4173 = vmand %vm4137, %vm4101
        %vm4174 = vmand %vm4138, %vm4102
        %vm4175 = vmand %vm4139, %vm4103
        %vm4176 = vmand %vm4140, %vm4104
        %vm4177 = vmand %vm4141, %vm4105
        %vm4178 = vmand %vm4142, %vm4106
        %vm4179 = vmand %vm4143, %vm4107
        %vm4180 = vmand %vm4144, %vm4108
        %vm4181 = vmand %vm4145, %vm4109
        %vm4182 = vmand %vm4146, %vm4110
        %vm4183 = vmand %vm4147, %vm4111
        %vm4184 = vmand %vm4148, %vm4112
        %vm4185 = vmand %vm4149, %vm4113
        %vm4186 = vmand %vm4150, %vm4114
        %vm4187 = vmand %vm4151, %vm4115
        %vm4188 = vmand %vm4152, %vm4116
        %vm4189 = vmand %vm4153, %vm4117
        %vm4190 = vmand %vm4154, %vm4118
        %vm4191 = vmand %vm4155, %vm4119
        %vm4192 = vmand %vm4156, %vm4120
        %vm4193 = vmand %vm4157, %vm4121
        %vm4194 = vmand %vm4158, %vm4122
        %v4195 = vadd.s32 %v3701, 18
        %v4196 = vadd.s32 %v3712, 18
        %v4197 = vadd.s32 %v3723, 18
        %v4198 = vadd.s32 %v3734, 18
        %v4199 = vadd.s32 %v3745, 18
        %v4200 = vadd.s32 %v3756, 18
        %v4201 = vadd.s32 %v3767, 18
        %v4202 = vadd.s32 %v3778, 18
        %v4203 = vadd.s32 %v3789, 18
        %v4204 = vadd.s32 %v3800, 18
        %v4205 = vadd.s32 %v3811, 18
        %v4206 = vadd.s32 %v3822, 18
        %v4207 = vadd.s32 %v3833, 18
        %v4208 = vadd.s32 %v3844, 18
        %v4209 = vadd.s32 %v3855, 18
        %v4210 = vadd.s32 %v3866, 18
        %v4211 = vadd.s32 %v3877, 18
        %v4212 = vadd.s32 %v3888, 18
        %v4213 = vadd.s32 %v3899, 18
        %v4214 = vadd.s32 %v3910, 18
        %v4215 = vadd.s32 %v3921, 18
        %v4216 = vadd.s32 %v3932, 18
        %v4217 = vadd.s32 %v3943, 18
        %v4218 = vadd.s32 %v3954, 18
        %v4219 = vadd.s32 %v3965, 18
        %v4220 = vadd.s32 %v3976, 18
        %v4221 = vadd.s32 %v3987, 18
        %v4222 = vadd.s32 %v3998, 18
        %v4223 = vadd.s32 %v4009, 18
        %v4224 = vadd.s32 %v4020, 18
        %v4225 = vadd.s32 %v4031, 18
        %v4226 = vadd.s32 %v4042, 18
        %v4227 = vadd.s32 %v4053, 18
        %v4228 = vadd.s32 %v4064, 18
        %v4229 = vadd.s32 %v4075, 18
        %v4230 = vadd.s32 %v4086, 18
        %v4231 = vsel %vm4159, %v4195, %v3701
        %v4232 = vsel %vm4160, %v4196, %v3712
        %v4233 = vsel %vm4161, %v4197, %v3723
        %v4234 = vsel %vm4162, %v4198, %v3734
        %v4235 = vsel %vm4163, %v4199, %v3745
        %v4236 = vsel %vm4164, %v4200, %v3756
        %v4237 = vsel %vm4165, %v4201, %v3767
        %v4238 = vsel %vm4166, %v4202, %v3778
        %v4239 = vsel %vm4167, %v4203, %v3789
        %v4240 = vsel %vm4168, %v4204, %v3800
        %v4241 = vsel %vm4169, %v4205, %v3811
        %v4242 = vsel %vm4170, %v4206, %v3822
        %v4243 = vsel %vm4171, %v4207, %v3833
        %v4244 = vsel %vm4172, %v4208, %v3844
        %v4245 = vsel %vm4173, %v4209, %v3855
        %v4246 = vsel %vm4174, %v4210, %v3866
        %v4247 = vsel %vm4175, %v4211, %v3877
        %v4248 = vsel %vm4176, %v4212, %v3888
        %v4249 = vsel %vm4177, %v4213, %v3899
        %v4250 = vsel %vm4178, %v4214, %v3910
        %v4251 = vsel %vm4179, %v4215, %v3921
        %v4252 = vsel %vm4180, %v4216, %v3932
        %v4253 = vsel %vm4181, %v4217, %v3943
        %v4254 = vsel %vm4182, %v4218, %v3954
        %v4255 = vsel %vm4183, %v4219, %v3965
        %v4256 = vsel %vm4184, %v4220, %v3976
        %v4257 = vsel %vm4185, %v4221, %v3987
        %v4258 = vsel %vm4186, %v4222, %v3998
        %v4259 = vsel %vm4187, %v4223, %v4009
        %v4260 = vsel %vm4188, %v4224, %v4020
        %v4261 = vsel %vm4189, %v4225, %v4031
        %v4262 = vsel %vm4190, %v4226, %v4042
        %v4263 = vsel %vm4191, %v4227, %v4053
        %v4264 = vsel %vm4192, %v4228, %v4064
        %v4265 = vsel %vm4193, %v4229, %v4075
        %v4266 = vsel %vm4194, %v4230, %v4086
        %vm4267 = vcmp.lt.s32.totalorder %v4231, 16
        %vm4268 = vcmp.lt.s32.totalorder %v4232, 16
        %vm4269 = vcmp.lt.s32.totalorder %v4233, 16
        %vm4270 = vcmp.lt.s32.totalorder %v4234, 16
        %vm4271 = vcmp.lt.s32.totalorder %v4235, 16
        %vm4272 = vcmp.lt.s32.totalorder %v4236, 16
        %vm4273 = vcmp.lt.s32.totalorder %v4237, 16
        %vm4274 = vcmp.lt.s32.totalorder %v4238, 16
        %vm4275 = vcmp.lt.s32.totalorder %v4239, 16
        %vm4276 = vcmp.lt.s32.totalorder %v4240, 16
        %vm4277 = vcmp.lt.s32.totalorder %v4241, 16
        %vm4278 = vcmp.lt.s32.totalorder %v4242, 16
        %vm4279 = vcmp.lt.s32.totalorder %v4243, 16
        %vm4280 = vcmp.lt.s32.totalorder %v4244, 16
        %vm4281 = vcmp.lt.s32.totalorder %v4245, 16
        %vm4282 = vcmp.lt.s32.totalorder %v4246, 16
        %vm4283 = vcmp.lt.s32.totalorder %v4247, 16
        %vm4284 = vcmp.lt.s32.totalorder %v4248, 16
        %vm4285 = vcmp.lt.s32.totalorder %v4249, 16
        %vm4286 = vcmp.lt.s32.totalorder %v4250, 16
        %vm4287 = vcmp.lt.s32.totalorder %v4251, 16
        %vm4288 = vcmp.lt.s32.totalorder %v4252, 16
        %vm4289 = vcmp.lt.s32.totalorder %v4253, 16
        %vm4290 = vcmp.lt.s32.totalorder %v4254, 16
        %vm4291 = vcmp.lt.s32.totalorder %v4255, 16
        %vm4292 = vcmp.lt.s32.totalorder %v4256, 16
        %vm4293 = vcmp.lt.s32.totalorder %v4257, 16
        %vm4294 = vcmp.lt.s32.totalorder %v4258, 16
        %vm4295 = vcmp.lt.s32.totalorder %v4259, 16
        %vm4296 = vcmp.lt.s32.totalorder %v4260, 16
        %vm4297 = vcmp.lt.s32.totalorder %v4261, 16
        %vm4298 = vcmp.lt.s32.totalorder %v4262, 16
        %vm4299 = vcmp.lt.s32.totalorder %v4263, 16
        %vm4300 = vcmp.lt.s32.totalorder %v4264, 16
        %vm4301 = vcmp.lt.s32.totalorder %v4265, 16
        %vm4302 = vcmp.lt.s32.totalorder %v4266, 16
        %v4303 = vsel %vm4267, 1, 0
        %v4304 = vsel %vm4268, 1, 0
        %v4305 = vsel %vm4269, 1, 0
        %v4306 = vsel %vm4270, 1, 0
        %v4307 = vsel %vm4271, 1, 0
        %v4308 = vsel %vm4272, 1, 0
        %v4309 = vsel %vm4273, 1, 0
        %v4310 = vsel %vm4274, 1, 0
        %v4311 = vsel %vm4275, 1, 0
        %v4312 = vsel %vm4276, 1, 0
        %v4313 = vsel %vm4277, 1, 0
        %v4314 = vsel %vm4278, 1, 0
        %v4315 = vsel %vm4279, 1, 0
        %v4316 = vsel %vm4280, 1, 0
        %v4317 = vsel %vm4281, 1, 0
        %v4318 = vsel %vm4282, 1, 0
        %v4319 = vsel %vm4283, 1, 0
        %v4320 = vsel %vm4284, 1, 0
        %v4321 = vsel %vm4285, 1, 0
        %v4322 = vsel %vm4286, 1, 0
        %v4323 = vsel %vm4287, 1, 0
        %v4324 = vsel %vm4288, 1, 0
        %v4325 = vsel %vm4289, 1, 0
        %v4326 = vsel %vm4290, 1, 0
        %v4327 = vsel %vm4291, 1, 0
        %v4328 = vsel %vm4292, 1, 0
        %v4329 = vsel %vm4293, 1, 0
        %v4330 = vsel %vm4294, 1, 0
        %v4331 = vsel %vm4295, 1, 0
        %v4332 = vsel %vm4296, 1, 0
        %v4333 = vsel %vm4297, 1, 0
        %v4334 = vsel %vm4298, 1, 0
        %v4335 = vsel %vm4299, 1, 0
        %v4336 = vsel %vm4300, 1, 0
        %v4337 = vsel %vm4301, 1, 0
        %v4338 = vsel %vm4302, 1, 0
        %v4339 = vcvt.s32.f32 %v4303
        %v4340 = vcvt.s32.f32 %v4304
        %v4341 = vcvt.s32.f32 %v4305
        %v4342 = vcvt.s32.f32 %v4306
        %v4343 = vcvt.s32.f32 %v4307
        %v4344 = vcvt.s32.f32 %v4308
        %v4345 = vcvt.s32.f32 %v4309
        %v4346 = vcvt.s32.f32 %v4310
        %v4347 = vcvt.s32.f32 %v4311
        %v4348 = vcvt.s32.f32 %v4312
        %v4349 = vcvt.s32.f32 %v4313
        %v4350 = vcvt.s32.f32 %v4314
        %v4351 = vcvt.s32.f32 %v4315
        %v4352 = vcvt.s32.f32 %v4316
        %v4353 = vcvt.s32.f32 %v4317
        %v4354 = vcvt.s32.f32 %v4318
        %v4355 = vcvt.s32.f32 %v4319
        %v4356 = vcvt.s32.f32 %v4320
        %v4357 = vcvt.s32.f32 %v4321
        %v4358 = vcvt.s32.f32 %v4322
        %v4359 = vcvt.s32.f32 %v4323
        %v4360 = vcvt.s32.f32 %v4324
        %v4361 = vcvt.s32.f32 %v4325
        %v4362 = vcvt.s32.f32 %v4326
        %v4363 = vcvt.s32.f32 %v4327
        %v4364 = vcvt.s32.f32 %v4328
        %v4365 = vcvt.s32.f32 %v4329
        %v4366 = vcvt.s32.f32 %v4330
        %v4367 = vcvt.s32.f32 %v4331
        %v4368 = vcvt.s32.f32 %v4332
        %v4369 = vcvt.s32.f32 %v4333
        %v4370 = vcvt.s32.f32 %v4334
        %v4371 = vcvt.s32.f32 %v4335
        %v4372 = vcvt.s32.f32 %v4336
        %v4373 = vcvt.s32.f32 %v4337
        %v4374 = vcvt.s32.f32 %v4338
        %v4375 = vmul.f32 %v3618, %v4339
        %v4376 = vmul.f32 %v3619, %v4340
        %v4377 = vmul.f32 %v3620, %v4341
        %v4378 = vmul.f32 %v3621, %v4342
        %v4379 = vmul.f32 %v3622, %v4343
        %v4380 = vmul.f32 %v3623, %v4344
        %v4381 = vmul.f32 %v3624, %v4345
        %v4382 = vmul.f32 %v3625, %v4346
        %v4383 = vmul.f32 %v3626, %v4347
        %v4384 = vmul.f32 %v3627, %v4348
        %v4385 = vmul.f32 %v3628, %v4349
        %v4386 = vmul.f32 %v3629, %v4350
        %v4387 = vmul.f32 %v3630, %v4351
        %v4388 = vmul.f32 %v3631, %v4352
        %v4389 = vmul.f32 %v3632, %v4353
        %v4390 = vmul.f32 %v3633, %v4354
        %v4391 = vmul.f32 %v3634, %v4355
        %v4392 = vmul.f32 %v3635, %v4356
        %v4393 = vmul.f32 %v3636, %v4357
        %v4394 = vmul.f32 %v3637, %v4358
        %v4395 = vmul.f32 %v3638, %v4359
        %v4396 = vmul.f32 %v3639, %v4360
        %v4397 = vmul.f32 %v3640, %v4361
        %v4398 = vmul.f32 %v3641, %v4362
        %v4399 = vmul.f32 %v3642, %v4363
        %v4400 = vmul.f32 %v3643, %v4364
        %v4401 = vmul.f32 %v3644, %v4365
        %v4402 = vmul.f32 %v3645, %v4366
        %v4403 = vmul.f32 %v3646, %v4367
        %v4404 = vmul.f32 %v3647, %v4368
        %v4405 = vmul.f32 %v3648, %v4369
        %v4406 = vmul.f32 %v3649, %v4370
        %v4407 = vmul.f32 %v3650, %v4371
        %v4408 = vmul.f32 %v3651, %v4372
        %v4409 = vmul.f32 %v3652, %v4373
        %v4410 = vmul.f32 %v3653, %v4374
        %v4411 = vld [vmem:[%s184] sm:$0x1]
        %v4412 = vadd.f32 %v4375, %v4376
        %v4413 = vadd.f32 %v4412, %v4377
        %v4414 = vadd.f32 %v4413, %v4378
        %v4415 = vadd.f32 %v4414, %v4379
        %v4416 = vadd.f32 %v4415, %v4380
        %v4417 = vadd.f32 %v4416, %v4381
        %v4418 = vadd.f32 %v4417, %v4382
        %v4419 = vadd.f32 %v4418, %v4383
        %v4420 = vadd.f32 %v4419, %v4384
        %v4421 = vadd.f32 %v4420, %v4385
        %v4422 = vadd.f32 %v4421, %v4386
        %v4423 = vadd.f32 %v4422, %v4387
        %v4424 = vadd.f32 %v4423, %v4388
        %v4425 = vadd.f32 %v4424, %v4389
        %v4426 = vadd.f32 %v4425, %v4390
        %v4427 = vadd.f32 %v4426, %v4391
        %v4428 = vadd.f32 %v4427, %v4392
        %v4429 = vadd.f32 %v4428, %v4393
        %v4430 = vadd.f32 %v4429, %v4394
        %v4431 = vadd.f32 %v4430, %v4395
        %v4432 = vadd.f32 %v4431, %v4396
        %v4433 = vadd.f32 %v4432, %v4397
        %v4434 = vadd.f32 %v4433, %v4398
        %v4435 = vadd.f32 %v4434, %v4399
        %v4436 = vadd.f32 %v4435, %v4400
        %v4437 = vadd.f32 %v4436, %v4401
        %v4438 = vadd.f32 %v4437, %v4402
        %v4439 = vadd.f32 %v4438, %v4403
        %v4440 = vadd.f32 %v4439, %v4404
        %v4441 = vadd.f32 %v4440, %v4405
        %v4442 = vadd.f32 %v4441, %v4406
        %v4443 = vadd.f32 %v4442, %v4407
        %v4444 = vadd.f32 %v4443, %v4408
        %v4445 = vadd.f32 %v4444, %v4409
        %v4446 = vadd.f32 %v4445, %v4410
        %v4447 = vrot.slane %v4446, 4
        %v4448 = vadd.f32 %v4446, %v4447
        %v4449 = vrot.slane %v4448, 2
        %v4450 = vadd.f32 %v4448, %v4449
        %v4451 = vrot.slane %v4450, 1
        %v4452 = vadd.f32 %v4450, %v4451
        %v4453 = vadd.f32 %v4411, %v4452
        %4454 = vst [vmem:[%s184] sm:$0x1] %v4453
        %v4455 = vld [vmem:[%s191] sm:$0x1]
        %v4456 = vmul.f32 %v4375, %v4375
        %v4457 = vmul.f32 %v4376, %v4376
        %v4458 = vmul.f32 %v4377, %v4377
        %v4459 = vmul.f32 %v4378, %v4378
        %v4460 = vmul.f32 %v4379, %v4379
        %v4461 = vmul.f32 %v4380, %v4380
        %v4462 = vmul.f32 %v4381, %v4381
        %v4463 = vmul.f32 %v4382, %v4382
        %v4464 = vmul.f32 %v4383, %v4383
        %v4465 = vmul.f32 %v4384, %v4384
        %v4466 = vmul.f32 %v4385, %v4385
        %v4467 = vmul.f32 %v4386, %v4386
        %v4468 = vmul.f32 %v4387, %v4387
        %v4469 = vmul.f32 %v4388, %v4388
        %v4470 = vmul.f32 %v4389, %v4389
        %v4471 = vmul.f32 %v4390, %v4390
        %v4472 = vmul.f32 %v4391, %v4391
        %v4473 = vmul.f32 %v4392, %v4392
        %v4474 = vmul.f32 %v4393, %v4393
        %v4475 = vmul.f32 %v4394, %v4394
        %v4476 = vmul.f32 %v4395, %v4395
        %v4477 = vmul.f32 %v4396, %v4396
        %v4478 = vmul.f32 %v4397, %v4397
        %v4479 = vmul.f32 %v4398, %v4398
        %v4480 = vmul.f32 %v4399, %v4399
        %v4481 = vmul.f32 %v4400, %v4400
        %v4482 = vmul.f32 %v4401, %v4401
        %v4483 = vmul.f32 %v4402, %v4402
        %v4484 = vmul.f32 %v4403, %v4403
        %v4485 = vmul.f32 %v4404, %v4404
        %v4486 = vmul.f32 %v4405, %v4405
        %v4487 = vmul.f32 %v4406, %v4406
        %v4488 = vmul.f32 %v4407, %v4407
        %v4489 = vmul.f32 %v4408, %v4408
        %v4490 = vmul.f32 %v4409, %v4409
        %v4491 = vmul.f32 %v4410, %v4410
        %v4492 = vadd.f32 %v4456, %v4457
        %v4493 = vadd.f32 %v4492, %v4458
        %v4494 = vadd.f32 %v4493, %v4459
        %v4495 = vadd.f32 %v4494, %v4460
        %v4496 = vadd.f32 %v4495, %v4461
        %v4497 = vadd.f32 %v4496, %v4462
        %v4498 = vadd.f32 %v4497, %v4463
        %v4499 = vadd.f32 %v4498, %v4464
        %v4500 = vadd.f32 %v4499, %v4465
        %v4501 = vadd.f32 %v4500, %v4466
        %v4502 = vadd.f32 %v4501, %v4467
        %v4503 = vadd.f32 %v4502, %v4468
        %v4504 = vadd.f32 %v4503, %v4469
        %v4505 = vadd.f32 %v4504, %v4470
        %v4506 = vadd.f32 %v4505, %v4471
        %v4507 = vadd.f32 %v4506, %v4472
        %v4508 = vadd.f32 %v4507, %v4473
        %v4509 = vadd.f32 %v4508, %v4474
        %v4510 = vadd.f32 %v4509, %v4475
        %v4511 = vadd.f32 %v4510, %v4476
        %v4512 = vadd.f32 %v4511, %v4477
        %v4513 = vadd.f32 %v4512, %v4478
        %v4514 = vadd.f32 %v4513, %v4479
        %v4515 = vadd.f32 %v4514, %v4480
        %v4516 = vadd.f32 %v4515, %v4481
        %v4517 = vadd.f32 %v4516, %v4482
        %v4518 = vadd.f32 %v4517, %v4483
        %v4519 = vadd.f32 %v4518, %v4484
        %v4520 = vadd.f32 %v4519, %v4485
        %v4521 = vadd.f32 %v4520, %v4486
        %v4522 = vadd.f32 %v4521, %v4487
        %v4523 = vadd.f32 %v4522, %v4488
        %v4524 = vadd.f32 %v4523, %v4489
        %v4525 = vadd.f32 %v4524, %v4490
        %v4526 = vadd.f32 %v4525, %v4491
        %v4527 = vrot.slane %v4526, 4
        %v4528 = vadd.f32 %v4526, %v4527
        %v4529 = vrot.slane %v4528, 2
        %v4530 = vadd.f32 %v4528, %v4529
        %v4531 = vrot.slane %v4530, 1
        %v4532 = vadd.f32 %v4530, %v4531
        %v4533 = vadd.f32 %v4455, %v4532
        %4534 = vst [vmem:[%s191] sm:$0x1] %v4533
        %s4535 = sand.u32 %s90, 1
        %s4536 = scalar_lea.sflag [#allocation3], %s4535
        %s4537 = sand.u32 %s90, 1
        %s4538 = smul.addr %s4537, 8
        %s4539 = scalar_lea.vmem [#allocation2], %s4538
        %s4540 = sand.u32 %s116, 1
        %s4541 = scalar_lea.sflag [#allocation5], %s4540
        %s4542 = sand.u32 %s116, 1
        %s4543 = smul.addr %s4542, 8
        %s4544 = scalar_lea.vmem [#allocation4], %s4543
        // Predicated region
        $region33: #{tpu_custom_call.1} parent=27 // pred_check
          %p4545 = pneg %p100
        $region34: #{tpu_custom_call.1} parent=27 // pred_check_branch
          %4547 = sbr.rel (%p4545) target = $region36
        $region35: #{tpu_custom_call.1} parent=27 // pred_region
          %s4549 = ssub.s32 128, 128
          %4550 = vsyncadd %s4536, %s4549
          %s4551 = smul.addr %s25, 128
          %s4552 = scalar_lea.hbm %s2, %s4551
          %s4554 = sshll.u32 %s4539, 4
          %s4555 = int_to_ptr.vmem [resolvable:$true] %s4554
          %4557 = dma.vmem_to_hbm [thread:$0]  %s4555, 128, %s4552, %s4536
        $region36: #{tpu_custom_call.1} parent=27 // pred_fallthru
          _
        // Predicated region
        $region37: #{tpu_custom_call.1} parent=27 // pred_check
          %p4558 = pneg %p126
        $region38: #{tpu_custom_call.1} parent=27 // pred_check_branch
          %4560 = sbr.rel (%p4558) target = $region40
        $region39: #{tpu_custom_call.1} parent=27 // pred_region
          %s4562 = ssub.s32 128, 128
          %4563 = vsyncadd %s4541, %s4562
          %s4564 = smul.addr %s25, 128
          %s4565 = scalar_lea.hbm %s3, %s4564
          %s4567 = sshll.u32 %s4544, 4
          %s4568 = int_to_ptr.vmem [resolvable:$true] %s4567
          %4570 = dma.vmem_to_hbm [thread:$0]  %s4568, 128, %s4565, %s4541
        $region40: #{tpu_custom_call.1} parent=27 // pred_fallthru
          _
      $region28: #{tpu_custom_call.1} parent=5 // pred_fallthru
        _
      %p4571 = scmp.le.s32.totalorder 2, %s16
      // Predicated region
      $region41: #{tpu_custom_call.1} parent=5 // pred_check
        %p4572 = pneg %p4571
      $region42: #{tpu_custom_call.1} parent=5 // pred_check_branch
        %4574 = sbr.rel (%p4572) target = $region44
      $region43: #{tpu_custom_call.1} parent=5 // pred_region
        %s4575 = ssub.s32 %s16, 2
        // Predicated region
        $region45: #{tpu_custom_call.1} parent=43 // pred_check
          %p4576 = pneg %p106
        $region46: #{tpu_custom_call.1} parent=43 // pred_check_branch
          %4578 = sbr.rel (%p4576) target = $region48
        $region47: #{tpu_custom_call.1} parent=43 // pred_region
          %s4579 = sand.u32 %s91, 1
          %s4580 = scalar_lea.sflag [#allocation3], %s4579
          %s4581 = sand.u32 %s91, 1
          %s4582 = smul.addr %s4581, 8
          %s4583 = scalar_lea.vmem [#allocation2], %s4582
          %4584 = dma.done %s4580, 128
        $region48: #{tpu_custom_call.1} parent=43 // pred_fallthru
          _
        // Predicated region
        $region49: #{tpu_custom_call.1} parent=43 // pred_check
          %p4585 = pneg %p132
        $region50: #{tpu_custom_call.1} parent=43 // pred_check_branch
          %4587 = sbr.rel (%p4585) target = $region52
        $region51: #{tpu_custom_call.1} parent=43 // pred_region
          %s4588 = sand.u32 %s117, 1
          %s4589 = scalar_lea.sflag [#allocation5], %s4588
          %s4590 = sand.u32 %s117, 1
          %s4591 = smul.addr %s4590, 8
          %s4592 = scalar_lea.vmem [#allocation4], %s4591
          %4593 = dma.done %s4589, 128
        $region52: #{tpu_custom_call.1} parent=43 // pred_fallthru
          _
      $region44: #{tpu_custom_call.1} parent=5 // pred_fallthru
        _
    $region6: #{tpu_custom_call.1} parent=1 // loop_footer
      %s20 = sadd.s32 1, %s16
    $region7: #{tpu_custom_call.1} parent=1 // loop_footer_branch
      %15 = sbr.rel target = $region3
    $region8: #{tpu_custom_call.1} parent=1 // loop_exit
      _
    %4594 = vsyncpa [#allocation3], 1
    %s4595 = scalar_lea.sflag [#allocation3], 1
    %4596 = vsyncpa %s4595, 1
    %4597 = vsyncpa [#allocation5], 1
    %s4598 = scalar_lea.sflag [#allocation5], 1
    %4599 = vsyncpa %s4598, 1

</llo_original>
